<compile_context>
chip_gen: v7x
topology: tpu7x:2x2x1
jax: 0.10.0
libtpu: 0.0.40
codegen_flags: <defaults>
</compile_context>

<pallas_src>
import jax
import jax.numpy as jnp
from jax.experimental import pallas as pl
from jax.experimental.pallas import tpu as pltpu

EPS = 1e-5   # PyTorch BatchNorm2d default
LANE = 128   # TPU lane width


def _round_up(x, m):
    return (x + m - 1) // m * m


def _pick_row_tile(h):
    # Largest divisor of H not exceeding 32: keeps the per-step tile
    # VMEM-friendly on all generations (incl. v7x's 64 MiB) while amortizing
    # the ~0.35us per-grid-step overhead.
    for cand in range(min(h, 32), 0, -1):
        if h % cand == 0:
            return cand
    return h


def _compiler_params(block_nbytes):
    # Double-buffered blocks + headroom for temporaries; keep well under the
    # v7x 64 MiB physical VMEM.
    limit = int(min(2 * block_nbytes + (16 << 20), 48 << 20))
    return pltpu.CompilerParams(
        dimension_semantics=("parallel", "parallel"),
        vmem_limit_bytes=limit)


# --------------------------------------------------------------------------
# Kernels
# --------------------------------------------------------------------------
def conv3x3_kernel(x_ref, w_ref, y_ref, stats_ref):
    """3x3 'same' conv on one (batch, row-tile) block.

    x_ref:     (TH+2, W+2, Cin_p)   bf16  zero-padded (post-activation) tile
    w_ref:     (3, 3, Cin_p, Cout_p) bf16
    y_ref:     (TH, W, Cout_p)      f32   pre-BN conv output
    stats_ref: (2, Cout_p)          f32   per-tile [sum, sum-of-squares]
    """
    th, w, cout = y_ref.shape
    acc = jnp.zeros((th * w, cout), jnp.float32)
    for dy in range(3):
        for dx in range(3):
            patch = x_ref[dy:dy + th, dx:dx + w, :]            # (TH, W, Cin_p)
            acc += jnp.dot(patch.reshape(th * w, patch.shape[-1]),
                           w_ref[dy, dx],                      # (Cin_p, Cout_p)
                           preferred_element_type=jnp.float32)
    # NOTE: no conv-bias add -- it is exactly cancelled by train-mode BN.
    y_ref[...] = acc.reshape(th, w, cout)
    s = jnp.sum(acc, axis=0, keepdims=True)          # (1, Cout_p)
    ss = jnp.sum(acc * acc, axis=0, keepdims=True)   # (1, Cout_p)
    stats_ref[...] = jnp.concatenate([s, ss], axis=0)


def bn_relu_kernel(scale_ref, shift_ref, y_ref, o_ref):
    """o = relu(y * scale + shift), per-channel scale/shift (folded BN)."""
    a = y_ref[...] * scale_ref[...] + shift_ref[...]
    o_ref[...] = jnp.maximum(a, 0.0).astype(o_ref.dtype)


# --------------------------------------------------------------------------
# Pallas-call wrappers
# --------------------------------------------------------------------------
def _conv_stage(a, w_p, th):
    """a: (N, H, W, Cin_p) bf16 post-activation; w_p: (3,3,Cin_p,Cout_p) bf16.
    Returns (pre-BN conv output f32 (N,H,W,Cout_p), global [sum,sumsq] (2,Cout_p))."""
    n, h, w, cin_p = a.shape
    cout_p = w_p.shape[-1]
    n_t = h // th

    # Zero halo is correct here: conv inputs are either the raw image or a
    # post-ReLU activation, and PyTorch's padding=1 pads those with zeros.
    a_pad = jnp.pad(a, ((0, 0), (1, 1), (1, 1), (0, 0)))
    # Overlapping 1-row-halo tiles built once in the wrapper so the kernel's
    # BlockSpec windows are plain disjoint blocks (fully auto-pipelined).
    a_tiles = jnp.stack(
        [a_pad[:, t * th:t * th + th + 2] for t in range(n_t)],
        axis=1)                                   # (N, n_t, TH+2, W+2, Cin_p)

    block_bytes = ((th + 2) * (w + 2) * cin_p * 2     # input tile (bf16)
                   + 9 * cin_p * cout_p * 2           # weights   (bf16)
                   + 2 * th * w * cout_p * 4          # out tile + accumulator
                   + 2 * cout_p * 4)                  # stats

    y, stats = pl.pallas_call(
        conv3x3_kernel,
        grid=(n, n_t),
        in_specs=[
            pl.BlockSpec((None, None, th + 2, w + 2, cin_p),
                         lambda i, t: (i, t, 0, 0, 0)),
            pl.BlockSpec((3, 3, cin_p, cout_p), lambda i, t: (0, 0, 0, 0)),
        ],
        out_specs=[
            pl.BlockSpec((None, th, w, cout_p), lambda i, t: (i, t, 0, 0)),
            pl.BlockSpec((None, None, 2, cout_p), lambda i, t: (i, t, 0, 0)),
        ],
        out_shape=[
            jax.ShapeDtypeStruct((n, h, w, cout_p), jnp.float32),
            jax.ShapeDtypeStruct((n, n_t, 2, cout_p), jnp.float32),
        ],
        compiler_params=_compiler_params(block_bytes),
    )(a_tiles, w_p)

    # Tiny global reduction of per-tile partial sums -> true batch statistics.
    return y, jnp.sum(stats, axis=(0, 1))


def _bn_affine(sums, count, gamma, beta, cout, cout_p):
    """Fold train-mode BN (biased batch var) into per-channel scale/shift."""
    mean = sums[0] / count
    var = jnp.maximum(sums[1] / count - mean * mean, 0.0)
    g = jnp.pad(gamma.astype(jnp.float32), (0, cout_p - cout))
    b = jnp.pad(beta.astype(jnp.float32), (0, cout_p - cout))
    scale = g * jax.lax.rsqrt(var + EPS)
    shift = b - mean * scale
    return scale.reshape(1, cout_p), shift.reshape(1, cout_p)


def _bn_relu_apply(y, scale, shift, th, out_dtype):
    n, h, w, cp = y.shape
    n_t = h // th
    block_bytes = 2 * th * w * cp * 4 + 2 * cp * 4
    return pl.pallas_call(
        bn_relu_kernel,
        grid=(n, n_t),
        in_specs=[
            pl.BlockSpec((1, cp), lambda i, t: (0, 0)),
            pl.BlockSpec((1, cp), lambda i, t: (0, 0)),
            pl.BlockSpec((None, th, w, cp), lambda i, t: (i, t, 0, 0)),
        ],
        out_specs=pl.BlockSpec((None, th, w, cp), lambda i, t: (i, t, 0, 0)),
        out_shape=jax.ShapeDtypeStruct((n, h, w, cp), out_dtype),
        compiler_params=_compiler_params(block_bytes),
    )(scale, shift, y)


def double_conv_pallas(x_nchw, w1, b1, g1, be1, w2, b2, g2, be2):
    """x_nchw: (N, Cin, H, W) f32. Conv weights in OIHW (PyTorch layout).
    b1/b2 are accepted for API parity but unused: train-mode BatchNorm
    subtracts the per-channel batch mean, which cancels the conv bias exactly.
    Returns (N, Cout, H, W) f32."""
    del b1, b2
    n, cin, h, w = x_nchw.shape
    cout = w1.shape[0]
    cin_p, cout_p = _round_up(cin, LANE), _round_up(cout, LANE)
    th = _pick_row_tile(h)
    npix = n * h * w

    # NCHW -> NHWC (channels on lanes), pad channels to a multiple of 128,
    # cast MXU operands to bf16.
    x = jnp.transpose(x_nchw, (0, 2, 3, 1)).astype(jnp.float32)
    x = jnp.pad(x, ((0, 0), (0, 0), (0, 0), (0, cin_p - cin))).astype(jnp.bfloat16)

    def prep_w(wt, ci, ci_p):
        hwio = jnp.transpose(wt, (2, 3, 1, 0)).astype(jnp.float32)   # OIHW->HWIO
        return jnp.pad(hwio, ((0, 0), (0, 0), (0, ci_p - ci),
                              (0, cout_p - cout))).astype(jnp.bfloat16)

    w1_p = prep_w(w1, cin, cin_p)
    w2_p = prep_w(w2, cout, cout_p)

    # conv1 -> global BN1 stats -> BN1+ReLU (bf16 intermediate, feeds the MXU)
    y1, sums1 = _conv_stage(x, w1_p, th)
    sc1, sh1 = _bn_affine(sums1, npix, g1, be1, cout, cout_p)
    a1 = _bn_relu_apply(y1, sc1, sh1, th, jnp.bfloat16)

    # conv2 -> global BN2 stats -> BN2+ReLU (f32 output)
    y2, sums2 = _conv_stage(a1, w2_p, th)
    sc2, sh2 = _bn_affine(sums2, npix, g2, be2, cout, cout_p)
    out_p = _bn_relu_apply(y2, sc2, sh2, th, jnp.float32)

    # Drop channel padding, back to NCHW.
    return jnp.transpose(out_p[..., :cout], (0, 3, 1, 2))


# --------------------------------------------------------------------------
# Pure-JAX reference (training-mode forward: batch stats, biased variance)
# --------------------------------------------------------------------------
def double_conv_ref(x, w1, b1, g1, be1, w2, b2, g2, be2):
    def conv(x, w, b):
        y = jax.lax.conv_general_dilated(
            x, w, window_strides=(1, 1), padding=((1, 1), (1, 1)),
            dimension_numbers=('NCHW', 'OIHW', 'NCHW'))
        return y + b[None, :, None, None]

    def bn_relu(y, g, be):
        mean = jnp.mean(y, axis=(0, 2, 3), keepdims=True)
        var = jnp.mean((y - mean) ** 2, axis=(0, 2, 3), keepdims=True)
        yh = (y - mean) / jnp.sqrt(var + EPS)
        return jnp.maximum(yh * g[None, :, None, None] + be[None, :, None, None], 0.0)

    y = bn_relu(conv(x, w1, b1), g1, be1)
    y = bn_relu(conv(y, w2, b2), g2, be2)
    return y


if __name__ == "__main__":
    N, Cin, Cout, H, W = 2, 4, 8, 16, 16

    key = jax.random.PRNGKey(0)
    ks = jax.random.split(key, 9)
    x = jax.random.normal(ks[0], (N, Cin, H, W), jnp.float32)
    w1 = jax.random.normal(ks[1], (Cout, Cin, 3, 3), jnp.float32) * 0.1
    b1 = jax.random.normal(ks[2], (Cout,), jnp.float32) * 0.1
    g1 = 1.0 + jax.random.normal(ks[3], (Cout,), jnp.float32) * 0.1
    be1 = jax.random.normal(ks[4], (Cout,), jnp.float32) * 0.1
    w2 = jax.random.normal(ks[5], (Cout, Cout, 3, 3), jnp.float32) * 0.1
    b2 = jax.random.normal(ks[6], (Cout,), jnp.float32) * 0.1
    g2 = 1.0 + jax.random.normal(ks[7], (Cout,), jnp.float32) * 0.1
    be2 = jax.random.normal(ks[8], (Cout,), jnp.float32) * 0.1

    params = (w1, b1, g1, be1, w2, b2, g2, be2)

    out = jax.block_until_ready(jax.jit(double_conv_pallas)(x, *params))
    ref = jax.block_until_ready(double_conv_ref(x, *params))

    assert out.shape == (N, Cout, H, W), out.shape
    err = float(jnp.max(jnp.abs(out - ref)))
    # bf16 MXU operands vs. a pure-f32 reference -> bf16-level tolerance.
    assert jnp.allclose(out, ref, atol=2e-2, rtol=2e-2), f"max abs err = {err}"
    print("KERNEL_OK")
</pallas_src>

<mosaic_0001>
module attributes {stable_mosaic.version = 11 : i64} {
  func.func @bn_relu_kernel(%arg0: i32, %arg1: i32, %arg2: memref<1x128xf32, #tpu.memory_space<vmem>>, %arg3: memref<1x128xf32, #tpu.memory_space<vmem>>, %arg4: memref<1x16x16x128xf32, #tpu.memory_space<vmem>>, %arg5: memref<1x16x16x128xbf16, #tpu.memory_space<vmem>>) attributes {dimension_semantics = [#tpu.dimension_semantics<parallel>, #tpu.dimension_semantics<parallel>], iteration_bounds = array<i64: 2, 1>, scalar_prefetch = 0 : i64, scratch_operands = 0 : i64, tpu.core_type = #tpu.core_type<tc>, window_params = [{pipeline_mode = #tpu.pipeline_mode<synchronous>, transform_indices = @transform_0, window_bounds = array<i64: 1, 128>}, {pipeline_mode = #tpu.pipeline_mode<synchronous>, transform_indices = @transform_1, window_bounds = array<i64: 1, 128>}, {transform_indices = @transform_2, window_bounds = array<i64: 1, 16, 16, 128>}, {transform_indices = @transform_3, window_bounds = array<i64: 1, 16, 16, 128>}]} {
    %c0 = arith.constant 0 : index
    %c0_0 = arith.constant 0 : index
    %c0_1 = arith.constant 0 : index
    %c0_2 = arith.constant 0 : index
    %0 = vector.load %arg4[%c0, %c0_0, %c0_1, %c0_2] : memref<1x16x16x128xf32, #tpu.memory_space<vmem>>, vector<1x16x16x128xf32>
    %1 = vector.shape_cast %0 : vector<1x16x16x128xf32> to vector<16x16x128xf32>
    %c0_3 = arith.constant 0 : index
    %c0_4 = arith.constant 0 : index
    %2 = vector.load %arg2[%c0_3, %c0_4] : memref<1x128xf32, #tpu.memory_space<vmem>>, vector<1x128xf32>
    %3 = vector.shape_cast %2 : vector<1x128xf32> to vector<1x1x128xf32>
    %4 = vector.broadcast %3 : vector<1x1x128xf32> to vector<16x16x128xf32>
    %5 = arith.mulf %1, %4 : vector<16x16x128xf32>
    %c0_5 = arith.constant 0 : index
    %c0_6 = arith.constant 0 : index
    %6 = vector.load %arg3[%c0_5, %c0_6] : memref<1x128xf32, #tpu.memory_space<vmem>>, vector<1x128xf32>
    %7 = vector.shape_cast %6 : vector<1x128xf32> to vector<1x1x128xf32>
    %8 = vector.broadcast %7 : vector<1x1x128xf32> to vector<16x16x128xf32>
    %9 = arith.addf %5, %8 : vector<16x16x128xf32>
    %cst = arith.constant 0.000000e+00 : f32
    %10 = vector.broadcast %cst : f32 to vector<16x16x128xf32>
    %11 = arith.maximumf %9, %10 : vector<16x16x128xf32>
    %12 = arith.truncf %11 : vector<16x16x128xf32> to vector<16x16x128xbf16>
    %c0_7 = arith.constant 0 : index
    %c0_8 = arith.constant 0 : index
    %c0_9 = arith.constant 0 : index
    %c0_10 = arith.constant 0 : index
    %13 = vector.load %arg5[%c0_7, %c0_8, %c0_9, %c0_10] : memref<1x16x16x128xbf16, #tpu.memory_space<vmem>>, vector<1x16x16x128xbf16>
    %14 = vector.shape_cast %13 : vector<1x16x16x128xbf16> to vector<16x16x128xbf16>
    %15 = vector.shape_cast %12 : vector<16x16x128xbf16> to vector<1x16x16x128xbf16>
    tpu.vector_store %arg5[%c0_7, %c0_8, %c0_9, %c0_10], %15 {strides = array<i32>} : memref<1x16x16x128xbf16, #tpu.memory_space<vmem>>, vector<1x16x16x128xbf16>,
    return
  }
  func.func @transform_0(%arg0: i32, %arg1: i32) -> (i32, i32) {
    %c0_i32 = arith.constant 0 : i32
    %c0_i32_0 = arith.constant 0 : i32
    %c0_i32_1 = arith.constant 0 : i32
    return %c0_i32, %c0_i32_0 : i32, i32
  }
  func.func @transform_1(%arg0: i32, %arg1: i32) -> (i32, i32) {
    %c0_i32 = arith.constant 0 : i32
    %c0_i32_0 = arith.constant 0 : i32
    %c0_i32_1 = arith.constant 0 : i32
    return %c0_i32, %c0_i32_0 : i32, i32
  }
  func.func @transform_2(%arg0: i32, %arg1: i32) -> (i32, i32, i32, i32) {
    %c0_i32 = arith.constant 0 : i32
    %c0_i32_0 = arith.constant 0 : i32
    %c0_i32_1 = arith.constant 0 : i32
    return %arg0, %arg1, %c0_i32, %c0_i32_0 : i32, i32, i32, i32
  }
  func.func @transform_3(%arg0: i32, %arg1: i32) -> (i32, i32, i32, i32) {
    %c0_i32 = arith.constant 0 : i32
    %c0_i32_0 = arith.constant 0 : i32
    %c0_i32_1 = arith.constant 0 : i32
    return %arg0, %arg1, %c0_i32, %c0_i32_0 : i32, i32, i32, i32
  }
}

module attributes {stable_mosaic.version = 11 : i64} {
  func.func @conv3x3_kernel(%arg0: i32, %arg1: i32, %arg2: memref<1x1x18x18x128xbf16, #tpu.memory_space<vmem>>, %arg3: memref<3x3x128x128xbf16, #tpu.memory_space<vmem>>, %arg4: memref<1x16x16x128xf32, #tpu.memory_space<vmem>>, %arg5: memref<1x1x2x128xf32, #tpu.memory_space<vmem>>) attributes {dimension_semantics = [#tpu.dimension_semantics<parallel>, #tpu.dimension_semantics<parallel>], iteration_bounds = array<i64: 2, 1>, scalar_prefetch = 0 : i64, scratch_operands = 0 : i64, tpu.core_type = #tpu.core_type<tc>, window_params = [{transform_indices = @transform_0, window_bounds = array<i64: 1, 1, 18, 18, 128>}, {pipeline_mode = #tpu.pipeline_mode<synchronous>, transform_indices = @transform_1, window_bounds = array<i64: 3, 3, 128, 128>}, {transform_indices = @transform_2, window_bounds = array<i64: 1, 16, 16, 128>}, {transform_indices = @transform_3, window_bounds = array<i64: 1, 1, 2, 128>}]} {
    %cst = arith.constant 0.000000e+00 : f32
    %0 = vector.broadcast %cst : f32 to vector<256x128xf32>
    %c0 = arith.constant 0 : index
    %c0_0 = arith.constant 0 : index
    %c0_1 = arith.constant 0 : index
    %c0_2 = arith.constant 0 : index
    %c0_3 = arith.constant 0 : index
    %1 = vector.load %arg2[%c0, %c0_0, %c0_1, %c0_2, %c0_3] : memref<1x1x18x18x128xbf16, #tpu.memory_space<vmem>>, vector<1x1x16x16x128xbf16>
    %2 = vector.shape_cast %1 : vector<1x1x16x16x128xbf16> to vector<16x16x128xbf16>
    %3 = vector.shape_cast %2 : vector<16x16x128xbf16> to vector<256x128xbf16>
    %c0_4 = arith.constant 0 : index
    %c0_5 = arith.constant 0 : index
    %c0_6 = arith.constant 0 : index
    %c0_7 = arith.constant 0 : index
    %4 = vector.load %arg3[%c0_4, %c0_5, %c0_6, %c0_7] : memref<3x3x128x128xbf16, #tpu.memory_space<vmem>>, vector<1x1x128x128xbf16>
    %5 = vector.shape_cast %4 : vector<1x1x128x128xbf16> to vector<128x128xbf16>
    %cst_8 = arith.constant dense<0.000000e+00> : vector<256x128xf32>
    %6 = tpu.matmul %3, %5, %cst_8 {dimension_numbers = #tpu.dot_dimension_numbers<[1], [0], [0], [1], [0, 0, 1, 1], [], []>} : vector<256x128xbf16>, vector<128x128xbf16>, vector<256x128xf32> -> vector<256x128xf32>
    %7 = arith.addf %0, %6 : vector<256x128xf32>
    %c0_9 = arith.constant 0 : index
    %c0_10 = arith.constant 0 : index
    %c0_11 = arith.constant 0 : index
    %c1 = arith.constant 1 : index
    %c0_12 = arith.constant 0 : index
    %8 = vector.load %arg2[%c0_9, %c0_10, %c0_11, %c1, %c0_12] : memref<1x1x18x18x128xbf16, #tpu.memory_space<vmem>>, vector<1x1x16x16x128xbf16>
    %9 = vector.shape_cast %8 : vector<1x1x16x16x128xbf16> to vector<16x16x128xbf16>
    %10 = vector.shape_cast %9 : vector<16x16x128xbf16> to vector<256x128xbf16>
    %c0_13 = arith.constant 0 : index
    %c1_14 = arith.constant 1 : index
    %c0_15 = arith.constant 0 : index
    %c0_16 = arith.constant 0 : index
    %11 = vector.load %arg3[%c0_13, %c1_14, %c0_15, %c0_16] : memref<3x3x128x128xbf16, #tpu.memory_space<vmem>>, vector<1x1x128x128xbf16>
    %12 = vector.shape_cast %11 : vector<1x1x128x128xbf16> to vector<128x128xbf16>
    %cst_17 = arith.constant dense<0.000000e+00> : vector<256x128xf32>
    %13 = tpu.matmul %10, %12, %cst_17 {dimension_numbers = #tpu.dot_dimension_numbers<[1], [0], [0], [1], [0, 0, 1, 1], [], []>} : vector<256x128xbf16>, vector<128x128xbf16>, vector<256x128xf32> -> vector<256x128xf32>
    %14 = arith.addf %7, %13 : vector<256x128xf32>
    %c0_18 = arith.constant 0 : index
    %c0_19 = arith.constant 0 : index
    %c0_20 = arith.constant 0 : index
    %c2 = arith.constant 2 : index
    %c0_21 = arith.constant 0 : index
    %15 = vector.load %arg2[%c0_18, %c0_19, %c0_20, %c2, %c0_21] : memref<1x1x18x18x128xbf16, #tpu.memory_space<vmem>>, vector<1x1x16x16x128xbf16>
    %16 = vector.shape_cast %15 : vector<1x1x16x16x128xbf16> to vector<16x16x128xbf16>
    %17 = vector.shape_cast %16 : vector<16x16x128xbf16> to vector<256x128xbf16>
    %c0_22 = arith.constant 0 : index
    %c2_23 = arith.constant 2 : index
    %c0_24 = arith.constant 0 : index
    %c0_25 = arith.constant 0 : index
    %18 = vector.load %arg3[%c0_22, %c2_23, %c0_24, %c0_25] : memref<3x3x128x128xbf16, #tpu.memory_space<vmem>>, vector<1x1x128x128xbf16>
    %19 = vector.shape_cast %18 : vector<1x1x128x128xbf16> to vector<128x128xbf16>
    %cst_26 = arith.constant dense<0.000000e+00> : vector<256x128xf32>
    %20 = tpu.matmul %17, %19, %cst_26 {dimension_numbers = #tpu.dot_dimension_numbers<[1], [0], [0], [1], [0, 0, 1, 1], [], []>} : vector<256x128xbf16>, vector<128x128xbf16>, vector<256x128xf32> -> vector<256x128xf32>
    %21 = arith.addf %14, %20 : vector<256x128xf32>
    %c0_27 = arith.constant 0 : index
    %c0_28 = arith.constant 0 : index
    %c1_29 = arith.constant 1 : index
    %c0_30 = arith.constant 0 : index
    %c0_31 = arith.constant 0 : index
    %22 = vector.load %arg2[%c0_27, %c0_28, %c1_29, %c0_30, %c0_31] : memref<1x1x18x18x128xbf16, #tpu.memory_space<vmem>>, vector<1x1x16x16x128xbf16>
    %23 = vector.shape_cast %22 : vector<1x1x16x16x128xbf16> to vector<16x16x128xbf16>
    %24 = vector.shape_cast %23 : vector<16x16x128xbf16> to vector<256x128xbf16>
    %c1_32 = arith.constant 1 : index
    %c0_33 = arith.constant 0 : index
    %c0_34 = arith.constant 0 : index
    %c0_35 = arith.constant 0 : index
    %25 = vector.load %arg3[%c1_32, %c0_33, %c0_34, %c0_35] : memref<3x3x128x128xbf16, #tpu.memory_space<vmem>>, vector<1x1x128x128xbf16>
    %26 = vector.shape_cast %25 : vector<1x1x128x128xbf16> to vector<128x128xbf16>
    %cst_36 = arith.constant dense<0.000000e+00> : vector<256x128xf32>
    %27 = tpu.matmul %24, %26, %cst_36 {dimension_numbers = #tpu.dot_dimension_numbers<[1], [0], [0], [1], [0, 0, 1, 1], [], []>} : vector<256x128xbf16>, vector<128x128xbf16>, vector<256x128xf32> -> vector<256x128xf32>
    %28 = arith.addf %21, %27 : vector<256x128xf32>
    %c0_37 = arith.constant 0 : index
    %c0_38 = arith.constant 0 : index
    %c1_39 = arith.constant 1 : index
    %c1_40 = arith.constant 1 : index
    %c0_41 = arith.constant 0 : index
    %29 = vector.load %arg2[%c0_37, %c0_38, %c1_39, %c1_40, %c0_41] : memref<1x1x18x18x128xbf16, #tpu.memory_space<vmem>>, vector<1x1x16x16x128xbf16>
    %30 = vector.shape_cast %29 : vector<1x1x16x16x128xbf16> to vector<16x16x128xbf16>
    %31 = vector.shape_cast %30 : vector<16x16x128xbf16> to vector<256x128xbf16>
    %c1_42 = arith.constant 1 : index
    %c1_43 = arith.constant 1 : index
    %c0_44 = arith.constant 0 : index
    %c0_45 = arith.constant 0 : index
    %32 = vector.load %arg3[%c1_42, %c1_43, %c0_44, %c0_45] : memref<3x3x128x128xbf16, #tpu.memory_space<vmem>>, vector<1x1x128x128xbf16>
    %33 = vector.shape_cast %32 : vector<1x1x128x128xbf16> to vector<128x128xbf16>
    %cst_46 = arith.constant dense<0.000000e+00> : vector<256x128xf32>
    %34 = tpu.matmul %31, %33, %cst_46 {dimension_numbers = #tpu.dot_dimension_numbers<[1], [0], [0], [1], [0, 0, 1, 1], [], []>} : vector<256x128xbf16>, vector<128x128xbf16>, vector<256x128xf32> -> vector<256x128xf32>
    %35 = arith.addf %28, %34 : vector<256x128xf32>
    %c0_47 = arith.constant 0 : index
    %c0_48 = arith.constant 0 : index
    %c1_49 = arith.constant 1 : index
    %c2_50 = arith.constant 2 : index
    %c0_51 = arith.constant 0 : index
    %36 = vector.load %arg2[%c0_47, %c0_48, %c1_49, %c2_50, %c0_51] : memref<1x1x18x18x128xbf16, #tpu.memory_space<vmem>>, vector<1x1x16x16x128xbf16>
    %37 = vector.shape_cast %36 : vector<1x1x16x16x128xbf16> to vector<16x16x128xbf16>
    %38 = vector.shape_cast %37 : vector<16x16x128xbf16> to vector<256x128xbf16>
    %c1_52 = arith.constant 1 : index
    %c2_53 = arith.constant 2 : index
    %c0_54 = arith.constant 0 : index
    %c0_55 = arith.constant 0 : index
    %39 = vector.load %arg3[%c1_52, %c2_53, %c0_54, %c0_55] : memref<3x3x128x128xbf16, #tpu.memory_space<vmem>>, vector<1x1x128x128xbf16>
    %40 = vector.shape_cast %39 : vector<1x1x128x128xbf16> to vector<128x128xbf16>
    %cst_56 = arith.constant dense<0.000000e+00> : vector<256x128xf32>
    %41 = tpu.matmul %38, %40, %cst_56 {dimension_numbers = #tpu.dot_dimension_numbers<[1], [0], [0], [1], [0, 0, 1, 1], [], []>} : vector<256x128xbf16>, vector<128x128xbf16>, vector<256x128xf32> -> vector<256x128xf32>
    %42 = arith.addf %35, %41 : vector<256x128xf32>
    %c0_57 = arith.constant 0 : index
    %c0_58 = arith.constant 0 : index
    %c2_59 = arith.constant 2 : index
    %c0_60 = arith.constant 0 : index
    %c0_61 = arith.constant 0 : index
    %43 = vector.load %arg2[%c0_57, %c0_58, %c2_59, %c0_60, %c0_61] : memref<1x1x18x18x128xbf16, #tpu.memory_space<vmem>>, vector<1x1x16x16x128xbf16>
    %44 = vector.shape_cast %43 : vector<1x1x16x16x128xbf16> to vector<16x16x128xbf16>
    %45 = vector.shape_cast %44 : vector<16x16x128xbf16> to vector<256x128xbf16>
    %c2_62 = arith.constant 2 : index
    %c0_63 = arith.constant 0 : index
    %c0_64 = arith.constant 0 : index
    %c0_65 = arith.constant 0 : index
    %46 = vector.load %arg3[%c2_62, %c0_63, %c0_64, %c0_65] : memref<3x3x128x128xbf16, #tpu.memory_space<vmem>>, vector<1x1x128x128xbf16>
    %47 = vector.shape_cast %46 : vector<1x1x128x128xbf16> to vector<128x128xbf16>
    %cst_66 = arith.constant dense<0.000000e+00> : vector<256x128xf32>
    %48 = tpu.matmul %45, %47, %cst_66 {dimension_numbers = #tpu.dot_dimension_numbers<[1], [0], [0], [1], [0, 0, 1, 1], [], []>} : vector<256x128xbf16>, vector<128x128xbf16>, vector<256x128xf32> -> vector<256x128xf32>
    %49 = arith.addf %42, %48 : vector<256x128xf32>
    %c0_67 = arith.constant 0 : index
    %c0_68 = arith.constant 0 : index
    %c2_69 = arith.constant 2 : index
    %c1_70 = arith.constant 1 : index
    %c0_71 = arith.constant 0 : index
    %50 = vector.load %arg2[%c0_67, %c0_68, %c2_69, %c1_70, %c0_71] : memref<1x1x18x18x128xbf16, #tpu.memory_space<vmem>>, vector<1x1x16x16x128xbf16>
    %51 = vector.shape_cast %50 : vector<1x1x16x16x128xbf16> to vector<16x16x128xbf16>
    %52 = vector.shape_cast %51 : vector<16x16x128xbf16> to vector<256x128xbf16>
    %c2_72 = arith.constant 2 : index
    %c1_73 = arith.constant 1 : index
    %c0_74 = arith.constant 0 : index
    %c0_75 = arith.constant 0 : index
    %53 = vector.load %arg3[%c2_72, %c1_73, %c0_74, %c0_75] : memref<3x3x128x128xbf16, #tpu.memory_space<vmem>>, vector<1x1x128x128xbf16>
    %54 = vector.shape_cast %53 : vector<1x1x128x128xbf16> to vector<128x128xbf16>
    %cst_76 = arith.constant dense<0.000000e+00> : vector<256x128xf32>
    %55 = tpu.matmul %52, %54, %cst_76 {dimension_numbers = #tpu.dot_dimension_numbers<[1], [0], [0], [1], [0, 0, 1, 1], [], []>} : vector<256x128xbf16>, vector<128x128xbf16>, vector<256x128xf32> -> vector<256x128xf32>
    %56 = arith.addf %49, %55 : vector<256x128xf32>
    %c0_77 = arith.constant 0 : index
    %c0_78 = arith.constant 0 : index
    %c2_79 = arith.constant 2 : index
    %c2_80 = arith.constant 2 : index
    %c0_81 = arith.constant 0 : index
    %57 = vector.load %arg2[%c0_77, %c0_78, %c2_79, %c2_80, %c0_81] : memref<1x1x18x18x128xbf16, #tpu.memory_space<vmem>>, vector<1x1x16x16x128xbf16>
    %58 = vector.shape_cast %57 : vector<1x1x16x16x128xbf16> to vector<16x16x128xbf16>
    %59 = vector.shape_cast %58 : vector<16x16x128xbf16> to vector<256x128xbf16>
    %c2_82 = arith.constant 2 : index
    %c2_83 = arith.constant 2 : index
    %c0_84 = arith.constant 0 : index
    %c0_85 = arith.constant 0 : index
    %60 = vector.load %arg3[%c2_82, %c2_83, %c0_84, %c0_85] : memref<3x3x128x128xbf16, #tpu.memory_space<vmem>>, vector<1x1x128x128xbf16>
    %61 = vector.shape_cast %60 : vector<1x1x128x128xbf16> to vector<128x128xbf16>
    %cst_86 = arith.constant dense<0.000000e+00> : vector<256x128xf32>
    %62 = tpu.matmul %59, %61, %cst_86 {dimension_numbers = #tpu.dot_dimension_numbers<[1], [0], [0], [1], [0, 0, 1, 1], [], []>} : vector<256x128xbf16>, vector<128x128xbf16>, vector<256x128xf32> -> vector<256x128xf32>
    %63 = arith.addf %56, %62 : vector<256x128xf32>
    %64 = vector.shape_cast %63 : vector<256x128xf32> to vector<16x16x128xf32>
    %c0_87 = arith.constant 0 : index
    %c0_88 = arith.constant 0 : index
    %c0_89 = arith.constant 0 : index
    %c0_90 = arith.constant 0 : index
    %65 = vector.load %arg4[%c0_87, %c0_88, %c0_89, %c0_90] : memref<1x16x16x128xf32, #tpu.memory_space<vmem>>, vector<1x16x16x128xf32>
    %66 = vector.shape_cast %65 : vector<1x16x16x128xf32> to vector<16x16x128xf32>
    %67 = vector.shape_cast %64 : vector<16x16x128xf32> to vector<1x16x16x128xf32>
    tpu.vector_store %arg4[%c0_87, %c0_88, %c0_89, %c0_90], %67 {strides = array<i32>} : memref<1x16x16x128xf32, #tpu.memory_space<vmem>>, vector<1x16x16x128xf32>,
    %cst_91 = arith.constant dense<0.000000e+00> : vector<128xf32>
    %68 = vector.multi_reduction <add>, %63, %cst_91 [0] : vector<256x128xf32> to vector<128xf32>
    %69 = vector.shape_cast %68 : vector<128xf32> to vector<1x128xf32>
    %70 = arith.mulf %63, %63 : vector<256x128xf32>
    %cst_92 = arith.constant dense<0.000000e+00> : vector<128xf32>
    %71 = vector.multi_reduction <add>, %70, %cst_92 [0] : vector<256x128xf32> to vector<128xf32>
    %72 = vector.shape_cast %71 : vector<128xf32> to vector<1x128xf32>
    %73 = tpu.concatenate %69, %72 in 0 : vector<1x128xf32>, vector<1x128xf32> -> vector<2x128xf32>
    %c0_93 = arith.constant 0 : index
    %c0_94 = arith.constant 0 : index
    %c0_95 = arith.constant 0 : index
    %c0_96 = arith.constant 0 : index
    %74 = vector.load %arg5[%c0_93, %c0_94, %c0_95, %c0_96] : memref<1x1x2x128xf32, #tpu.memory_space<vmem>>, vector<1x1x2x128xf32>
    %75 = vector.shape_cast %74 : vector<1x1x2x128xf32> to vector<2x128xf32>
    %76 = vector.shape_cast %73 : vector<2x128xf32> to vector<1x1x2x128xf32>
    tpu.vector_store %arg5[%c0_93, %c0_94, %c0_95, %c0_96], %76 {strides = array<i32>} : memref<1x1x2x128xf32, #tpu.memory_space<vmem>>, vector<1x1x2x128xf32>,
    return
  }
  func.func @transform_0(%arg0: i32, %arg1: i32) -> (i32, i32, i32, i32, i32) {
    %c0_i32 = arith.constant 0 : i32
    %c0_i32_0 = arith.constant 0 : i32
    %c0_i32_1 = arith.constant 0 : i32
    %c0_i32_2 = arith.constant 0 : i32
    return %arg0, %arg1, %c0_i32, %c0_i32_0, %c0_i32_1 : i32, i32, i32, i32, i32
  }
  func.func @transform_1(%arg0: i32, %arg1: i32) -> (i32, i32, i32, i32) {
    %c0_i32 = arith.constant 0 : i32
    %c0_i32_0 = arith.constant 0 : i32
    %c0_i32_1 = arith.constant 0 : i32
    %c0_i32_2 = arith.constant 0 : i32
    %c0_i32_3 = arith.constant 0 : i32
    return %c0_i32, %c0_i32_0, %c0_i32_1, %c0_i32_2 : i32, i32, i32, i32
  }
  func.func @transform_2(%arg0: i32, %arg1: i32) -> (i32, i32, i32, i32) {
    %c0_i32 = arith.constant 0 : i32
    %c0_i32_0 = arith.constant 0 : i32
    %c0_i32_1 = arith.constant 0 : i32
    return %arg0, %arg1, %c0_i32, %c0_i32_0 : i32, i32, i32, i32
  }
  func.func @transform_3(%arg0: i32, %arg1: i32) -> (i32, i32, i32, i32) {
    %c0_i32 = arith.constant 0 : i32
    %c0_i32_0 = arith.constant 0 : i32
    %c0_i32_1 = arith.constant 0 : i32
    return %arg0, %arg1, %c0_i32, %c0_i32_0 : i32, i32, i32, i32
  }
}

module attributes {stable_mosaic.version = 11 : i64} {
  func.func @bn_relu_kernel(%arg0: i32, %arg1: i32, %arg2: memref<1x128xf32, #tpu.memory_space<vmem>>, %arg3: memref<1x128xf32, #tpu.memory_space<vmem>>, %arg4: memref<1x16x16x128xf32, #tpu.memory_space<vmem>>, %arg5: memref<1x16x16x128xf32, #tpu.memory_space<vmem>>) attributes {dimension_semantics = [#tpu.dimension_semantics<parallel>, #tpu.dimension_semantics<parallel>], iteration_bounds = array<i64: 2, 1>, scalar_prefetch = 0 : i64, scratch_operands = 0 : i64, tpu.core_type = #tpu.core_type<tc>, window_params = [{pipeline_mode = #tpu.pipeline_mode<synchronous>, transform_indices = @transform_0, window_bounds = array<i64: 1, 128>}, {pipeline_mode = #tpu.pipeline_mode<synchronous>, transform_indices = @transform_1, window_bounds = array<i64: 1, 128>}, {transform_indices = @transform_2, window_bounds = array<i64: 1, 16, 16, 128>}, {transform_indices = @transform_3, window_bounds = array<i64: 1, 16, 16, 128>}]} {
    %c0 = arith.constant 0 : index
    %c0_0 = arith.constant 0 : index
    %c0_1 = arith.constant 0 : index
    %c0_2 = arith.constant 0 : index
    %0 = vector.load %arg4[%c0, %c0_0, %c0_1, %c0_2] : memref<1x16x16x128xf32, #tpu.memory_space<vmem>>, vector<1x16x16x128xf32>
    %1 = vector.shape_cast %0 : vector<1x16x16x128xf32> to vector<16x16x128xf32>
    %c0_3 = arith.constant 0 : index
    %c0_4 = arith.constant 0 : index
    %2 = vector.load %arg2[%c0_3, %c0_4] : memref<1x128xf32, #tpu.memory_space<vmem>>, vector<1x128xf32>
    %3 = vector.shape_cast %2 : vector<1x128xf32> to vector<1x1x128xf32>
    %4 = vector.broadcast %3 : vector<1x1x128xf32> to vector<16x16x128xf32>
    %5 = arith.mulf %1, %4 : vector<16x16x128xf32>
    %c0_5 = arith.constant 0 : index
    %c0_6 = arith.constant 0 : index
    %6 = vector.load %arg3[%c0_5, %c0_6] : memref<1x128xf32, #tpu.memory_space<vmem>>, vector<1x128xf32>
    %7 = vector.shape_cast %6 : vector<1x128xf32> to vector<1x1x128xf32>
    %8 = vector.broadcast %7 : vector<1x1x128xf32> to vector<16x16x128xf32>
    %9 = arith.addf %5, %8 : vector<16x16x128xf32>
    %cst = arith.constant 0.000000e+00 : f32
    %10 = vector.broadcast %cst : f32 to vector<16x16x128xf32>
    %11 = arith.maximumf %9, %10 : vector<16x16x128xf32>
    %c0_7 = arith.constant 0 : index
    %c0_8 = arith.constant 0 : index
    %c0_9 = arith.constant 0 : index
    %c0_10 = arith.constant 0 : index
    %12 = vector.load %arg5[%c0_7, %c0_8, %c0_9, %c0_10] : memref<1x16x16x128xf32, #tpu.memory_space<vmem>>, vector<1x16x16x128xf32>
    %13 = vector.shape_cast %12 : vector<1x16x16x128xf32> to vector<16x16x128xf32>
    %14 = vector.shape_cast %11 : vector<16x16x128xf32> to vector<1x16x16x128xf32>
    tpu.vector_store %arg5[%c0_7, %c0_8, %c0_9, %c0_10], %14 {strides = array<i32>} : memref<1x16x16x128xf32, #tpu.memory_space<vmem>>, vector<1x16x16x128xf32>,
    return
  }
  func.func @transform_0(%arg0: i32, %arg1: i32) -> (i32, i32) {
    %c0_i32 = arith.constant 0 : i32
    %c0_i32_0 = arith.constant 0 : i32
    %c0_i32_1 = arith.constant 0 : i32
    return %c0_i32, %c0_i32_0 : i32, i32
  }
  func.func @transform_1(%arg0: i32, %arg1: i32) -> (i32, i32) {
    %c0_i32 = arith.constant 0 : i32
    %c0_i32_0 = arith.constant 0 : i32
    %c0_i32_1 = arith.constant 0 : i32
    return %c0_i32, %c0_i32_0 : i32, i32
  }
  func.func @transform_2(%arg0: i32, %arg1: i32) -> (i32, i32, i32, i32) {
    %c0_i32 = arith.constant 0 : i32
    %c0_i32_0 = arith.constant 0 : i32
    %c0_i32_1 = arith.constant 0 : i32
    return %arg0, %arg1, %c0_i32, %c0_i32_0 : i32, i32, i32, i32
  }
  func.func @transform_3(%arg0: i32, %arg1: i32) -> (i32, i32, i32, i32) {
    %c0_i32 = arith.constant 0 : i32
    %c0_i32_0 = arith.constant 0 : i32
    %c0_i32_1 = arith.constant 0 : i32
    return %arg0, %arg1, %c0_i32, %c0_i32_0 : i32, i32, i32, i32
  }
}

</mosaic_0001>

<llo_original>
// kernel: double_conv_pallas.5
$region0: #{double_conv_pallas.5}
  #allocation0 [shape = 'u32[]', space=smem, size = 0x4, offset = 0x4, fixed_abs, tag = 'smem constant byte address 0x4 - core index']
  #allocation1 [shape = 'u32[144,128]{1,0:T(1,128)}', space=vmem, size = 0x12000, scoped, tag = 'internal scratch']
  %s0 = inlined_call_operand.vmem [shape: f32[1,128], index: 0, kind: input, shape index: {}]
  %s1 = inlined_call_operand.vmem [shape: f32[1,128], index: 1, kind: input, shape index: {}]
  %s2 = inlined_call_operand.vmem [shape: f32[2,16,16,128], index: 2, kind: input, shape index: {}]
  %s3 = inlined_call_operand.vmem [shape: bf16[2,16,16,128], index: 3, kind: output, shape index: {}]
  %s4 = sld [smem:[#allocation0]]
  $region45: #{double_conv_pallas.5} parent=0
    _
  %s6 = ssub.s32 1, %s4
  %s7 = scalar_select 0, %s6, %s4
  loop: start=0, step=1, limit=4
  $region2: #{double_conv_pallas.5} parent=0 // loop_pre_header
    _
  $region3: #{double_conv_pallas.5} parent=0 // loop_header
    %s9 = sphi 0, %s13
    %p10 = scmp.ge.s32.totalorder %s9, 4
    %s16 = sphi 0, %s28
    %s17 = sphi 0, %s24
    %s18 = sphi 0, %s16
    %s19 = sphi 0, %s17
    %s20 = sphi 0, %s18
    %s21 = sphi 0, %s19
    %s29 = sphi 0, %s29
    %s31 = sphi 0, %s29
    %s32 = sphi 0, %s31
    %s46 = sphi 0, %s32
    %s50 = sphi 0, %s50
    %s52 = sphi 0, %s50
    %s53 = sphi 0, %s52
    %s67 = sphi 0, %s53
    %s75 = sphi 0, %s77
    %s78 = sphi 0, %s75
    %s79 = sphi 0, %s78
    %s95 = sphi 0, %s79
    %s103 = sphi 0, %s105
    %s106 = sphi 0, %s103
    %s107 = sphi 0, %s106
    %s123 = sphi 0, %s107
  $region4: #{double_conv_pallas.5} parent=0 // loop_header_branch
    %12 = sbr.rel (%p10) target = $region8
  $region5: #{double_conv_pallas.5} parent=0 // loop_body
    %s14 = ssub.s32 %s9, 1
    %s15 = ssub.s32 %s9, 2
    %s22 = sadd.s32 1, %s17
    %p23 = scmp.ge.s32.totalorder %s22, 1
    %s24 = scalar_select %p23, 0, %s22
    %s25 = sadd.s32 1, %s16
    %s26 = scalar_select %p23, %s25, %s16
    %p27 = scmp.ge.s32.totalorder %s26, 2
    %s28 = scalar_select %p27, 0, %s26
    %s30 = sadd.s32 %s29, 1
    %p33 = scmp.eq.s32.totalorder %s9, 1
    %p34 = scmp.ne.s32.totalorder %s29, %s31
    %p35 = scmp.eq.s32.totalorder %s9, 0
    %p36 = por %p34, %p35
    %p37 = scmp.ne.s32.totalorder %s29, %s31
    %p38 = scmp.eq.s32.totalorder %s14, 1
    %p39 = por %p37, %p38
    %p40 = scmp.ne.s32.totalorder %s31, %s32
    %p41 = scmp.eq.s32.totalorder %s14, 0
    %p42 = por %p40, %p41
    %p43 = scmp.ne.s32.totalorder %s31, %s32
    %p44 = scmp.eq.s32.totalorder %s15, 1
    %p45 = por %p43, %p44
    %p47 = scmp.ne.s32.totalorder %s32, %s46
    %p48 = scmp.eq.s32.totalorder %s15, 0
    %p49 = por %p47, %p48
    %s51 = sadd.s32 %s50, 1
    %p54 = scmp.eq.s32.totalorder %s9, 1
    %p55 = scmp.ne.s32.totalorder %s50, %s52
    %p56 = scmp.eq.s32.totalorder %s9, 0
    %p57 = por %p55, %p56
    %p58 = scmp.ne.s32.totalorder %s50, %s52
    %p59 = scmp.eq.s32.totalorder %s14, 1
    %p60 = por %p58, %p59
    %p61 = scmp.ne.s32.totalorder %s52, %s53
    %p62 = scmp.eq.s32.totalorder %s14, 0
    %p63 = por %p61, %p62
    %p64 = scmp.ne.s32.totalorder %s52, %s53
    %p65 = scmp.eq.s32.totalorder %s15, 1
    %p66 = por %p64, %p65
    %p68 = scmp.ne.s32.totalorder %s53, %s67
    %p69 = scmp.eq.s32.totalorder %s15, 0
    %p70 = por %p68, %p69
    %s71 = ssub.s32 %s16, %s28
    %s72 = ssub.s32 %s17, %s24
    %s73 = sor.u32 %s71, %s72
    %p74 = scmp.eq.s32.totalorder %s73, 0
    %s76 = sadd.s32 %s75, 1
    %s77 = scalar_select %p74, %s75, %s76
    %p80 = pneg %p74
    %p81 = scmp.eq.s32.totalorder %s9, 1
    %p82 = por %p80, %p81
    %p83 = scmp.ne.s32.totalorder %s75, %s78
    %p84 = scmp.eq.s32.totalorder %s9, 0
    %p85 = por %p83, %p84
    %p86 = scmp.ne.s32.totalorder %s75, %s78
    %p87 = scmp.eq.s32.totalorder %s14, 1
    %p88 = por %p86, %p87
    %p89 = scmp.ne.s32.totalorder %s78, %s79
    %p90 = scmp.eq.s32.totalorder %s14, 0
    %p91 = por %p89, %p90
    %p92 = scmp.ne.s32.totalorder %s78, %s79
    %p93 = scmp.eq.s32.totalorder %s15, 1
    %p94 = por %p92, %p93
    %p96 = scmp.ne.s32.totalorder %s79, %s95
    %p97 = scmp.eq.s32.totalorder %s15, 0
    %p98 = por %p96, %p97
    %s99 = ssub.s32 %s16, %s28
    %s100 = ssub.s32 %s17, %s24
    %s101 = sor.u32 %s99, %s100
    %p102 = scmp.eq.s32.totalorder %s101, 0
    %s104 = sadd.s32 %s103, 1
    %s105 = scalar_select %p102, %s103, %s104
    %p108 = pneg %p102
    %p109 = scmp.eq.s32.totalorder %s9, 1
    %p110 = por %p108, %p109
    %p111 = scmp.ne.s32.totalorder %s103, %s106
    %p112 = scmp.eq.s32.totalorder %s9, 0
    %p113 = por %p111, %p112
    %p114 = scmp.ne.s32.totalorder %s103, %s106
    %p115 = scmp.eq.s32.totalorder %s14, 1
    %p116 = por %p114, %p115
    %p117 = scmp.ne.s32.totalorder %s106, %s107
    %p118 = scmp.eq.s32.totalorder %s14, 0
    %p119 = por %p117, %p118
    %p120 = scmp.ne.s32.totalorder %s106, %s107
    %p121 = scmp.eq.s32.totalorder %s15, 1
    %p122 = por %p120, %p121
    %p124 = scmp.ne.s32.totalorder %s107, %s123
    %p125 = scmp.eq.s32.totalorder %s15, 0
    %p126 = por %p124, %p125
    %p127 = scmp.le.s32.totalorder 1, %s9
    %p128 = scmp.lt.s32.totalorder %s9, 3
    %p129 = pnand %p127, %p128
    %p130 = pneg %p129
    // Predicated region
    $region9: #{double_conv_pallas.5} parent=5 // pred_check
      _
    $region10: #{double_conv_pallas.5} parent=5 // pred_check_branch
      %132 = sbr.rel (%p129) target = $region12
    $region11: #{double_conv_pallas.5} parent=5 // pred_region
      %s133 = ssub.s32 %s9, 1
      // Predicated region
      $region13: #{double_conv_pallas.5} parent=11 // pred_check
        %p134 = pneg %p42
      $region14: #{double_conv_pallas.5} parent=11 // pred_check_branch
        %136 = sbr.rel (%p134) target = $region16
      $region15: #{double_conv_pallas.5} parent=11 // pred_region
        _
      $region16: #{double_conv_pallas.5} parent=11 // pred_fallthru
        _
      // Predicated region
      $region17: #{double_conv_pallas.5} parent=11 // pred_check
        %p137 = pneg %p63
      $region18: #{double_conv_pallas.5} parent=11 // pred_check_branch
        %139 = sbr.rel (%p137) target = $region20
      $region19: #{double_conv_pallas.5} parent=11 // pred_region
        _
      $region20: #{double_conv_pallas.5} parent=11 // pred_fallthru
        _
    $region12: #{double_conv_pallas.5} parent=5 // pred_fallthru
      _
    %p140 = scmp.lt.s32.totalorder %s9, 2
    // Predicated region
    $region21: #{double_conv_pallas.5} parent=5 // pred_check
      %p141 = pneg %p140
    $region22: #{double_conv_pallas.5} parent=5 // pred_check_branch
      %143 = sbr.rel (%p141) target = $region24
    $region23: #{double_conv_pallas.5} parent=5 // pred_region
      // Predicated region
      $region25: #{double_conv_pallas.5} parent=23 // pred_check
        %p144 = pneg %p85
      $region26: #{double_conv_pallas.5} parent=23 // pred_check_branch
        %146 = sbr.rel (%p144) target = $region28
      $region27: #{double_conv_pallas.5} parent=23 // pred_region
        %s147 = smul.u32 16, %s17
        %p148 = scmp.lt.s32.totalorder %s16, 1
        %s149 = scalar_select %p148, %s16, 1
        %p150 = scmp.lt.s32.totalorder %s147, 15
        %s151 = scalar_select %p150, %s147, 15
        %s152 = smul.addr %s151, 2
        %s153 = smul.addr %s149, 32
        %s154 = sadd.s32 %s152, %s153
        %s155 = smul.addr %s154, 8
        %s156 = scalar_lea.vmem %s2, %s155
        %s157 = smul.u32 16, %s17
      $region28: #{double_conv_pallas.5} parent=23 // pred_fallthru
        _
    $region24: #{double_conv_pallas.5} parent=5 // pred_fallthru
      _
    %p158 = scmp.le.s32.totalorder 1, %s9
    %p159 = scmp.lt.s32.totalorder %s9, 3
    %p160 = pnand %p158, %p159
    %p161 = pneg %p160
    // Predicated region
    $region29: #{double_conv_pallas.5} parent=5 // pred_check
      _
    $region30: #{double_conv_pallas.5} parent=5 // pred_check_branch
      %163 = sbr.rel (%p160) target = $region32
    $region31: #{double_conv_pallas.5} parent=5 // pred_region
      %s164 = ssub.s32 %s9, 1
      %p165 = pneg %p42
      %p166 = pneg %p39
      %p167 = pneg %p63
      %p168 = pneg %p60
      %s169 = smul.u32 16, %s19
      %p170 = scmp.lt.s32.totalorder %s18, 1
      %s171 = scalar_select %p170, %s18, 1
      %p172 = scmp.lt.s32.totalorder %s169, 15
      %s173 = scalar_select %p172, %s169, 15
      %s174 = smul.addr %s173, 2
      %s175 = smul.addr %s171, 32
      %s176 = sadd.s32 %s174, %s175
      %s177 = smul.addr %s176, 8
      %s178 = scalar_lea.vmem %s2, %s177
      %p179 = pneg %p91
      %p180 = pneg %p88
      %p181 = pneg %p119
      %p182 = pneg %p116
      %s183 = smul.u32 16, %s19
      %p184 = scmp.lt.s32.totalorder %s18, 1
      %s185 = scalar_select %p184, %s18, 1
      %p186 = scmp.lt.s32.totalorder %s183, 15
      %s187 = scalar_select %p186, %s183, 15
      %s188 = smul.addr %s187, 2
      %s189 = smul.addr %s185, 32
      %s190 = sadd.s32 %s188, %s189
      %s191 = smul.addr %s190, 4
      %s192 = scalar_lea.vmem %s3, %s191
      %s193 = smul.u32 16, %s19
      %p194 = scmp.lt.s32.totalorder %s18, 1
      %s195 = scalar_select %p194, %s18, 1
      %p196 = scmp.lt.s32.totalorder %s193, 15
      %s197 = scalar_select %p196, %s193, 15
      %s198 = smul.addr %s197, 2
      %s199 = smul.addr %s195, 32
      %s200 = sadd.s32 %s198, %s199
      %s201 = smul.addr %s200, 8
      %s202 = scalar_lea.vmem %s2, %s201
      %s203 = smul.u32 16, %s19
      %s204 = smul.u32 16, %s19
      %p205 = scmp.lt.s32.totalorder %s18, 1
      %s206 = scalar_select %p205, %s18, 1
      %p207 = scmp.lt.s32.totalorder %s204, 15
      %s208 = scalar_select %p207, %s204, 15
      %s209 = smul.addr %s208, 2
      %s210 = smul.addr %s206, 32
      %s211 = sadd.s32 %s209, %s210
      %s212 = smul.addr %s211, 4
      %s213 = scalar_lea.vmem %s3, %s212
      %s214 = smul.u32 16, %s19
      %v215 = vld [vmem:[%s202] sm:$0xff]
      %v216 = vld [vmem:[%s202 + $0x8] sm:$0xff]
      %v217 = vld [vmem:[%s202 + $0x10] sm:$0xff]
      %v218 = vld [vmem:[%s202 + $0x18] sm:$0xff]
      %v219 = vld [vmem:[%s202 + $0x20] sm:$0xff]
      %v220 = vld [vmem:[%s202 + $0x28] sm:$0xff]
      %v221 = vld [vmem:[%s202 + $0x30] sm:$0xff]
      %v222 = vld [vmem:[%s202 + $0x38] sm:$0xff]
      %v223 = vld [vmem:[%s202 + $0x40] sm:$0xff]
      %v224 = vld [vmem:[%s202 + $0x48] sm:$0xff]
      %v225 = vld [vmem:[%s202 + $0x50] sm:$0xff]
      %v226 = vld [vmem:[%s202 + $0x58] sm:$0xff]
      %v227 = vld [vmem:[%s202 + $0x60] sm:$0xff]
      %v228 = vld [vmem:[%s202 + $0x68] sm:$0xff]
      %v229 = vld [vmem:[%s202 + $0x70] sm:$0xff]
      %v230 = vld [vmem:[%s202 + $0x78] sm:$0xff]
      %v231 = vld [vmem:[%s202 + $0x80] sm:$0xff]
      %v232 = vld [vmem:[%s202 + $0x88] sm:$0xff]
      %v233 = vld [vmem:[%s202 + $0x90] sm:$0xff]
      %v234 = vld [vmem:[%s202 + $0x98] sm:$0xff]
      %v235 = vld [vmem:[%s202 + $0xa0] sm:$0xff]
      %v236 = vld [vmem:[%s202 + $0xa8] sm:$0xff]
      %v237 = vld [vmem:[%s202 + $0xb0] sm:$0xff]
      %v238 = vld [vmem:[%s202 + $0xb8] sm:$0xff]
      %v239 = vld [vmem:[%s202 + $0xc0] sm:$0xff]
      %v240 = vld [vmem:[%s202 + $0xc8] sm:$0xff]
      %v241 = vld [vmem:[%s202 + $0xd0] sm:$0xff]
      %v242 = vld [vmem:[%s202 + $0xd8] sm:$0xff]
      %v243 = vld [vmem:[%s202 + $0xe0] sm:$0xff]
      %v244 = vld [vmem:[%s202 + $0xe8] sm:$0xff]
      %v245 = vld [vmem:[%s202 + $0xf0] sm:$0xff]
      %v246 = vld [vmem:[%s202 + $0xf8] sm:$0xff]
      %v247 = vld [vmem:[%s0] sm:$0x1]
      %v249 = vlaneseq
      %v250 = vshrl.u32 %v249, 7
      %v251 = vsub.s32 0, %v250
      %v252 = vrot.slane %v247, %v251
      %v254 = vmul.f32 %v215, %v252
      %v255 = vmul.f32 %v216, %v252
      %v256 = vmul.f32 %v217, %v252
      %v257 = vmul.f32 %v218, %v252
      %v258 = vmul.f32 %v219, %v252
      %v259 = vmul.f32 %v220, %v252
      %v260 = vmul.f32 %v221, %v252
      %v261 = vmul.f32 %v222, %v252
      %v262 = vmul.f32 %v223, %v252
      %v263 = vmul.f32 %v224, %v252
      %v264 = vmul.f32 %v225, %v252
      %v265 = vmul.f32 %v226, %v252
      %v266 = vmul.f32 %v227, %v252
      %v267 = vmul.f32 %v228, %v252
      %v268 = vmul.f32 %v229, %v252
      %v269 = vmul.f32 %v230, %v252
      %v270 = vmul.f32 %v231, %v252
      %v271 = vmul.f32 %v232, %v252
      %v272 = vmul.f32 %v233, %v252
      %v273 = vmul.f32 %v234, %v252
      %v274 = vmul.f32 %v235, %v252
      %v275 = vmul.f32 %v236, %v252
      %v276 = vmul.f32 %v237, %v252
      %v277 = vmul.f32 %v238, %v252
      %v278 = vmul.f32 %v239, %v252
      %v279 = vmul.f32 %v240, %v252
      %v280 = vmul.f32 %v241, %v252
      %v281 = vmul.f32 %v242, %v252
      %v282 = vmul.f32 %v243, %v252
      %v283 = vmul.f32 %v244, %v252
      %v284 = vmul.f32 %v245, %v252
      %v285 = vmul.f32 %v246, %v252
      %v286 = vld [vmem:[%s1] sm:$0x1]
      %v288 = vlaneseq
      %v289 = vshrl.u32 %v288, 7
      %v290 = vsub.s32 0, %v289
      %v291 = vrot.slane %v286, %v290
      %v293 = vadd.f32 %v254, %v291
      %v294 = vadd.f32 %v255, %v291
      %v295 = vadd.f32 %v256, %v291
      %v296 = vadd.f32 %v257, %v291
      %v297 = vadd.f32 %v258, %v291
      %v298 = vadd.f32 %v259, %v291
      %v299 = vadd.f32 %v260, %v291
      %v300 = vadd.f32 %v261, %v291
      %v301 = vadd.f32 %v262, %v291
      %v302 = vadd.f32 %v263, %v291
      %v303 = vadd.f32 %v264, %v291
      %v304 = vadd.f32 %v265, %v291
      %v305 = vadd.f32 %v266, %v291
      %v306 = vadd.f32 %v267, %v291
      %v307 = vadd.f32 %v268, %v291
      %v308 = vadd.f32 %v269, %v291
      %v309 = vadd.f32 %v270, %v291
      %v310 = vadd.f32 %v271, %v291
      %v311 = vadd.f32 %v272, %v291
      %v312 = vadd.f32 %v273, %v291
      %v313 = vadd.f32 %v274, %v291
      %v314 = vadd.f32 %v275, %v291
      %v315 = vadd.f32 %v276, %v291
      %v316 = vadd.f32 %v277, %v291
      %v317 = vadd.f32 %v278, %v291
      %v318 = vadd.f32 %v279, %v291
      %v319 = vadd.f32 %v280, %v291
      %v320 = vadd.f32 %v281, %v291
      %v321 = vadd.f32 %v282, %v291
      %v322 = vadd.f32 %v283, %v291
      %v323 = vadd.f32 %v284, %v291
      %v324 = vadd.f32 %v285, %v291
      %v325 = vmax.f32 %v293, 0.0
      %v326 = vmax.f32 %v294, 0.0
      %v327 = vmax.f32 %v295, 0.0
      %v328 = vmax.f32 %v296, 0.0
      %v329 = vmax.f32 %v297, 0.0
      %v330 = vmax.f32 %v298, 0.0
      %v331 = vmax.f32 %v299, 0.0
      %v332 = vmax.f32 %v300, 0.0
      %v333 = vmax.f32 %v301, 0.0
      %v334 = vmax.f32 %v302, 0.0
      %v335 = vmax.f32 %v303, 0.0
      %v336 = vmax.f32 %v304, 0.0
      %v337 = vmax.f32 %v305, 0.0
      %v338 = vmax.f32 %v306, 0.0
      %v339 = vmax.f32 %v307, 0.0
      %v340 = vmax.f32 %v308, 0.0
      %v341 = vmax.f32 %v309, 0.0
      %v342 = vmax.f32 %v310, 0.0
      %v343 = vmax.f32 %v311, 0.0
      %v344 = vmax.f32 %v312, 0.0
      %v345 = vmax.f32 %v313, 0.0
      %v346 = vmax.f32 %v314, 0.0
      %v347 = vmax.f32 %v315, 0.0
      %v348 = vmax.f32 %v316, 0.0
      %v349 = vmax.f32 %v317, 0.0
      %v350 = vmax.f32 %v318, 0.0
      %v351 = vmax.f32 %v319, 0.0
      %v352 = vmax.f32 %v320, 0.0
      %v353 = vmax.f32 %v321, 0.0
      %v354 = vmax.f32 %v322, 0.0
      %v355 = vmax.f32 %v323, 0.0
      %v356 = vmax.f32 %v324, 0.0
      %v357 = vpack.c.bf16 %v326, %v325
      %v358 = vpack.c.bf16 %v328, %v327
      %v359 = vpack.c.bf16 %v330, %v329
      %v360 = vpack.c.bf16 %v332, %v331
      %v361 = vpack.c.bf16 %v334, %v333
      %v362 = vpack.c.bf16 %v336, %v335
      %v363 = vpack.c.bf16 %v338, %v337
      %v364 = vpack.c.bf16 %v340, %v339
      %v365 = vpack.c.bf16 %v342, %v341
      %v366 = vpack.c.bf16 %v344, %v343
      %v367 = vpack.c.bf16 %v346, %v345
      %v368 = vpack.c.bf16 %v348, %v347
      %v369 = vpack.c.bf16 %v350, %v349
      %v370 = vpack.c.bf16 %v352, %v351
      %v371 = vpack.c.bf16 %v354, %v353
      %v372 = vpack.c.bf16 %v356, %v355
      %v389 = vunpack.c.l.b16 %v357
      %v390 = vunpack.c.h.b16 %v357
      %v391 = vunpack.c.l.b16 %v358
      %v392 = vunpack.c.h.b16 %v358
      %v393 = vunpack.c.l.b16 %v359
      %v394 = vunpack.c.h.b16 %v359
      %v395 = vunpack.c.l.b16 %v360
      %v396 = vunpack.c.h.b16 %v360
      %v397 = vunpack.c.l.b16 %v361
      %v398 = vunpack.c.h.b16 %v361
      %v399 = vunpack.c.l.b16 %v362
      %v400 = vunpack.c.h.b16 %v362
      %v401 = vunpack.c.l.b16 %v363
      %v402 = vunpack.c.h.b16 %v363
      %v403 = vunpack.c.l.b16 %v364
      %v404 = vunpack.c.h.b16 %v364
      %v405 = vunpack.c.l.b16 %v365
      %v406 = vunpack.c.h.b16 %v365
      %v407 = vunpack.c.l.b16 %v366
      %v408 = vunpack.c.h.b16 %v366
      %v409 = vunpack.c.l.b16 %v367
      %v410 = vunpack.c.h.b16 %v367
      %v411 = vunpack.c.l.b16 %v368
      %v412 = vunpack.c.h.b16 %v368
      %v413 = vunpack.c.l.b16 %v369
      %v414 = vunpack.c.h.b16 %v369
      %v415 = vunpack.c.l.b16 %v370
      %v416 = vunpack.c.h.b16 %v370
      %v417 = vunpack.c.l.b16 %v371
      %v418 = vunpack.c.h.b16 %v371
      %v419 = vunpack.c.l.b16 %v372
      %v420 = vunpack.c.h.b16 %v372
      %v421 = vpack.c.b16 %v389, %v389
      %v422 = vpack.c.b16 %v390, %v390
      %v423 = vpack.c.b16 %v391, %v391
      %v424 = vpack.c.b16 %v392, %v392
      %v425 = vpack.c.b16 %v393, %v393
      %v426 = vpack.c.b16 %v394, %v394
      %v427 = vpack.c.b16 %v395, %v395
      %v428 = vpack.c.b16 %v396, %v396
      %v429 = vpack.c.b16 %v397, %v397
      %v430 = vpack.c.b16 %v398, %v398
      %v431 = vpack.c.b16 %v399, %v399
      %v432 = vpack.c.b16 %v400, %v400
      %v433 = vpack.c.b16 %v401, %v401
      %v434 = vpack.c.b16 %v402, %v402
      %v435 = vpack.c.b16 %v403, %v403
      %v436 = vpack.c.b16 %v404, %v404
      %v437 = vpack.c.b16 %v405, %v405
      %v438 = vpack.c.b16 %v406, %v406
      %v439 = vpack.c.b16 %v407, %v407
      %v440 = vpack.c.b16 %v408, %v408
      %v441 = vpack.c.b16 %v409, %v409
      %v442 = vpack.c.b16 %v410, %v410
      %v443 = vpack.c.b16 %v411, %v411
      %v444 = vpack.c.b16 %v412, %v412
      %v445 = vpack.c.b16 %v413, %v413
      %v446 = vpack.c.b16 %v414, %v414
      %v447 = vpack.c.b16 %v415, %v415
      %v448 = vpack.c.b16 %v416, %v416
      %v449 = vpack.c.b16 %v417, %v417
      %v450 = vpack.c.b16 %v418, %v418
      %v451 = vpack.c.b16 %v419, %v419
      %v452 = vpack.c.b16 %v420, %v420
      %485 = vst [vmem:[%s213] sm:$0xf] %v421
      %486 = vst [vmem:[%s213 + $0x4] sm:$0xf] %v422
      %487 = vst [vmem:[%s213 + $0x8] sm:$0xf] %v423
      %488 = vst [vmem:[%s213 + $0xc] sm:$0xf] %v424
      %489 = vst [vmem:[%s213 + $0x10] sm:$0xf] %v425
      %490 = vst [vmem:[%s213 + $0x14] sm:$0xf] %v426
      %491 = vst [vmem:[%s213 + $0x18] sm:$0xf] %v427
      %492 = vst [vmem:[%s213 + $0x1c] sm:$0xf] %v428
      %493 = vst [vmem:[%s213 + $0x20] sm:$0xf] %v429
      %494 = vst [vmem:[%s213 + $0x24] sm:$0xf] %v430
      %495 = vst [vmem:[%s213 + $0x28] sm:$0xf] %v431
      %496 = vst [vmem:[%s213 + $0x2c] sm:$0xf] %v432
      %497 = vst [vmem:[%s213 + $0x30] sm:$0xf] %v433
      %498 = vst [vmem:[%s213 + $0x34] sm:$0xf] %v434
      %499 = vst [vmem:[%s213 + $0x38] sm:$0xf] %v435
      %500 = vst [vmem:[%s213 + $0x3c] sm:$0xf] %v436
      %501 = vst [vmem:[%s213 + $0x40] sm:$0xf] %v437
      %502 = vst [vmem:[%s213 + $0x44] sm:$0xf] %v438
      %503 = vst [vmem:[%s213 + $0x48] sm:$0xf] %v439
      %504 = vst [vmem:[%s213 + $0x4c] sm:$0xf] %v440
      %505 = vst [vmem:[%s213 + $0x50] sm:$0xf] %v441
      %506 = vst [vmem:[%s213 + $0x54] sm:$0xf] %v442
      %507 = vst [vmem:[%s213 + $0x58] sm:$0xf] %v443
      %508 = vst [vmem:[%s213 + $0x5c] sm:$0xf] %v444
      %509 = vst [vmem:[%s213 + $0x60] sm:$0xf] %v445
      %510 = vst [vmem:[%s213 + $0x64] sm:$0xf] %v446
      %511 = vst [vmem:[%s213 + $0x68] sm:$0xf] %v447
      %512 = vst [vmem:[%s213 + $0x6c] sm:$0xf] %v448
      %513 = vst [vmem:[%s213 + $0x70] sm:$0xf] %v449
      %514 = vst [vmem:[%s213 + $0x74] sm:$0xf] %v450
      %515 = vst [vmem:[%s213 + $0x78] sm:$0xf] %v451
      %516 = vst [vmem:[%s213 + $0x7c] sm:$0xf] %v452
      %s517 = smul.u32 16, %s19
      %p518 = scmp.lt.s32.totalorder %s18, 1
      %s519 = scalar_select %p518, %s18, 1
      %p520 = scmp.lt.s32.totalorder %s517, 15
      %s521 = scalar_select %p520, %s517, 15
      %s522 = smul.addr %s521, 2
      %s523 = smul.addr %s519, 32
      %s524 = sadd.s32 %s522, %s523
      %s525 = smul.addr %s524, 4
      %s526 = scalar_lea.vmem %s3, %s525
      // Predicated region
      $region33: #{double_conv_pallas.5} parent=31 // pred_check
        %p527 = pneg %p116
      $region34: #{double_conv_pallas.5} parent=31 // pred_check_branch
        %529 = sbr.rel (%p527) target = $region36
      $region35: #{double_conv_pallas.5} parent=31 // pred_region
        %s530 = smul.u32 16, %s19
      $region36: #{double_conv_pallas.5} parent=31 // pred_fallthru
        _
    $region32: #{double_conv_pallas.5} parent=5 // pred_fallthru
      _
    %p531 = scmp.le.s32.totalorder 2, %s9
    // Predicated region
    $region37: #{double_conv_pallas.5} parent=5 // pred_check
      %p532 = pneg %p531
    $region38: #{double_conv_pallas.5} parent=5 // pred_check_branch
      %534 = sbr.rel (%p532) target = $region40
    $region39: #{double_conv_pallas.5} parent=5 // pred_region
      %s535 = ssub.s32 %s9, 2
      // Predicated region
      $region41: #{double_conv_pallas.5} parent=39 // pred_check
        %p536 = pneg %p122
      $region42: #{double_conv_pallas.5} parent=39 // pred_check_branch
        %538 = sbr.rel (%p536) target = $region44
      $region43: #{double_conv_pallas.5} parent=39 // pred_region
        %s539 = smul.u32 16, %s21
        %p540 = scmp.lt.s32.totalorder %s20, 1
        %s541 = scalar_select %p540, %s20, 1
        %p542 = scmp.lt.s32.totalorder %s539, 15
        %s543 = scalar_select %p542, %s539, 15
        %s544 = smul.addr %s543, 2
        %s545 = smul.addr %s541, 32
        %s546 = sadd.s32 %s544, %s545
        %s547 = smul.addr %s546, 4
        %s548 = scalar_lea.vmem %s3, %s547
      $region44: #{double_conv_pallas.5} parent=39 // pred_fallthru
        _
    $region40: #{double_conv_pallas.5} parent=5 // pred_fallthru
      _
  $region6: #{double_conv_pallas.5} parent=0 // loop_footer
    %s13 = sadd.s32 1, %s9
  $region7: #{double_conv_pallas.5} parent=0 // loop_footer_branch
    %8 = sbr.rel target = $region3
  $region8: #{double_conv_pallas.5} parent=0 // loop_exit
    _

// kernel: double_conv_pallas.7
$region0: #{double_conv_pallas.7}
  #allocation0 [shape = 'u32[]', space=smem, size = 0x4, offset = 0x4, fixed_abs, tag = 'smem constant byte address 0x4 - core index']
  #allocation1 [shape = 'u32[144,128]{1,0:T(1,128)}', space=vmem, size = 0x12000, scoped, tag = 'internal scratch']
  %s0 = inlined_call_operand.vmem [shape: f32[1,128], index: 0, kind: input, shape index: {}]
  %s1 = inlined_call_operand.vmem [shape: f32[1,128], index: 1, kind: input, shape index: {}]
  %s2 = inlined_call_operand.vmem [shape: f32[2,16,16,128], index: 2, kind: input, shape index: {}]
  %s3 = inlined_call_operand.vmem [shape: f32[2,16,16,128], index: 3, kind: output, shape index: {}]
  %s4 = sld [smem:[#allocation0]]
  $region45: #{double_conv_pallas.7} parent=0
    _
  %s6 = ssub.s32 1, %s4
  %s7 = scalar_select 0, %s6, %s4
  loop: start=0, step=1, limit=4
  $region2: #{double_conv_pallas.7} parent=0 // loop_pre_header
    _
  $region3: #{double_conv_pallas.7} parent=0 // loop_header
    %s9 = sphi 0, %s13
    %p10 = scmp.ge.s32.totalorder %s9, 4
    %s16 = sphi 0, %s28
    %s17 = sphi 0, %s24
    %s18 = sphi 0, %s16
    %s19 = sphi 0, %s17
    %s20 = sphi 0, %s18
    %s21 = sphi 0, %s19
    %s29 = sphi 0, %s29
    %s31 = sphi 0, %s29
    %s32 = sphi 0, %s31
    %s46 = sphi 0, %s32
    %s50 = sphi 0, %s50
    %s52 = sphi 0, %s50
    %s53 = sphi 0, %s52
    %s67 = sphi 0, %s53
    %s75 = sphi 0, %s77
    %s78 = sphi 0, %s75
    %s79 = sphi 0, %s78
    %s95 = sphi 0, %s79
    %s103 = sphi 0, %s105
    %s106 = sphi 0, %s103
    %s107 = sphi 0, %s106
    %s123 = sphi 0, %s107
  $region4: #{double_conv_pallas.7} parent=0 // loop_header_branch
    %12 = sbr.rel (%p10) target = $region8
  $region5: #{double_conv_pallas.7} parent=0 // loop_body
    %s14 = ssub.s32 %s9, 1
    %s15 = ssub.s32 %s9, 2
    %s22 = sadd.s32 1, %s17
    %p23 = scmp.ge.s32.totalorder %s22, 1
    %s24 = scalar_select %p23, 0, %s22
    %s25 = sadd.s32 1, %s16
    %s26 = scalar_select %p23, %s25, %s16
    %p27 = scmp.ge.s32.totalorder %s26, 2
    %s28 = scalar_select %p27, 0, %s26
    %s30 = sadd.s32 %s29, 1
    %p33 = scmp.eq.s32.totalorder %s9, 1
    %p34 = scmp.ne.s32.totalorder %s29, %s31
    %p35 = scmp.eq.s32.totalorder %s9, 0
    %p36 = por %p34, %p35
    %p37 = scmp.ne.s32.totalorder %s29, %s31
    %p38 = scmp.eq.s32.totalorder %s14, 1
    %p39 = por %p37, %p38
    %p40 = scmp.ne.s32.totalorder %s31, %s32
    %p41 = scmp.eq.s32.totalorder %s14, 0
    %p42 = por %p40, %p41
    %p43 = scmp.ne.s32.totalorder %s31, %s32
    %p44 = scmp.eq.s32.totalorder %s15, 1
    %p45 = por %p43, %p44
    %p47 = scmp.ne.s32.totalorder %s32, %s46
    %p48 = scmp.eq.s32.totalorder %s15, 0
    %p49 = por %p47, %p48
    %s51 = sadd.s32 %s50, 1
    %p54 = scmp.eq.s32.totalorder %s9, 1
    %p55 = scmp.ne.s32.totalorder %s50, %s52
    %p56 = scmp.eq.s32.totalorder %s9, 0
    %p57 = por %p55, %p56
    %p58 = scmp.ne.s32.totalorder %s50, %s52
    %p59 = scmp.eq.s32.totalorder %s14, 1
    %p60 = por %p58, %p59
    %p61 = scmp.ne.s32.totalorder %s52, %s53
    %p62 = scmp.eq.s32.totalorder %s14, 0
    %p63 = por %p61, %p62
    %p64 = scmp.ne.s32.totalorder %s52, %s53
    %p65 = scmp.eq.s32.totalorder %s15, 1
    %p66 = por %p64, %p65
    %p68 = scmp.ne.s32.totalorder %s53, %s67
    %p69 = scmp.eq.s32.totalorder %s15, 0
    %p70 = por %p68, %p69
    %s71 = ssub.s32 %s16, %s28
    %s72 = ssub.s32 %s17, %s24
    %s73 = sor.u32 %s71, %s72
    %p74 = scmp.eq.s32.totalorder %s73, 0
    %s76 = sadd.s32 %s75, 1
    %s77 = scalar_select %p74, %s75, %s76
    %p80 = pneg %p74
    %p81 = scmp.eq.s32.totalorder %s9, 1
    %p82 = por %p80, %p81
    %p83 = scmp.ne.s32.totalorder %s75, %s78
    %p84 = scmp.eq.s32.totalorder %s9, 0
    %p85 = por %p83, %p84
    %p86 = scmp.ne.s32.totalorder %s75, %s78
    %p87 = scmp.eq.s32.totalorder %s14, 1
    %p88 = por %p86, %p87
    %p89 = scmp.ne.s32.totalorder %s78, %s79
    %p90 = scmp.eq.s32.totalorder %s14, 0
    %p91 = por %p89, %p90
    %p92 = scmp.ne.s32.totalorder %s78, %s79
    %p93 = scmp.eq.s32.totalorder %s15, 1
    %p94 = por %p92, %p93
    %p96 = scmp.ne.s32.totalorder %s79, %s95
    %p97 = scmp.eq.s32.totalorder %s15, 0
    %p98 = por %p96, %p97
    %s99 = ssub.s32 %s16, %s28
    %s100 = ssub.s32 %s17, %s24
    %s101 = sor.u32 %s99, %s100
    %p102 = scmp.eq.s32.totalorder %s101, 0
    %s104 = sadd.s32 %s103, 1
    %s105 = scalar_select %p102, %s103, %s104
    %p108 = pneg %p102
    %p109 = scmp.eq.s32.totalorder %s9, 1
    %p110 = por %p108, %p109
    %p111 = scmp.ne.s32.totalorder %s103, %s106
    %p112 = scmp.eq.s32.totalorder %s9, 0
    %p113 = por %p111, %p112
    %p114 = scmp.ne.s32.totalorder %s103, %s106
    %p115 = scmp.eq.s32.totalorder %s14, 1
    %p116 = por %p114, %p115
    %p117 = scmp.ne.s32.totalorder %s106, %s107
    %p118 = scmp.eq.s32.totalorder %s14, 0
    %p119 = por %p117, %p118
    %p120 = scmp.ne.s32.totalorder %s106, %s107
    %p121 = scmp.eq.s32.totalorder %s15, 1
    %p122 = por %p120, %p121
    %p124 = scmp.ne.s32.totalorder %s107, %s123
    %p125 = scmp.eq.s32.totalorder %s15, 0
    %p126 = por %p124, %p125
    %p127 = scmp.le.s32.totalorder 1, %s9
    %p128 = scmp.lt.s32.totalorder %s9, 3
    %p129 = pnand %p127, %p128
    %p130 = pneg %p129
    // Predicated region
    $region9: #{double_conv_pallas.7} parent=5 // pred_check
      _
    $region10: #{double_conv_pallas.7} parent=5 // pred_check_branch
      %132 = sbr.rel (%p129) target = $region12
    $region11: #{double_conv_pallas.7} parent=5 // pred_region
      %s133 = ssub.s32 %s9, 1
      // Predicated region
      $region13: #{double_conv_pallas.7} parent=11 // pred_check
        %p134 = pneg %p42
      $region14: #{double_conv_pallas.7} parent=11 // pred_check_branch
        %136 = sbr.rel (%p134) target = $region16
      $region15: #{double_conv_pallas.7} parent=11 // pred_region
        _
      $region16: #{double_conv_pallas.7} parent=11 // pred_fallthru
        _
      // Predicated region
      $region17: #{double_conv_pallas.7} parent=11 // pred_check
        %p137 = pneg %p63
      $region18: #{double_conv_pallas.7} parent=11 // pred_check_branch
        %139 = sbr.rel (%p137) target = $region20
      $region19: #{double_conv_pallas.7} parent=11 // pred_region
        _
      $region20: #{double_conv_pallas.7} parent=11 // pred_fallthru
        _
    $region12: #{double_conv_pallas.7} parent=5 // pred_fallthru
      _
    %p140 = scmp.lt.s32.totalorder %s9, 2
    // Predicated region
    $region21: #{double_conv_pallas.7} parent=5 // pred_check
      %p141 = pneg %p140
    $region22: #{double_conv_pallas.7} parent=5 // pred_check_branch
      %143 = sbr.rel (%p141) target = $region24
    $region23: #{double_conv_pallas.7} parent=5 // pred_region
      // Predicated region
      $region25: #{double_conv_pallas.7} parent=23 // pred_check
        %p144 = pneg %p85
      $region26: #{double_conv_pallas.7} parent=23 // pred_check_branch
        %146 = sbr.rel (%p144) target = $region28
      $region27: #{double_conv_pallas.7} parent=23 // pred_region
        %s147 = smul.u32 16, %s17
        %p148 = scmp.lt.s32.totalorder %s16, 1
        %s149 = scalar_select %p148, %s16, 1
        %p150 = scmp.lt.s32.totalorder %s147, 15
        %s151 = scalar_select %p150, %s147, 15
        %s152 = smul.addr %s151, 2
        %s153 = smul.addr %s149, 32
        %s154 = sadd.s32 %s152, %s153
        %s155 = smul.addr %s154, 8
        %s156 = scalar_lea.vmem %s2, %s155
        %s157 = smul.u32 16, %s17
      $region28: #{double_conv_pallas.7} parent=23 // pred_fallthru
        _
    $region24: #{double_conv_pallas.7} parent=5 // pred_fallthru
      _
    %p158 = scmp.le.s32.totalorder 1, %s9
    %p159 = scmp.lt.s32.totalorder %s9, 3
    %p160 = pnand %p158, %p159
    %p161 = pneg %p160
    // Predicated region
    $region29: #{double_conv_pallas.7} parent=5 // pred_check
      _
    $region30: #{double_conv_pallas.7} parent=5 // pred_check_branch
      %163 = sbr.rel (%p160) target = $region32
    $region31: #{double_conv_pallas.7} parent=5 // pred_region
      %s164 = ssub.s32 %s9, 1
      %p165 = pneg %p42
      %p166 = pneg %p39
      %p167 = pneg %p63
      %p168 = pneg %p60
      %s169 = smul.u32 16, %s19
      %p170 = scmp.lt.s32.totalorder %s18, 1
      %s171 = scalar_select %p170, %s18, 1
      %p172 = scmp.lt.s32.totalorder %s169, 15
      %s173 = scalar_select %p172, %s169, 15
      %s174 = smul.addr %s173, 2
      %s175 = smul.addr %s171, 32
      %s176 = sadd.s32 %s174, %s175
      %s177 = smul.addr %s176, 8
      %s178 = scalar_lea.vmem %s2, %s177
      %p179 = pneg %p91
      %p180 = pneg %p88
      %p181 = pneg %p119
      %p182 = pneg %p116
      %s183 = smul.u32 16, %s19
      %p184 = scmp.lt.s32.totalorder %s18, 1
      %s185 = scalar_select %p184, %s18, 1
      %p186 = scmp.lt.s32.totalorder %s183, 15
      %s187 = scalar_select %p186, %s183, 15
      %s188 = smul.addr %s187, 2
      %s189 = smul.addr %s185, 32
      %s190 = sadd.s32 %s188, %s189
      %s191 = smul.addr %s190, 8
      %s192 = scalar_lea.vmem %s3, %s191
      %s193 = smul.u32 16, %s19
      %p194 = scmp.lt.s32.totalorder %s18, 1
      %s195 = scalar_select %p194, %s18, 1
      %p196 = scmp.lt.s32.totalorder %s193, 15
      %s197 = scalar_select %p196, %s193, 15
      %s198 = smul.addr %s197, 2
      %s199 = smul.addr %s195, 32
      %s200 = sadd.s32 %s198, %s199
      %s201 = smul.addr %s200, 8
      %s202 = scalar_lea.vmem %s2, %s201
      %s203 = smul.u32 16, %s19
      %s204 = smul.u32 16, %s19
      %p205 = scmp.lt.s32.totalorder %s18, 1
      %s206 = scalar_select %p205, %s18, 1
      %p207 = scmp.lt.s32.totalorder %s204, 15
      %s208 = scalar_select %p207, %s204, 15
      %s209 = smul.addr %s208, 2
      %s210 = smul.addr %s206, 32
      %s211 = sadd.s32 %s209, %s210
      %s212 = smul.addr %s211, 8
      %s213 = scalar_lea.vmem %s3, %s212
      %s214 = smul.u32 16, %s19
      %v215 = vld [vmem:[%s202] sm:$0xff]
      %v216 = vld [vmem:[%s202 + $0x8] sm:$0xff]
      %v217 = vld [vmem:[%s202 + $0x10] sm:$0xff]
      %v218 = vld [vmem:[%s202 + $0x18] sm:$0xff]
      %v219 = vld [vmem:[%s202 + $0x20] sm:$0xff]
      %v220 = vld [vmem:[%s202 + $0x28] sm:$0xff]
      %v221 = vld [vmem:[%s202 + $0x30] sm:$0xff]
      %v222 = vld [vmem:[%s202 + $0x38] sm:$0xff]
      %v223 = vld [vmem:[%s202 + $0x40] sm:$0xff]
      %v224 = vld [vmem:[%s202 + $0x48] sm:$0xff]
      %v225 = vld [vmem:[%s202 + $0x50] sm:$0xff]
      %v226 = vld [vmem:[%s202 + $0x58] sm:$0xff]
      %v227 = vld [vmem:[%s202 + $0x60] sm:$0xff]
      %v228 = vld [vmem:[%s202 + $0x68] sm:$0xff]
      %v229 = vld [vmem:[%s202 + $0x70] sm:$0xff]
      %v230 = vld [vmem:[%s202 + $0x78] sm:$0xff]
      %v231 = vld [vmem:[%s202 + $0x80] sm:$0xff]
      %v232 = vld [vmem:[%s202 + $0x88] sm:$0xff]
      %v233 = vld [vmem:[%s202 + $0x90] sm:$0xff]
      %v234 = vld [vmem:[%s202 + $0x98] sm:$0xff]
      %v235 = vld [vmem:[%s202 + $0xa0] sm:$0xff]
      %v236 = vld [vmem:[%s202 + $0xa8] sm:$0xff]
      %v237 = vld [vmem:[%s202 + $0xb0] sm:$0xff]
      %v238 = vld [vmem:[%s202 + $0xb8] sm:$0xff]
      %v239 = vld [vmem:[%s202 + $0xc0] sm:$0xff]
      %v240 = vld [vmem:[%s202 + $0xc8] sm:$0xff]
      %v241 = vld [vmem:[%s202 + $0xd0] sm:$0xff]
      %v242 = vld [vmem:[%s202 + $0xd8] sm:$0xff]
      %v243 = vld [vmem:[%s202 + $0xe0] sm:$0xff]
      %v244 = vld [vmem:[%s202 + $0xe8] sm:$0xff]
      %v245 = vld [vmem:[%s202 + $0xf0] sm:$0xff]
      %v246 = vld [vmem:[%s202 + $0xf8] sm:$0xff]
      %v247 = vld [vmem:[%s0] sm:$0x1]
      %v249 = vlaneseq
      %v250 = vshrl.u32 %v249, 7
      %v251 = vsub.s32 0, %v250
      %v252 = vrot.slane %v247, %v251
      %v254 = vmul.f32 %v215, %v252
      %v255 = vmul.f32 %v216, %v252
      %v256 = vmul.f32 %v217, %v252
      %v257 = vmul.f32 %v218, %v252
      %v258 = vmul.f32 %v219, %v252
      %v259 = vmul.f32 %v220, %v252
      %v260 = vmul.f32 %v221, %v252
      %v261 = vmul.f32 %v222, %v252
      %v262 = vmul.f32 %v223, %v252
      %v263 = vmul.f32 %v224, %v252
      %v264 = vmul.f32 %v225, %v252
      %v265 = vmul.f32 %v226, %v252
      %v266 = vmul.f32 %v227, %v252
      %v267 = vmul.f32 %v228, %v252
      %v268 = vmul.f32 %v229, %v252
      %v269 = vmul.f32 %v230, %v252
      %v270 = vmul.f32 %v231, %v252
      %v271 = vmul.f32 %v232, %v252
      %v272 = vmul.f32 %v233, %v252
      %v273 = vmul.f32 %v234, %v252
      %v274 = vmul.f32 %v235, %v252
      %v275 = vmul.f32 %v236, %v252
      %v276 = vmul.f32 %v237, %v252
      %v277 = vmul.f32 %v238, %v252
      %v278 = vmul.f32 %v239, %v252
      %v279 = vmul.f32 %v240, %v252
      %v280 = vmul.f32 %v241, %v252
      %v281 = vmul.f32 %v242, %v252
      %v282 = vmul.f32 %v243, %v252
      %v283 = vmul.f32 %v244, %v252
      %v284 = vmul.f32 %v245, %v252
      %v285 = vmul.f32 %v246, %v252
      %v286 = vld [vmem:[%s1] sm:$0x1]
      %v288 = vlaneseq
      %v289 = vshrl.u32 %v288, 7
      %v290 = vsub.s32 0, %v289
      %v291 = vrot.slane %v286, %v290
      %v293 = vadd.f32 %v254, %v291
      %v294 = vadd.f32 %v255, %v291
      %v295 = vadd.f32 %v256, %v291
      %v296 = vadd.f32 %v257, %v291
      %v297 = vadd.f32 %v258, %v291
      %v298 = vadd.f32 %v259, %v291
      %v299 = vadd.f32 %v260, %v291
      %v300 = vadd.f32 %v261, %v291
      %v301 = vadd.f32 %v262, %v291
      %v302 = vadd.f32 %v263, %v291
      %v303 = vadd.f32 %v264, %v291
      %v304 = vadd.f32 %v265, %v291
      %v305 = vadd.f32 %v266, %v291
      %v306 = vadd.f32 %v267, %v291
      %v307 = vadd.f32 %v268, %v291
      %v308 = vadd.f32 %v269, %v291
      %v309 = vadd.f32 %v270, %v291
      %v310 = vadd.f32 %v271, %v291
      %v311 = vadd.f32 %v272, %v291
      %v312 = vadd.f32 %v273, %v291
      %v313 = vadd.f32 %v274, %v291
      %v314 = vadd.f32 %v275, %v291
      %v315 = vadd.f32 %v276, %v291
      %v316 = vadd.f32 %v277, %v291
      %v317 = vadd.f32 %v278, %v291
      %v318 = vadd.f32 %v279, %v291
      %v319 = vadd.f32 %v280, %v291
      %v320 = vadd.f32 %v281, %v291
      %v321 = vadd.f32 %v282, %v291
      %v322 = vadd.f32 %v283, %v291
      %v323 = vadd.f32 %v284, %v291
      %v324 = vadd.f32 %v285, %v291
      %v325 = vmax.f32 %v293, 0.0
      %v326 = vmax.f32 %v294, 0.0
      %v327 = vmax.f32 %v295, 0.0
      %v328 = vmax.f32 %v296, 0.0
      %v329 = vmax.f32 %v297, 0.0
      %v330 = vmax.f32 %v298, 0.0
      %v331 = vmax.f32 %v299, 0.0
      %v332 = vmax.f32 %v300, 0.0
      %v333 = vmax.f32 %v301, 0.0
      %v334 = vmax.f32 %v302, 0.0
      %v335 = vmax.f32 %v303, 0.0
      %v336 = vmax.f32 %v304, 0.0
      %v337 = vmax.f32 %v305, 0.0
      %v338 = vmax.f32 %v306, 0.0
      %v339 = vmax.f32 %v307, 0.0
      %v340 = vmax.f32 %v308, 0.0
      %v341 = vmax.f32 %v309, 0.0
      %v342 = vmax.f32 %v310, 0.0
      %v343 = vmax.f32 %v311, 0.0
      %v344 = vmax.f32 %v312, 0.0
      %v345 = vmax.f32 %v313, 0.0
      %v346 = vmax.f32 %v314, 0.0
      %v347 = vmax.f32 %v315, 0.0
      %v348 = vmax.f32 %v316, 0.0
      %v349 = vmax.f32 %v317, 0.0
      %v350 = vmax.f32 %v318, 0.0
      %v351 = vmax.f32 %v319, 0.0
      %v352 = vmax.f32 %v320, 0.0
      %v353 = vmax.f32 %v321, 0.0
      %v354 = vmax.f32 %v322, 0.0
      %v355 = vmax.f32 %v323, 0.0
      %v356 = vmax.f32 %v324, 0.0
      %357 = vst [vmem:[%s213] sm:$0xff] %v325
      %358 = vst [vmem:[%s213 + $0x8] sm:$0xff] %v326
      %359 = vst [vmem:[%s213 + $0x10] sm:$0xff] %v327
      %360 = vst [vmem:[%s213 + $0x18] sm:$0xff] %v328
      %361 = vst [vmem:[%s213 + $0x20] sm:$0xff] %v329
      %362 = vst [vmem:[%s213 + $0x28] sm:$0xff] %v330
      %363 = vst [vmem:[%s213 + $0x30] sm:$0xff] %v331
      %364 = vst [vmem:[%s213 + $0x38] sm:$0xff] %v332
      %365 = vst [vmem:[%s213 + $0x40] sm:$0xff] %v333
      %366 = vst [vmem:[%s213 + $0x48] sm:$0xff] %v334
      %367 = vst [vmem:[%s213 + $0x50] sm:$0xff] %v335
      %368 = vst [vmem:[%s213 + $0x58] sm:$0xff] %v336
      %369 = vst [vmem:[%s213 + $0x60] sm:$0xff] %v337
      %370 = vst [vmem:[%s213 + $0x68] sm:$0xff] %v338
      %371 = vst [vmem:[%s213 + $0x70] sm:$0xff] %v339
      %372 = vst [vmem:[%s213 + $0x78] sm:$0xff] %v340
      %373 = vst [vmem:[%s213 + $0x80] sm:$0xff] %v341
      %374 = vst [vmem:[%s213 + $0x88] sm:$0xff] %v342
      %375 = vst [vmem:[%s213 + $0x90] sm:$0xff] %v343
      %376 = vst [vmem:[%s213 + $0x98] sm:$0xff] %v344
      %377 = vst [vmem:[%s213 + $0xa0] sm:$0xff] %v345
      %378 = vst [vmem:[%s213 + $0xa8] sm:$0xff] %v346
      %379 = vst [vmem:[%s213 + $0xb0] sm:$0xff] %v347
      %380 = vst [vmem:[%s213 + $0xb8] sm:$0xff] %v348
      %381 = vst [vmem:[%s213 + $0xc0] sm:$0xff] %v349
      %382 = vst [vmem:[%s213 + $0xc8] sm:$0xff] %v350
      %383 = vst [vmem:[%s213 + $0xd0] sm:$0xff] %v351
      %384 = vst [vmem:[%s213 + $0xd8] sm:$0xff] %v352
      %385 = vst [vmem:[%s213 + $0xe0] sm:$0xff] %v353
      %386 = vst [vmem:[%s213 + $0xe8] sm:$0xff] %v354
      %387 = vst [vmem:[%s213 + $0xf0] sm:$0xff] %v355
      %388 = vst [vmem:[%s213 + $0xf8] sm:$0xff] %v356
      %s389 = smul.u32 16, %s19
      %p390 = scmp.lt.s32.totalorder %s18, 1
      %s391 = scalar_select %p390, %s18, 1
      %p392 = scmp.lt.s32.totalorder %s389, 15
      %s393 = scalar_select %p392, %s389, 15
      %s394 = smul.addr %s393, 2
      %s395 = smul.addr %s391, 32
      %s396 = sadd.s32 %s394, %s395
      %s397 = smul.addr %s396, 8
      %s398 = scalar_lea.vmem %s3, %s397
      // Predicated region
      $region33: #{double_conv_pallas.7} parent=31 // pred_check
        %p399 = pneg %p116
      $region34: #{double_conv_pallas.7} parent=31 // pred_check_branch
        %401 = sbr.rel (%p399) target = $region36
      $region35: #{double_conv_pallas.7} parent=31 // pred_region
        %s402 = smul.u32 16, %s19
      $region36: #{double_conv_pallas.7} parent=31 // pred_fallthru
        _
    $region32: #{double_conv_pallas.7} parent=5 // pred_fallthru
      _
    %p403 = scmp.le.s32.totalorder 2, %s9
    // Predicated region
    $region37: #{double_conv_pallas.7} parent=5 // pred_check
      %p404 = pneg %p403
    $region38: #{double_conv_pallas.7} parent=5 // pred_check_branch
      %406 = sbr.rel (%p404) target = $region40
    $region39: #{double_conv_pallas.7} parent=5 // pred_region
      %s407 = ssub.s32 %s9, 2
      // Predicated region
      $region41: #{double_conv_pallas.7} parent=39 // pred_check
        %p408 = pneg %p122
      $region42: #{double_conv_pallas.7} parent=39 // pred_check_branch
        %410 = sbr.rel (%p408) target = $region44
      $region43: #{double_conv_pallas.7} parent=39 // pred_region
        %s411 = smul.u32 16, %s21
        %p412 = scmp.lt.s32.totalorder %s20, 1
        %s413 = scalar_select %p412, %s20, 1
        %p414 = scmp.lt.s32.totalorder %s411, 15
        %s415 = scalar_select %p414, %s411, 15
        %s416 = smul.addr %s415, 2
        %s417 = smul.addr %s413, 32
        %s418 = sadd.s32 %s416, %s417
        %s419 = smul.addr %s418, 8
        %s420 = scalar_lea.vmem %s3, %s419
      $region44: #{double_conv_pallas.7} parent=39 // pred_fallthru
        _
    $region40: #{double_conv_pallas.7} parent=5 // pred_fallthru
      _
  $region6: #{double_conv_pallas.7} parent=0 // loop_footer
    %s13 = sadd.s32 1, %s9
  $region7: #{double_conv_pallas.7} parent=0 // loop_footer_branch
    %8 = sbr.rel target = $region3
  $region8: #{double_conv_pallas.7} parent=0 // loop_exit
    _

// kernel: double_conv_pallas.4
$region0: #{double_conv_pallas.4}
  #allocation0 [shape = 'u32[]', space=smem, size = 0x4, offset = 0x4, fixed_abs, tag = 'smem constant byte address 0x4 - core index']
  #allocation1 [shape = 'u32[144,128]{1,0:T(1,128)}', space=vmem, size = 0x12000, scoped, tag = 'internal scratch']
  %s0 = inlined_call_operand.vmem [shape: bf16[2,1,18,18,128], index: 0, kind: input, shape index: {}]
  %s1 = inlined_call_operand.vmem [shape: bf16[3,3,128,128], index: 1, kind: input, shape index: {}]
  %s2 = inlined_call_operand.vmem [shape: f32[2,16,16,128], index: 2, kind: output, shape index: {0}]
  %s3 = inlined_call_operand.vmem [shape: f32[2,1,2,128], index: 3, kind: output, shape index: {1}]
  %4 = xla_tuple %s2, %s3
  %s5 = sld [smem:[#allocation0]]
  $region49: #{double_conv_pallas.4} parent=0
    _
  %s7 = ssub.s32 1, %s5
  %s8 = scalar_select 0, %s7, %s5
  loop: start=0, step=1, limit=4
  $region2: #{double_conv_pallas.4} parent=0 // loop_pre_header
    _
  $region3: #{double_conv_pallas.4} parent=0 // loop_header
    %s10 = sphi 0, %s14
    %p11 = scmp.ge.s32.totalorder %s10, 4
    %s17 = sphi 0, %s29
    %s18 = sphi 0, %s25
    %s19 = sphi 0, %s17
    %s20 = sphi 0, %s18
    %s21 = sphi 0, %s19
    %s22 = sphi 0, %s20
    %s34 = sphi 0, %s36
    %s37 = sphi 0, %s34
    %s38 = sphi 0, %s37
    %s54 = sphi 0, %s38
    %s58 = sphi 0, %s58
    %s60 = sphi 0, %s58
    %s61 = sphi 0, %s60
    %s75 = sphi 0, %s61
    %s83 = sphi 0, %s85
    %s86 = sphi 0, %s83
    %s87 = sphi 0, %s86
    %s103 = sphi 0, %s87
    %s111 = sphi 0, %s113
    %s114 = sphi 0, %s111
    %s115 = sphi 0, %s114
    %s131 = sphi 0, %s115
  $region4: #{double_conv_pallas.4} parent=0 // loop_header_branch
    %13 = sbr.rel (%p11) target = $region8
  $region5: #{double_conv_pallas.4} parent=0 // loop_body
    %s15 = ssub.s32 %s10, 1
    %s16 = ssub.s32 %s10, 2
    %s23 = sadd.s32 1, %s18
    %p24 = scmp.ge.s32.totalorder %s23, 1
    %s25 = scalar_select %p24, 0, %s23
    %s26 = sadd.s32 1, %s17
    %s27 = scalar_select %p24, %s26, %s17
    %p28 = scmp.ge.s32.totalorder %s27, 2
    %s29 = scalar_select %p28, 0, %s27
    %s30 = ssub.s32 %s17, %s29
    %s31 = ssub.s32 %s18, %s25
    %s32 = sor.u32 %s30, %s31
    %p33 = scmp.eq.s32.totalorder %s32, 0
    %s35 = sadd.s32 %s34, 1
    %s36 = scalar_select %p33, %s34, %s35
    %p39 = pneg %p33
    %p40 = scmp.eq.s32.totalorder %s10, 1
    %p41 = por %p39, %p40
    %p42 = scmp.ne.s32.totalorder %s34, %s37
    %p43 = scmp.eq.s32.totalorder %s10, 0
    %p44 = por %p42, %p43
    %p45 = scmp.ne.s32.totalorder %s34, %s37
    %p46 = scmp.eq.s32.totalorder %s15, 1
    %p47 = por %p45, %p46
    %p48 = scmp.ne.s32.totalorder %s37, %s38
    %p49 = scmp.eq.s32.totalorder %s15, 0
    %p50 = por %p48, %p49
    %p51 = scmp.ne.s32.totalorder %s37, %s38
    %p52 = scmp.eq.s32.totalorder %s16, 1
    %p53 = por %p51, %p52
    %p55 = scmp.ne.s32.totalorder %s38, %s54
    %p56 = scmp.eq.s32.totalorder %s16, 0
    %p57 = por %p55, %p56
    %s59 = sadd.s32 %s58, 1
    %p62 = scmp.eq.s32.totalorder %s10, 1
    %p63 = scmp.ne.s32.totalorder %s58, %s60
    %p64 = scmp.eq.s32.totalorder %s10, 0
    %p65 = por %p63, %p64
    %p66 = scmp.ne.s32.totalorder %s58, %s60
    %p67 = scmp.eq.s32.totalorder %s15, 1
    %p68 = por %p66, %p67
    %p69 = scmp.ne.s32.totalorder %s60, %s61
    %p70 = scmp.eq.s32.totalorder %s15, 0
    %p71 = por %p69, %p70
    %p72 = scmp.ne.s32.totalorder %s60, %s61
    %p73 = scmp.eq.s32.totalorder %s16, 1
    %p74 = por %p72, %p73
    %p76 = scmp.ne.s32.totalorder %s61, %s75
    %p77 = scmp.eq.s32.totalorder %s16, 0
    %p78 = por %p76, %p77
    %s79 = ssub.s32 %s17, %s29
    %s80 = ssub.s32 %s18, %s25
    %s81 = sor.u32 %s79, %s80
    %p82 = scmp.eq.s32.totalorder %s81, 0
    %s84 = sadd.s32 %s83, 1
    %s85 = scalar_select %p82, %s83, %s84
    %p88 = pneg %p82
    %p89 = scmp.eq.s32.totalorder %s10, 1
    %p90 = por %p88, %p89
    %p91 = scmp.ne.s32.totalorder %s83, %s86
    %p92 = scmp.eq.s32.totalorder %s10, 0
    %p93 = por %p91, %p92
    %p94 = scmp.ne.s32.totalorder %s83, %s86
    %p95 = scmp.eq.s32.totalorder %s15, 1
    %p96 = por %p94, %p95
    %p97 = scmp.ne.s32.totalorder %s86, %s87
    %p98 = scmp.eq.s32.totalorder %s15, 0
    %p99 = por %p97, %p98
    %p100 = scmp.ne.s32.totalorder %s86, %s87
    %p101 = scmp.eq.s32.totalorder %s16, 1
    %p102 = por %p100, %p101
    %p104 = scmp.ne.s32.totalorder %s87, %s103
    %p105 = scmp.eq.s32.totalorder %s16, 0
    %p106 = por %p104, %p105
    %s107 = ssub.s32 %s17, %s29
    %s108 = ssub.s32 %s18, %s25
    %s109 = sor.u32 %s107, %s108
    %p110 = scmp.eq.s32.totalorder %s109, 0
    %s112 = sadd.s32 %s111, 1
    %s113 = scalar_select %p110, %s111, %s112
    %p116 = pneg %p110
    %p117 = scmp.eq.s32.totalorder %s10, 1
    %p118 = por %p116, %p117
    %p119 = scmp.ne.s32.totalorder %s111, %s114
    %p120 = scmp.eq.s32.totalorder %s10, 0
    %p121 = por %p119, %p120
    %p122 = scmp.ne.s32.totalorder %s111, %s114
    %p123 = scmp.eq.s32.totalorder %s15, 1
    %p124 = por %p122, %p123
    %p125 = scmp.ne.s32.totalorder %s114, %s115
    %p126 = scmp.eq.s32.totalorder %s15, 0
    %p127 = por %p125, %p126
    %p128 = scmp.ne.s32.totalorder %s114, %s115
    %p129 = scmp.eq.s32.totalorder %s16, 1
    %p130 = por %p128, %p129
    %p132 = scmp.ne.s32.totalorder %s115, %s131
    %p133 = scmp.eq.s32.totalorder %s16, 0
    %p134 = por %p132, %p133
    %p135 = scmp.le.s32.totalorder 1, %s10
    %p136 = scmp.lt.s32.totalorder %s10, 3
    %p137 = pnand %p135, %p136
    %p138 = pneg %p137
    // Predicated region
    $region9: #{double_conv_pallas.4} parent=5 // pred_check
      _
    $region10: #{double_conv_pallas.4} parent=5 // pred_check_branch
      %140 = sbr.rel (%p137) target = $region12
    $region11: #{double_conv_pallas.4} parent=5 // pred_region
      %s141 = ssub.s32 %s10, 1
      // Predicated region
      $region13: #{double_conv_pallas.4} parent=11 // pred_check
        %p142 = pneg %p71
      $region14: #{double_conv_pallas.4} parent=11 // pred_check_branch
        %144 = sbr.rel (%p142) target = $region16
      $region15: #{double_conv_pallas.4} parent=11 // pred_region
        _
      $region16: #{double_conv_pallas.4} parent=11 // pred_fallthru
        _
    $region12: #{double_conv_pallas.4} parent=5 // pred_fallthru
      _
    %p145 = scmp.lt.s32.totalorder %s10, 2
    // Predicated region
    $region17: #{double_conv_pallas.4} parent=5 // pred_check
      %p146 = pneg %p145
    $region18: #{double_conv_pallas.4} parent=5 // pred_check_branch
      %148 = sbr.rel (%p146) target = $region20
    $region19: #{double_conv_pallas.4} parent=5 // pred_region
      // Predicated region
      $region21: #{double_conv_pallas.4} parent=19 // pred_check
        %p149 = pneg %p44
      $region22: #{double_conv_pallas.4} parent=19 // pred_check_branch
        %151 = sbr.rel (%p149) target = $region24
      $region23: #{double_conv_pallas.4} parent=19 // pred_region
        %p152 = scmp.lt.s32.totalorder %s17, 1
        %s153 = scalar_select %p152, %s17, 1
        %p154 = scmp.lt.s32.totalorder %s18, 0
        %s155 = scalar_select %p154, %s18, 0
        %s156 = smul.addr %s155, 54
        %s157 = smul.addr %s153, 54
        %s158 = sadd.s32 %s156, %s157
        %s159 = smul.addr %s158, 4
        %s160 = scalar_lea.vmem %s0, %s159
      $region24: #{double_conv_pallas.4} parent=19 // pred_fallthru
        _
    $region20: #{double_conv_pallas.4} parent=5 // pred_fallthru
      _
    %p161 = scmp.le.s32.totalorder 1, %s10
    %p162 = scmp.lt.s32.totalorder %s10, 3
    %p163 = pnand %p161, %p162
    %p164 = pneg %p163
    // Predicated region
    $region25: #{double_conv_pallas.4} parent=5 // pred_check
      _
    $region26: #{double_conv_pallas.4} parent=5 // pred_check_branch
      %166 = sbr.rel (%p163) target = $region28
    $region27: #{double_conv_pallas.4} parent=5 // pred_region
      %s167 = ssub.s32 %s10, 1
      %p168 = scmp.lt.s32.totalorder %s19, 1
      %s169 = scalar_select %p168, %s19, 1
      %p170 = scmp.lt.s32.totalorder %s20, 0
      %s171 = scalar_select %p170, %s20, 0
      %s172 = smul.addr %s171, 54
      %s173 = smul.addr %s169, 54
      %s174 = sadd.s32 %s172, %s173
      %s175 = smul.addr %s174, 4
      %s176 = scalar_lea.vmem %s0, %s175
      %p177 = pneg %p50
      %p178 = pneg %p47
      %p179 = pneg %p71
      %p180 = pneg %p68
      %p181 = pneg %p99
      %p182 = pneg %p96
      %s183 = smul.u32 16, %s20
      %p184 = scmp.lt.s32.totalorder %s19, 1
      %s185 = scalar_select %p184, %s19, 1
      %p186 = scmp.lt.s32.totalorder %s183, 15
      %s187 = scalar_select %p186, %s183, 15
      %s188 = smul.addr %s187, 2
      %s189 = smul.addr %s185, 32
      %s190 = sadd.s32 %s188, %s189
      %s191 = smul.addr %s190, 8
      %s192 = scalar_lea.vmem %s2, %s191
      %p193 = pneg %p127
      %p194 = pneg %p124
      %p195 = scmp.lt.s32.totalorder %s19, 1
      %s196 = scalar_select %p195, %s19, 1
      %p197 = scmp.lt.s32.totalorder %s20, 0
      %s198 = scalar_select %p197, %s20, 0
      %s199 = sadd.s32 %s198, %s196
      %s200 = smul.addr %s199, 2
      %s201 = scalar_lea.vmem %s3, %s200
      %p202 = scmp.lt.s32.totalorder %s19, 1
      %s203 = scalar_select %p202, %s19, 1
      %p204 = scmp.lt.s32.totalorder %s20, 0
      %s205 = scalar_select %p204, %s20, 0
      %s206 = smul.addr %s205, 54
      %s207 = smul.addr %s203, 54
      %s208 = sadd.s32 %s206, %s207
      %s209 = smul.addr %s208, 4
      %s210 = scalar_lea.vmem %s0, %s209
      %s211 = smul.u32 16, %s20
      %p212 = scmp.lt.s32.totalorder %s19, 1
      %s213 = scalar_select %p212, %s19, 1
      %p214 = scmp.lt.s32.totalorder %s211, 15
      %s215 = scalar_select %p214, %s211, 15
      %s216 = smul.addr %s215, 2
      %s217 = smul.addr %s213, 32
      %s218 = sadd.s32 %s216, %s217
      %s219 = smul.addr %s218, 8
      %s220 = scalar_lea.vmem %s2, %s219
      %s221 = smul.u32 16, %s20
      %p222 = scmp.lt.s32.totalorder %s19, 1
      %s223 = scalar_select %p222, %s19, 1
      %p224 = scmp.lt.s32.totalorder %s20, 0
      %s225 = scalar_select %p224, %s20, 0
      %s226 = sadd.s32 %s225, %s223
      %s227 = smul.addr %s226, 2
      %s228 = scalar_lea.vmem %s3, %s227
      %v230 = vld [vmem:[%s210] sm:$0xf]
      %v231 = vld [vmem:[%s210 + $0x4] sm:$0xf]
      %v232 = vld [vmem:[%s210 + $0xc] sm:$0xf]
      %v233 = vld [vmem:[%s210 + $0x10] sm:$0xf]
      %v234 = vld [vmem:[%s210 + $0x18] sm:$0xf]
      %v235 = vld [vmem:[%s210 + $0x1c] sm:$0xf]
      %v236 = vld [vmem:[%s210 + $0x24] sm:$0xf]
      %v237 = vld [vmem:[%s210 + $0x28] sm:$0xf]
      %v238 = vld [vmem:[%s210 + $0x30] sm:$0xf]
      %v239 = vld [vmem:[%s210 + $0x34] sm:$0xf]
      %v240 = vld [vmem:[%s210 + $0x3c] sm:$0xf]
      %v241 = vld [vmem:[%s210 + $0x40] sm:$0xf]
      %v242 = vld [vmem:[%s210 + $0x48] sm:$0xf]
      %v243 = vld [vmem:[%s210 + $0x4c] sm:$0xf]
      %v244 = vld [vmem:[%s210 + $0x54] sm:$0xf]
      %v245 = vld [vmem:[%s210 + $0x58] sm:$0xf]
      %v246 = vld [vmem:[%s210 + $0x60] sm:$0xf]
      %v247 = vld [vmem:[%s210 + $0x64] sm:$0xf]
      %v248 = vld [vmem:[%s210 + $0x6c] sm:$0xf]
      %v249 = vld [vmem:[%s210 + $0x70] sm:$0xf]
      %v250 = vld [vmem:[%s210 + $0x78] sm:$0xf]
      %v251 = vld [vmem:[%s210 + $0x7c] sm:$0xf]
      %v252 = vld [vmem:[%s210 + $0x84] sm:$0xf]
      %v253 = vld [vmem:[%s210 + $0x88] sm:$0xf]
      %v254 = vld [vmem:[%s210 + $0x90] sm:$0xf]
      %v255 = vld [vmem:[%s210 + $0x94] sm:$0xf]
      %v256 = vld [vmem:[%s210 + $0x9c] sm:$0xf]
      %v257 = vld [vmem:[%s210 + $0xa0] sm:$0xf]
      %v258 = vld [vmem:[%s210 + $0xa8] sm:$0xf]
      %v259 = vld [vmem:[%s210 + $0xac] sm:$0xf]
      %v260 = vld [vmem:[%s210 + $0xb4] sm:$0xf]
      %v261 = vld [vmem:[%s210 + $0xb8] sm:$0xf]
      %v262 = vld [vmem:[%s1] sm:$0xf]
      %v263 = vld [vmem:[%s1 + $0x4] sm:$0xf]
      %v264 = vld [vmem:[%s1 + $0x8] sm:$0xf]
      %v265 = vld [vmem:[%s1 + $0xc] sm:$0xf]
      %v266 = vld [vmem:[%s1 + $0x10] sm:$0xf]
      %v267 = vld [vmem:[%s1 + $0x14] sm:$0xf]
      %v268 = vld [vmem:[%s1 + $0x18] sm:$0xf]
      %v269 = vld [vmem:[%s1 + $0x1c] sm:$0xf]
      %v270 = vld [vmem:[%s1 + $0x20] sm:$0xf]
      %v271 = vld [vmem:[%s1 + $0x24] sm:$0xf]
      %v272 = vld [vmem:[%s1 + $0x28] sm:$0xf]
      %v273 = vld [vmem:[%s1 + $0x2c] sm:$0xf]
      %v274 = vld [vmem:[%s1 + $0x30] sm:$0xf]
      %v275 = vld [vmem:[%s1 + $0x34] sm:$0xf]
      %v276 = vld [vmem:[%s1 + $0x38] sm:$0xf]
      %v277 = vld [vmem:[%s1 + $0x3c] sm:$0xf]
      %v278 = vld [vmem:[%s210 + $0x8] sm:$0x1]
      %v279 = vld [vmem:[%s210 + $0x14] sm:$0x1]
      %v280 = vld [vmem:[%s210 + $0x20] sm:$0x1]
      %v281 = vld [vmem:[%s210 + $0x2c] sm:$0x1]
      %v282 = vld [vmem:[%s210 + $0x38] sm:$0x1]
      %v283 = vld [vmem:[%s210 + $0x44] sm:$0x1]
      %v284 = vld [vmem:[%s210 + $0x50] sm:$0x1]
      %v285 = vld [vmem:[%s210 + $0x5c] sm:$0x1]
      %v286 = vld [vmem:[%s210 + $0x68] sm:$0x1]
      %v287 = vld [vmem:[%s210 + $0x74] sm:$0x1]
      %v288 = vld [vmem:[%s210 + $0x80] sm:$0x1]
      %v289 = vld [vmem:[%s210 + $0x8c] sm:$0x1]
      %v290 = vld [vmem:[%s210 + $0x98] sm:$0x1]
      %v291 = vld [vmem:[%s210 + $0xa4] sm:$0x1]
      %v292 = vld [vmem:[%s210 + $0xb0] sm:$0x1]
      %v293 = vld [vmem:[%s210 + $0xbc] sm:$0x1]
      %vm294 = vsmask.f32 3328
      %vm295 = vsmask.f32 7440
      %vm296 = vmor %vm294, %vm295
      %v298 = vshrl.u32 %v230, 16
      %v300 = vrot.slane %v298, 4
      %v301 = vshll.u32 %v230, 16
      %v303 = vrot.slane %v301, 5
      %v304 = vor.u32 %v300, %v303
      %v305 = vrot.slane %v304, 4
      %v307 = vshll.u32 %v231, 16
      %v309 = vrot.slane %v307, 5
      %v310 = vsel %vm296, %v305, %v309
      %v311 = vshrl.u32 %v231, 16
      %v313 = vrot.slane %v311, 4
      %v314 = vor.u32 %v313, %v309
      %v315 = vrot.slane %v314, 4
      %v317 = vshll.u32 %v278, 16
      %v319 = vrot.slane %v317, 5
      %v320 = vsel %vm296, %v315, %v319
      %v322 = vshrl.u32 %v232, 16
      %v324 = vrot.slane %v322, 4
      %v325 = vshll.u32 %v232, 16
      %v327 = vrot.slane %v325, 5
      %v328 = vor.u32 %v324, %v327
      %v329 = vrot.slane %v328, 4
      %v331 = vshll.u32 %v233, 16
      %v333 = vrot.slane %v331, 5
      %v334 = vsel %vm296, %v329, %v333
      %v335 = vshrl.u32 %v233, 16
      %v337 = vrot.slane %v335, 4
      %v338 = vor.u32 %v337, %v333
      %v339 = vrot.slane %v338, 4
      %v341 = vshll.u32 %v279, 16
      %v343 = vrot.slane %v341, 5
      %v344 = vsel %vm296, %v339, %v343
      %v346 = vshrl.u32 %v234, 16
      %v348 = vrot.slane %v346, 4
      %v349 = vshll.u32 %v234, 16
      %v351 = vrot.slane %v349, 5
      %v352 = vor.u32 %v348, %v351
      %v353 = vrot.slane %v352, 4
      %v355 = vshll.u32 %v235, 16
      %v357 = vrot.slane %v355, 5
      %v358 = vsel %vm296, %v353, %v357
      %v359 = vshrl.u32 %v235, 16
      %v361 = vrot.slane %v359, 4
      %v362 = vor.u32 %v361, %v357
      %v363 = vrot.slane %v362, 4
      %v365 = vshll.u32 %v280, 16
      %v367 = vrot.slane %v365, 5
      %v368 = vsel %vm296, %v363, %v367
      %v370 = vshrl.u32 %v236, 16
      %v372 = vrot.slane %v370, 4
      %v373 = vshll.u32 %v236, 16
      %v375 = vrot.slane %v373, 5
      %v376 = vor.u32 %v372, %v375
      %v377 = vrot.slane %v376, 4
      %v379 = vshll.u32 %v237, 16
      %v381 = vrot.slane %v379, 5
      %v382 = vsel %vm296, %v377, %v381
      %v383 = vshrl.u32 %v237, 16
      %v385 = vrot.slane %v383, 4
      %v386 = vor.u32 %v385, %v381
      %v387 = vrot.slane %v386, 4
      %v389 = vshll.u32 %v281, 16
      %v391 = vrot.slane %v389, 5
      %v392 = vsel %vm296, %v387, %v391
      %v394 = vshrl.u32 %v238, 16
      %v396 = vrot.slane %v394, 4
      %v397 = vshll.u32 %v238, 16
      %v399 = vrot.slane %v397, 5
      %v400 = vor.u32 %v396, %v399
      %v401 = vrot.slane %v400, 4
      %v403 = vshll.u32 %v239, 16
      %v405 = vrot.slane %v403, 5
      %v406 = vsel %vm296, %v401, %v405
      %v407 = vshrl.u32 %v239, 16
      %v409 = vrot.slane %v407, 4
      %v410 = vor.u32 %v409, %v405
      %v411 = vrot.slane %v410, 4
      %v413 = vshll.u32 %v282, 16
      %v415 = vrot.slane %v413, 5
      %v416 = vsel %vm296, %v411, %v415
      %v418 = vshrl.u32 %v240, 16
      %v420 = vrot.slane %v418, 4
      %v421 = vshll.u32 %v240, 16
      %v423 = vrot.slane %v421, 5
      %v424 = vor.u32 %v420, %v423
      %v425 = vrot.slane %v424, 4
      %v427 = vshll.u32 %v241, 16
      %v429 = vrot.slane %v427, 5
      %v430 = vsel %vm296, %v425, %v429
      %v431 = vshrl.u32 %v241, 16
      %v433 = vrot.slane %v431, 4
      %v434 = vor.u32 %v433, %v429
      %v435 = vrot.slane %v434, 4
      %v437 = vshll.u32 %v283, 16
      %v439 = vrot.slane %v437, 5
      %v440 = vsel %vm296, %v435, %v439
      %v442 = vshrl.u32 %v242, 16
      %v444 = vrot.slane %v442, 4
      %v445 = vshll.u32 %v242, 16
      %v447 = vrot.slane %v445, 5
      %v448 = vor.u32 %v444, %v447
      %v449 = vrot.slane %v448, 4
      %v451 = vshll.u32 %v243, 16
      %v453 = vrot.slane %v451, 5
      %v454 = vsel %vm296, %v449, %v453
      %v455 = vshrl.u32 %v243, 16
      %v457 = vrot.slane %v455, 4
      %v458 = vor.u32 %v457, %v453
      %v459 = vrot.slane %v458, 4
      %v461 = vshll.u32 %v284, 16
      %v463 = vrot.slane %v461, 5
      %v464 = vsel %vm296, %v459, %v463
      %v466 = vshrl.u32 %v244, 16
      %v468 = vrot.slane %v466, 4
      %v469 = vshll.u32 %v244, 16
      %v471 = vrot.slane %v469, 5
      %v472 = vor.u32 %v468, %v471
      %v473 = vrot.slane %v472, 4
      %v475 = vshll.u32 %v245, 16
      %v477 = vrot.slane %v475, 5
      %v478 = vsel %vm296, %v473, %v477
      %v479 = vshrl.u32 %v245, 16
      %v481 = vrot.slane %v479, 4
      %v482 = vor.u32 %v481, %v477
      %v483 = vrot.slane %v482, 4
      %v485 = vshll.u32 %v285, 16
      %v487 = vrot.slane %v485, 5
      %v488 = vsel %vm296, %v483, %v487
      %v490 = vshrl.u32 %v246, 16
      %v492 = vrot.slane %v490, 4
      %v493 = vshll.u32 %v246, 16
      %v495 = vrot.slane %v493, 5
      %v496 = vor.u32 %v492, %v495
      %v497 = vrot.slane %v496, 4
      %v499 = vshll.u32 %v247, 16
      %v501 = vrot.slane %v499, 5
      %v502 = vsel %vm296, %v497, %v501
      %v503 = vshrl.u32 %v247, 16
      %v505 = vrot.slane %v503, 4
      %v506 = vor.u32 %v505, %v501
      %v507 = vrot.slane %v506, 4
      %v509 = vshll.u32 %v286, 16
      %v511 = vrot.slane %v509, 5
      %v512 = vsel %vm296, %v507, %v511
      %v514 = vshrl.u32 %v248, 16
      %v516 = vrot.slane %v514, 4
      %v517 = vshll.u32 %v248, 16
      %v519 = vrot.slane %v517, 5
      %v520 = vor.u32 %v516, %v519
      %v521 = vrot.slane %v520, 4
      %v523 = vshll.u32 %v249, 16
      %v525 = vrot.slane %v523, 5
      %v526 = vsel %vm296, %v521, %v525
      %v527 = vshrl.u32 %v249, 16
      %v529 = vrot.slane %v527, 4
      %v530 = vor.u32 %v529, %v525
      %v531 = vrot.slane %v530, 4
      %v533 = vshll.u32 %v287, 16
      %v535 = vrot.slane %v533, 5
      %v536 = vsel %vm296, %v531, %v535
      %v538 = vshrl.u32 %v250, 16
      %v540 = vrot.slane %v538, 4
      %v541 = vshll.u32 %v250, 16
      %v543 = vrot.slane %v541, 5
      %v544 = vor.u32 %v540, %v543
      %v545 = vrot.slane %v544, 4
      %v547 = vshll.u32 %v251, 16
      %v549 = vrot.slane %v547, 5
      %v550 = vsel %vm296, %v545, %v549
      %v551 = vshrl.u32 %v251, 16
      %v553 = vrot.slane %v551, 4
      %v554 = vor.u32 %v553, %v549
      %v555 = vrot.slane %v554, 4
      %v557 = vshll.u32 %v288, 16
      %v559 = vrot.slane %v557, 5
      %v560 = vsel %vm296, %v555, %v559
      %v562 = vshrl.u32 %v252, 16
      %v564 = vrot.slane %v562, 4
      %v565 = vshll.u32 %v252, 16
      %v567 = vrot.slane %v565, 5
      %v568 = vor.u32 %v564, %v567
      %v569 = vrot.slane %v568, 4
      %v571 = vshll.u32 %v253, 16
      %v573 = vrot.slane %v571, 5
      %v574 = vsel %vm296, %v569, %v573
      %v575 = vshrl.u32 %v253, 16
      %v577 = vrot.slane %v575, 4
      %v578 = vor.u32 %v577, %v573
      %v579 = vrot.slane %v578, 4
      %v581 = vshll.u32 %v289, 16
      %v583 = vrot.slane %v581, 5
      %v584 = vsel %vm296, %v579, %v583
      %v586 = vshrl.u32 %v254, 16
      %v588 = vrot.slane %v586, 4
      %v589 = vshll.u32 %v254, 16
      %v591 = vrot.slane %v589, 5
      %v592 = vor.u32 %v588, %v591
      %v593 = vrot.slane %v592, 4
      %v595 = vshll.u32 %v255, 16
      %v597 = vrot.slane %v595, 5
      %v598 = vsel %vm296, %v593, %v597
      %v599 = vshrl.u32 %v255, 16
      %v601 = vrot.slane %v599, 4
      %v602 = vor.u32 %v601, %v597
      %v603 = vrot.slane %v602, 4
      %v605 = vshll.u32 %v290, 16
      %v607 = vrot.slane %v605, 5
      %v608 = vsel %vm296, %v603, %v607
      %v610 = vshrl.u32 %v256, 16
      %v612 = vrot.slane %v610, 4
      %v613 = vshll.u32 %v256, 16
      %v615 = vrot.slane %v613, 5
      %v616 = vor.u32 %v612, %v615
      %v617 = vrot.slane %v616, 4
      %v619 = vshll.u32 %v257, 16
      %v621 = vrot.slane %v619, 5
      %v622 = vsel %vm296, %v617, %v621
      %v623 = vshrl.u32 %v257, 16
      %v625 = vrot.slane %v623, 4
      %v626 = vor.u32 %v625, %v621
      %v627 = vrot.slane %v626, 4
      %v629 = vshll.u32 %v291, 16
      %v631 = vrot.slane %v629, 5
      %v632 = vsel %vm296, %v627, %v631
      %v634 = vshrl.u32 %v258, 16
      %v636 = vrot.slane %v634, 4
      %v637 = vshll.u32 %v258, 16
      %v639 = vrot.slane %v637, 5
      %v640 = vor.u32 %v636, %v639
      %v641 = vrot.slane %v640, 4
      %v643 = vshll.u32 %v259, 16
      %v645 = vrot.slane %v643, 5
      %v646 = vsel %vm296, %v641, %v645
      %v647 = vshrl.u32 %v259, 16
      %v649 = vrot.slane %v647, 4
      %v650 = vor.u32 %v649, %v645
      %v651 = vrot.slane %v650, 4
      %v653 = vshll.u32 %v292, 16
      %v655 = vrot.slane %v653, 5
      %v656 = vsel %vm296, %v651, %v655
      %v658 = vshrl.u32 %v260, 16
      %v660 = vrot.slane %v658, 4
      %v661 = vshll.u32 %v260, 16
      %v663 = vrot.slane %v661, 5
      %v664 = vor.u32 %v660, %v663
      %v665 = vrot.slane %v664, 4
      %v667 = vshll.u32 %v261, 16
      %v669 = vrot.slane %v667, 5
      %v670 = vsel %vm296, %v665, %v669
      %v671 = vshrl.u32 %v261, 16
      %v673 = vrot.slane %v671, 4
      %v674 = vor.u32 %v673, %v669
      %v675 = vrot.slane %v674, 4
      %v677 = vshll.u32 %v293, 16
      %v679 = vrot.slane %v677, 5
      %v680 = vsel %vm296, %v675, %v679
      %s681 = scalar_lea.vmem %s1, 64
      %v682 = vld [vmem:[%s681] sm:$0xf]
      %v683 = vld [vmem:[%s681 + $0x4] sm:$0xf]
      %v684 = vld [vmem:[%s681 + $0x8] sm:$0xf]
      %v685 = vld [vmem:[%s681 + $0xc] sm:$0xf]
      %v686 = vld [vmem:[%s681 + $0x10] sm:$0xf]
      %v687 = vld [vmem:[%s681 + $0x14] sm:$0xf]
      %v688 = vld [vmem:[%s681 + $0x18] sm:$0xf]
      %v689 = vld [vmem:[%s681 + $0x1c] sm:$0xf]
      %v690 = vld [vmem:[%s681 + $0x20] sm:$0xf]
      %v691 = vld [vmem:[%s681 + $0x24] sm:$0xf]
      %v692 = vld [vmem:[%s681 + $0x28] sm:$0xf]
      %v693 = vld [vmem:[%s681 + $0x2c] sm:$0xf]
      %v694 = vld [vmem:[%s681 + $0x30] sm:$0xf]
      %v695 = vld [vmem:[%s681 + $0x34] sm:$0xf]
      %v696 = vld [vmem:[%s681 + $0x38] sm:$0xf]
      %v697 = vld [vmem:[%s681 + $0x3c] sm:$0xf]
      %v698 = vunpack.c.l.b16 %v310
      %v699 = vunpack.c.l.b16 %v320
      %v700 = vunpack.c.l.b16 %v334
      %v701 = vunpack.c.l.b16 %v344
      %v702 = vunpack.c.l.b16 %v358
      %v703 = vunpack.c.l.b16 %v368
      %v704 = vunpack.c.l.b16 %v382
      %v705 = vunpack.c.l.b16 %v392
      %v706 = vunpack.c.l.b16 %v406
      %v707 = vunpack.c.l.b16 %v416
      %v708 = vunpack.c.l.b16 %v430
      %v709 = vunpack.c.l.b16 %v440
      %v710 = vunpack.c.l.b16 %v454
      %v711 = vunpack.c.l.b16 %v464
      %v712 = vunpack.c.l.b16 %v478
      %v713 = vunpack.c.l.b16 %v488
      %v714 = vunpack.c.l.b16 %v502
      %v715 = vunpack.c.l.b16 %v512
      %v716 = vunpack.c.l.b16 %v526
      %v717 = vunpack.c.l.b16 %v536
      %v718 = vunpack.c.l.b16 %v550
      %v719 = vunpack.c.l.b16 %v560
      %v720 = vunpack.c.l.b16 %v574
      %v721 = vunpack.c.l.b16 %v584
      %v722 = vunpack.c.l.b16 %v598
      %v723 = vunpack.c.l.b16 %v608
      %v724 = vunpack.c.l.b16 %v622
      %v725 = vunpack.c.l.b16 %v632
      %v726 = vunpack.c.l.b16 %v646
      %v727 = vunpack.c.l.b16 %v656
      %v728 = vunpack.c.l.b16 %v670
      %v729 = vunpack.c.l.b16 %v680
      %v730 = vpack.c.b16 %v699, %v698
      %v731 = vpack.c.b16 %v701, %v700
      %v732 = vpack.c.b16 %v703, %v702
      %v733 = vpack.c.b16 %v705, %v704
      %v734 = vpack.c.b16 %v707, %v706
      %v735 = vpack.c.b16 %v709, %v708
      %v736 = vpack.c.b16 %v711, %v710
      %v737 = vpack.c.b16 %v713, %v712
      %v738 = vpack.c.b16 %v715, %v714
      %v739 = vpack.c.b16 %v717, %v716
      %v740 = vpack.c.b16 %v719, %v718
      %v741 = vpack.c.b16 %v721, %v720
      %v742 = vpack.c.b16 %v723, %v722
      %v743 = vpack.c.b16 %v725, %v724
      %v744 = vpack.c.b16 %v727, %v726
      %v745 = vpack.c.b16 %v729, %v728
      %v778 = vunpack.c.l.b16 %v682
      %v779 = vunpack.c.l.b16 %v683
      %v780 = vunpack.c.l.b16 %v684
      %v781 = vunpack.c.l.b16 %v685
      %v782 = vunpack.c.l.b16 %v686
      %v783 = vunpack.c.l.b16 %v687
      %v784 = vunpack.c.l.b16 %v688
      %v785 = vunpack.c.l.b16 %v689
      %v786 = vunpack.c.l.b16 %v690
      %v787 = vunpack.c.l.b16 %v691
      %v788 = vunpack.c.l.b16 %v692
      %v789 = vunpack.c.l.b16 %v693
      %v790 = vunpack.c.l.b16 %v694
      %v791 = vunpack.c.l.b16 %v695
      %v792 = vunpack.c.l.b16 %v696
      %v793 = vunpack.c.l.b16 %v697
      %v794 = vpack.c.b16 %v779, %v778
      %v795 = vpack.c.b16 %v781, %v780
      %v796 = vpack.c.b16 %v783, %v782
      %v797 = vpack.c.b16 %v785, %v784
      %v798 = vpack.c.b16 %v787, %v786
      %v799 = vpack.c.b16 %v789, %v788
      %v800 = vpack.c.b16 %v791, %v790
      %v801 = vpack.c.b16 %v793, %v792
      %810 = vmatprep.subr.bf16.mxu0 0
      %811 = vmatpush1.bf16.msra.mxu0 %v794
      %812 = vmatprep.subr.bf16.mxu0 0
      %813 = vmatpush1.bf16.msra.mxu0 %v795
      %814 = vmatprep.subr.bf16.mxu0 0
      %815 = vmatpush1.bf16.msra.mxu0 %v796
      %816 = vmatprep.subr.bf16.mxu0 0
      %817 = vmatpush1.bf16.msra.mxu0 %v797
      %818 = vmatprep.subr.bf16.mxu0 0
      %819 = vmatpush1.bf16.msra.mxu0 %v798
      %820 = vmatprep.subr.bf16.mxu0 0
      %821 = vmatpush1.bf16.msra.mxu0 %v799
      %822 = vmatprep.subr.bf16.mxu0 0
      %823 = vmatpush1.bf16.msra.mxu0 %v800
      %824 = vmatprep.subr.bf16.mxu0 0
      %825 = vmatpush1.bf16.msra.mxu0 %v801
      %826 = vmatprep.subr.bf16.mxu0 0
      %827 = vmatpush1.bf16.msra.mxu0 0
      %828 = vmatprep.subr.bf16.mxu0 0
      %829 = vmatpush1.bf16.msra.mxu0 0
      %830 = vmatprep.subr.bf16.mxu0 0
      %831 = vmatpush1.bf16.msra.mxu0 0
      %832 = vmatprep.subr.bf16.mxu0 0
      %833 = vmatpush1.bf16.msra.mxu0 0
      %834 = vmatprep.subr.bf16.mxu0 0
      %835 = vmatpush1.bf16.msra.mxu0 0
      %836 = vmatprep.subr.bf16.mxu0 0
      %837 = vmatpush1.bf16.msra.mxu0 0
      %838 = vmatprep.subr.bf16.mxu0 0
      %839 = vmatpush1.bf16.msra.mxu0 0
      %840 = vmatprep.subr.bf16.mxu0 0
      %841 = vmatpush1.bf16.msra.mxu0 0
      %842 = vmatprep.mubr.bf16.mxu0 0
      %843 = vmatmul.mubr.bf16.gmra.mrb[0].mxu0 %v730
      %v844 = vpop.f32.mrb[0].mxu0
      %v845 = vadd.f32 0.0, %v844
      %v846 = vpop.f32.mrb[0].mxu0
      %v847 = vpop.f32.mrb[0].mxu0
      %v848 = vadd.f32 0.0, %v847
      %v849 = vpop.f32.mrb[0].mxu0
      %850 = vmatprep.mubr.bf16.mxu0 0
      %851 = vmatmul.mubr.bf16.gmra.mrb[0].mxu0 %v731
      %v852 = vpop.f32.mrb[0].mxu0
      %v853 = vadd.f32 0.0, %v852
      %v854 = vpop.f32.mrb[0].mxu0
      %v855 = vpop.f32.mrb[0].mxu0
      %v856 = vadd.f32 0.0, %v855
      %v857 = vpop.f32.mrb[0].mxu0
      %858 = vmatprep.mubr.bf16.mxu0 0
      %859 = vmatmul.mubr.bf16.gmra.mrb[0].mxu0 %v732
      %v860 = vpop.f32.mrb[0].mxu0
      %v861 = vadd.f32 0.0, %v860
      %v862 = vpop.f32.mrb[0].mxu0
      %v863 = vpop.f32.mrb[0].mxu0
      %v864 = vadd.f32 0.0, %v863
      %v865 = vpop.f32.mrb[0].mxu0
      %866 = vmatprep.mubr.bf16.mxu0 0
      %867 = vmatmul.mubr.bf16.gmra.mrb[0].mxu0 %v733
      %v868 = vpop.f32.mrb[0].mxu0
      %v869 = vadd.f32 0.0, %v868
      %v870 = vpop.f32.mrb[0].mxu0
      %v871 = vpop.f32.mrb[0].mxu0
      %v872 = vadd.f32 0.0, %v871
      %v873 = vpop.f32.mrb[0].mxu0
      %874 = vmatprep.mubr.bf16.mxu0 0
      %875 = vmatmul.mubr.bf16.gmra.mrb[0].mxu0 %v734
      %v876 = vpop.f32.mrb[0].mxu0
      %v877 = vadd.f32 0.0, %v876
      %v878 = vpop.f32.mrb[0].mxu0
      %v879 = vpop.f32.mrb[0].mxu0
      %v880 = vadd.f32 0.0, %v879
      %v881 = vpop.f32.mrb[0].mxu0
      %882 = vmatprep.mubr.bf16.mxu0 0
      %883 = vmatmul.mubr.bf16.gmra.mrb[0].mxu0 %v735
      %v884 = vpop.f32.mrb[0].mxu0
      %v885 = vadd.f32 0.0, %v884
      %v886 = vpop.f32.mrb[0].mxu0
      %v887 = vpop.f32.mrb[0].mxu0
      %v888 = vadd.f32 0.0, %v887
      %v889 = vpop.f32.mrb[0].mxu0
      %890 = vmatprep.mubr.bf16.mxu0 0
      %891 = vmatmul.mubr.bf16.gmra.mrb[0].mxu0 %v736
      %v892 = vpop.f32.mrb[0].mxu0
      %v893 = vadd.f32 0.0, %v892
      %v894 = vpop.f32.mrb[0].mxu0
      %v895 = vpop.f32.mrb[0].mxu0
      %v896 = vadd.f32 0.0, %v895
      %v897 = vpop.f32.mrb[0].mxu0
      %898 = vmatprep.mubr.bf16.mxu0 0
      %899 = vmatmul.mubr.bf16.gmra.mrb[0].mxu0 %v737
      %v900 = vpop.f32.mrb[0].mxu0
      %v901 = vadd.f32 0.0, %v900
      %v902 = vpop.f32.mrb[0].mxu0
      %v903 = vpop.f32.mrb[0].mxu0
      %v904 = vadd.f32 0.0, %v903
      %v905 = vpop.f32.mrb[0].mxu0
      %906 = vmatprep.mubr.bf16.mxu0 0
      %907 = vmatmul.mubr.bf16.gmra.mrb[0].mxu0 %v738
      %v908 = vpop.f32.mrb[0].mxu0
      %v909 = vadd.f32 0.0, %v908
      %v910 = vpop.f32.mrb[0].mxu0
      %v911 = vpop.f32.mrb[0].mxu0
      %v912 = vadd.f32 0.0, %v911
      %v913 = vpop.f32.mrb[0].mxu0
      %914 = vmatprep.mubr.bf16.mxu0 0
      %915 = vmatmul.mubr.bf16.gmra.mrb[0].mxu0 %v739
      %v916 = vpop.f32.mrb[0].mxu0
      %v917 = vadd.f32 0.0, %v916
      %v918 = vpop.f32.mrb[0].mxu0
      %v919 = vpop.f32.mrb[0].mxu0
      %v920 = vadd.f32 0.0, %v919
      %v921 = vpop.f32.mrb[0].mxu0
      %922 = vmatprep.mubr.bf16.mxu0 0
      %923 = vmatmul.mubr.bf16.gmra.mrb[0].mxu0 %v740
      %v924 = vpop.f32.mrb[0].mxu0
      %v925 = vadd.f32 0.0, %v924
      %v926 = vpop.f32.mrb[0].mxu0
      %v927 = vpop.f32.mrb[0].mxu0
      %v928 = vadd.f32 0.0, %v927
      %v929 = vpop.f32.mrb[0].mxu0
      %930 = vmatprep.mubr.bf16.mxu0 0
      %931 = vmatmul.mubr.bf16.gmra.mrb[0].mxu0 %v741
      %v932 = vpop.f32.mrb[0].mxu0
      %v933 = vadd.f32 0.0, %v932
      %v934 = vpop.f32.mrb[0].mxu0
      %v935 = vpop.f32.mrb[0].mxu0
      %v936 = vadd.f32 0.0, %v935
      %v937 = vpop.f32.mrb[0].mxu0
      %938 = vmatprep.mubr.bf16.mxu0 0
      %939 = vmatmul.mubr.bf16.gmra.mrb[0].mxu0 %v742
      %v940 = vpop.f32.mrb[0].mxu0
      %v941 = vadd.f32 0.0, %v940
      %v942 = vpop.f32.mrb[0].mxu0
      %v943 = vpop.f32.mrb[0].mxu0
      %v944 = vadd.f32 0.0, %v943
      %v945 = vpop.f32.mrb[0].mxu0
      %946 = vmatprep.mubr.bf16.mxu0 0
      %947 = vmatmul.mubr.bf16.gmra.mrb[0].mxu0 %v743
      %v948 = vpop.f32.mrb[0].mxu0
      %v949 = vadd.f32 0.0, %v948
      %v950 = vpop.f32.mrb[0].mxu0
      %v951 = vpop.f32.mrb[0].mxu0
      %v952 = vadd.f32 0.0, %v951
      %v953 = vpop.f32.mrb[0].mxu0
      %954 = vmatprep.mubr.bf16.mxu0 0
      %955 = vmatmul.mubr.bf16.gmra.mrb[0].mxu0 %v744
      %v956 = vpop.f32.mrb[0].mxu0
      %v957 = vadd.f32 0.0, %v956
      %v958 = vpop.f32.mrb[0].mxu0
      %v959 = vpop.f32.mrb[0].mxu0
      %v960 = vadd.f32 0.0, %v959
      %v961 = vpop.f32.mrb[0].mxu0
      %962 = vmatprep.mubr.bf16.mxu0 0
      %963 = vmatmul.mubr.bf16.gmra.mrb[0].mxu0 %v745
      %v964 = vpop.f32.mrb[0].mxu0
      %v965 = vadd.f32 0.0, %v964
      %v966 = vpop.f32.mrb[0].mxu0
      %v967 = vpop.f32.mrb[0].mxu0
      %v968 = vadd.f32 0.0, %v967
      %v969 = vpop.f32.mrb[0].mxu0
      %970 = vdwg.mxu0
      %v1003 = vunpack.c.l.b16 %v230
      %v1004 = vunpack.c.l.b16 %v231
      %v1005 = vunpack.c.l.b16 %v232
      %v1006 = vunpack.c.l.b16 %v233
      %v1007 = vunpack.c.l.b16 %v234
      %v1008 = vunpack.c.l.b16 %v235
      %v1009 = vunpack.c.l.b16 %v236
      %v1010 = vunpack.c.l.b16 %v237
      %v1011 = vunpack.c.l.b16 %v238
      %v1012 = vunpack.c.l.b16 %v239
      %v1013 = vunpack.c.l.b16 %v240
      %v1014 = vunpack.c.l.b16 %v241
      %v1015 = vunpack.c.l.b16 %v242
      %v1016 = vunpack.c.l.b16 %v243
      %v1017 = vunpack.c.l.b16 %v244
      %v1018 = vunpack.c.l.b16 %v245
      %v1019 = vunpack.c.l.b16 %v246
      %v1020 = vunpack.c.l.b16 %v247
      %v1021 = vunpack.c.l.b16 %v248
      %v1022 = vunpack.c.l.b16 %v249
      %v1023 = vunpack.c.l.b16 %v250
      %v1024 = vunpack.c.l.b16 %v251
      %v1025 = vunpack.c.l.b16 %v252
      %v1026 = vunpack.c.l.b16 %v253
      %v1027 = vunpack.c.l.b16 %v254
      %v1028 = vunpack.c.l.b16 %v255
      %v1029 = vunpack.c.l.b16 %v256
      %v1030 = vunpack.c.l.b16 %v257
      %v1031 = vunpack.c.l.b16 %v258
      %v1032 = vunpack.c.l.b16 %v259
      %v1033 = vunpack.c.l.b16 %v260
      %v1034 = vunpack.c.l.b16 %v261
      %v1035 = vpack.c.b16 %v1004, %v1003
      %v1036 = vpack.c.b16 %v1006, %v1005
      %v1037 = vpack.c.b16 %v1008, %v1007
      %v1038 = vpack.c.b16 %v1010, %v1009
      %v1039 = vpack.c.b16 %v1012, %v1011
      %v1040 = vpack.c.b16 %v1014, %v1013
      %v1041 = vpack.c.b16 %v1016, %v1015
      %v1042 = vpack.c.b16 %v1018, %v1017
      %v1043 = vpack.c.b16 %v1020, %v1019
      %v1044 = vpack.c.b16 %v1022, %v1021
      %v1045 = vpack.c.b16 %v1024, %v1023
      %v1046 = vpack.c.b16 %v1026, %v1025
      %v1047 = vpack.c.b16 %v1028, %v1027
      %v1048 = vpack.c.b16 %v1030, %v1029
      %v1049 = vpack.c.b16 %v1032, %v1031
      %v1050 = vpack.c.b16 %v1034, %v1033
      %v1083 = vunpack.c.l.b16 %v262
      %v1084 = vunpack.c.l.b16 %v263
      %v1085 = vunpack.c.l.b16 %v264
      %v1086 = vunpack.c.l.b16 %v265
      %v1087 = vunpack.c.l.b16 %v266
      %v1088 = vunpack.c.l.b16 %v267
      %v1089 = vunpack.c.l.b16 %v268
      %v1090 = vunpack.c.l.b16 %v269
      %v1091 = vunpack.c.l.b16 %v270
      %v1092 = vunpack.c.l.b16 %v271
      %v1093 = vunpack.c.l.b16 %v272
      %v1094 = vunpack.c.l.b16 %v273
      %v1095 = vunpack.c.l.b16 %v274
      %v1096 = vunpack.c.l.b16 %v275
      %v1097 = vunpack.c.l.b16 %v276
      %v1098 = vunpack.c.l.b16 %v277
      %v1099 = vpack.c.b16 %v1084, %v1083
      %v1100 = vpack.c.b16 %v1086, %v1085
      %v1101 = vpack.c.b16 %v1088, %v1087
      %v1102 = vpack.c.b16 %v1090, %v1089
      %v1103 = vpack.c.b16 %v1092, %v1091
      %v1104 = vpack.c.b16 %v1094, %v1093
      %v1105 = vpack.c.b16 %v1096, %v1095
      %v1106 = vpack.c.b16 %v1098, %v1097
      %1115 = vmatprep.subr.bf16.mxu0 0
      %1116 = vmatpush1.bf16.msra.mxu0 %v1099
      %1117 = vmatprep.subr.bf16.mxu0 0
      %1118 = vmatpush1.bf16.msra.mxu0 %v1100
      %1119 = vmatprep.subr.bf16.mxu0 0
      %1120 = vmatpush1.bf16.msra.mxu0 %v1101
      %1121 = vmatprep.subr.bf16.mxu0 0
      %1122 = vmatpush1.bf16.msra.mxu0 %v1102
      %1123 = vmatprep.subr.bf16.mxu0 0
      %1124 = vmatpush1.bf16.msra.mxu0 %v1103
      %1125 = vmatprep.subr.bf16.mxu0 0
      %1126 = vmatpush1.bf16.msra.mxu0 %v1104
      %1127 = vmatprep.subr.bf16.mxu0 0
      %1128 = vmatpush1.bf16.msra.mxu0 %v1105
      %1129 = vmatprep.subr.bf16.mxu0 0
      %1130 = vmatpush1.bf16.msra.mxu0 %v1106
      %1131 = vmatprep.subr.bf16.mxu0 0
      %1132 = vmatpush1.bf16.msra.mxu0 0
      %1133 = vmatprep.subr.bf16.mxu0 0
      %1134 = vmatpush1.bf16.msra.mxu0 0
      %1135 = vmatprep.subr.bf16.mxu0 0
      %1136 = vmatpush1.bf16.msra.mxu0 0
      %1137 = vmatprep.subr.bf16.mxu0 0
      %1138 = vmatpush1.bf16.msra.mxu0 0
      %1139 = vmatprep.subr.bf16.mxu0 0
      %1140 = vmatpush1.bf16.msra.mxu0 0
      %1141 = vmatprep.subr.bf16.mxu0 0
      %1142 = vmatpush1.bf16.msra.mxu0 0
      %1143 = vmatprep.subr.bf16.mxu0 0
      %1144 = vmatpush1.bf16.msra.mxu0 0
      %1145 = vmatprep.subr.bf16.mxu0 0
      %1146 = vmatpush1.bf16.msra.mxu0 0
      %1147 = vmatprep.mubr.bf16.mxu0 0
      %1148 = vmatmul.mubr.bf16.gmra.mrb[0].mxu0 %v1035
      %v1149 = vpop.f32.mrb[0].mxu0
      %v1150 = vadd.f32 %v845, %v1149
      %v1151 = vpop.f32.mrb[0].mxu0
      %v1152 = vpop.f32.mrb[0].mxu0
      %v1153 = vadd.f32 %v848, %v1152
      %v1154 = vpop.f32.mrb[0].mxu0
      %1155 = vmatprep.mubr.bf16.mxu0 0
      %1156 = vmatmul.mubr.bf16.gmra.mrb[0].mxu0 %v1036
      %v1157 = vpop.f32.mrb[0].mxu0
      %v1158 = vadd.f32 %v853, %v1157
      %v1159 = vpop.f32.mrb[0].mxu0
      %v1160 = vpop.f32.mrb[0].mxu0
      %v1161 = vadd.f32 %v856, %v1160
      %v1162 = vpop.f32.mrb[0].mxu0
      %1163 = vmatprep.mubr.bf16.mxu0 0
      %1164 = vmatmul.mubr.bf16.gmra.mrb[0].mxu0 %v1037
      %v1165 = vpop.f32.mrb[0].mxu0
      %v1166 = vadd.f32 %v861, %v1165
      %v1167 = vpop.f32.mrb[0].mxu0
      %v1168 = vpop.f32.mrb[0].mxu0
      %v1169 = vadd.f32 %v864, %v1168
      %v1170 = vpop.f32.mrb[0].mxu0
      %1171 = vmatprep.mubr.bf16.mxu0 0
      %1172 = vmatmul.mubr.bf16.gmra.mrb[0].mxu0 %v1038
      %v1173 = vpop.f32.mrb[0].mxu0
      %v1174 = vadd.f32 %v869, %v1173
      %v1175 = vpop.f32.mrb[0].mxu0
      %v1176 = vpop.f32.mrb[0].mxu0
      %v1177 = vadd.f32 %v872, %v1176
      %v1178 = vpop.f32.mrb[0].mxu0
      %1179 = vmatprep.mubr.bf16.mxu0 0
      %1180 = vmatmul.mubr.bf16.gmra.mrb[0].mxu0 %v1039
      %v1181 = vpop.f32.mrb[0].mxu0
      %v1182 = vadd.f32 %v877, %v1181
      %v1183 = vpop.f32.mrb[0].mxu0
      %v1184 = vpop.f32.mrb[0].mxu0
      %v1185 = vadd.f32 %v880, %v1184
      %v1186 = vpop.f32.mrb[0].mxu0
      %1187 = vmatprep.mubr.bf16.mxu0 0
      %1188 = vmatmul.mubr.bf16.gmra.mrb[0].mxu0 %v1040
      %v1189 = vpop.f32.mrb[0].mxu0
      %v1190 = vadd.f32 %v885, %v1189
      %v1191 = vpop.f32.mrb[0].mxu0
      %v1192 = vpop.f32.mrb[0].mxu0
      %v1193 = vadd.f32 %v888, %v1192
      %v1194 = vpop.f32.mrb[0].mxu0
      %1195 = vmatprep.mubr.bf16.mxu0 0
      %1196 = vmatmul.mubr.bf16.gmra.mrb[0].mxu0 %v1041
      %v1197 = vpop.f32.mrb[0].mxu0
      %v1198 = vadd.f32 %v893, %v1197
      %v1199 = vpop.f32.mrb[0].mxu0
      %v1200 = vpop.f32.mrb[0].mxu0
      %v1201 = vadd.f32 %v896, %v1200
      %v1202 = vpop.f32.mrb[0].mxu0
      %1203 = vmatprep.mubr.bf16.mxu0 0
      %1204 = vmatmul.mubr.bf16.gmra.mrb[0].mxu0 %v1042
      %v1205 = vpop.f32.mrb[0].mxu0
      %v1206 = vadd.f32 %v901, %v1205
      %v1207 = vpop.f32.mrb[0].mxu0
      %v1208 = vpop.f32.mrb[0].mxu0
      %v1209 = vadd.f32 %v904, %v1208
      %v1210 = vpop.f32.mrb[0].mxu0
      %1211 = vmatprep.mubr.bf16.mxu0 0
      %1212 = vmatmul.mubr.bf16.gmra.mrb[0].mxu0 %v1043
      %v1213 = vpop.f32.mrb[0].mxu0
      %v1214 = vadd.f32 %v909, %v1213
      %v1215 = vpop.f32.mrb[0].mxu0
      %v1216 = vpop.f32.mrb[0].mxu0
      %v1217 = vadd.f32 %v912, %v1216
      %v1218 = vpop.f32.mrb[0].mxu0
      %1219 = vmatprep.mubr.bf16.mxu0 0
      %1220 = vmatmul.mubr.bf16.gmra.mrb[0].mxu0 %v1044
      %v1221 = vpop.f32.mrb[0].mxu0
      %v1222 = vadd.f32 %v917, %v1221
      %v1223 = vpop.f32.mrb[0].mxu0
      %v1224 = vpop.f32.mrb[0].mxu0
      %v1225 = vadd.f32 %v920, %v1224
      %v1226 = vpop.f32.mrb[0].mxu0
      %1227 = vmatprep.mubr.bf16.mxu0 0
      %1228 = vmatmul.mubr.bf16.gmra.mrb[0].mxu0 %v1045
      %v1229 = vpop.f32.mrb[0].mxu0
      %v1230 = vadd.f32 %v925, %v1229
      %v1231 = vpop.f32.mrb[0].mxu0
      %v1232 = vpop.f32.mrb[0].mxu0
      %v1233 = vadd.f32 %v928, %v1232
      %v1234 = vpop.f32.mrb[0].mxu0
      %1235 = vmatprep.mubr.bf16.mxu0 0
      %1236 = vmatmul.mubr.bf16.gmra.mrb[0].mxu0 %v1046
      %v1237 = vpop.f32.mrb[0].mxu0
      %v1238 = vadd.f32 %v933, %v1237
      %v1239 = vpop.f32.mrb[0].mxu0
      %v1240 = vpop.f32.mrb[0].mxu0
      %v1241 = vadd.f32 %v936, %v1240
      %v1242 = vpop.f32.mrb[0].mxu0
      %1243 = vmatprep.mubr.bf16.mxu0 0
      %1244 = vmatmul.mubr.bf16.gmra.mrb[0].mxu0 %v1047
      %v1245 = vpop.f32.mrb[0].mxu0
      %v1246 = vadd.f32 %v941, %v1245
      %v1247 = vpop.f32.mrb[0].mxu0
      %v1248 = vpop.f32.mrb[0].mxu0
      %v1249 = vadd.f32 %v944, %v1248
      %v1250 = vpop.f32.mrb[0].mxu0
      %1251 = vmatprep.mubr.bf16.mxu0 0
      %1252 = vmatmul.mubr.bf16.gmra.mrb[0].mxu0 %v1048
      %v1253 = vpop.f32.mrb[0].mxu0
      %v1254 = vadd.f32 %v949, %v1253
      %v1255 = vpop.f32.mrb[0].mxu0
      %v1256 = vpop.f32.mrb[0].mxu0
      %v1257 = vadd.f32 %v952, %v1256
      %v1258 = vpop.f32.mrb[0].mxu0
      %1259 = vmatprep.mubr.bf16.mxu0 0
      %1260 = vmatmul.mubr.bf16.gmra.mrb[0].mxu0 %v1049
      %v1261 = vpop.f32.mrb[0].mxu0
      %v1262 = vadd.f32 %v957, %v1261
      %v1263 = vpop.f32.mrb[0].mxu0
      %v1264 = vpop.f32.mrb[0].mxu0
      %v1265 = vadd.f32 %v960, %v1264
      %v1266 = vpop.f32.mrb[0].mxu0
      %1267 = vmatprep.mubr.bf16.mxu0 0
      %1268 = vmatmul.mubr.bf16.gmra.mrb[0].mxu0 %v1050
      %v1269 = vpop.f32.mrb[0].mxu0
      %v1270 = vadd.f32 %v965, %v1269
      %v1271 = vpop.f32.mrb[0].mxu0
      %v1272 = vpop.f32.mrb[0].mxu0
      %v1273 = vadd.f32 %v968, %v1272
      %v1274 = vpop.f32.mrb[0].mxu0
      %1275 = vdwg.mxu0
      %v1276 = vld [vmem:[%s210] sm:$0xe]
      %v1277 = vld [vmem:[%s210 + $0xc] sm:$0xe]
      %v1278 = vld [vmem:[%s210 + $0x18] sm:$0xe]
      %v1279 = vld [vmem:[%s210 + $0x24] sm:$0xe]
      %v1280 = vld [vmem:[%s210 + $0x30] sm:$0xe]
      %v1281 = vld [vmem:[%s210 + $0x3c] sm:$0xe]
      %v1282 = vld [vmem:[%s210 + $0x48] sm:$0xe]
      %v1283 = vld [vmem:[%s210 + $0x54] sm:$0xe]
      %v1284 = vld [vmem:[%s210 + $0x60] sm:$0xe]
      %v1285 = vld [vmem:[%s210 + $0x6c] sm:$0xe]
      %v1286 = vld [vmem:[%s210 + $0x78] sm:$0xe]
      %v1287 = vld [vmem:[%s210 + $0x84] sm:$0xe]
      %v1288 = vld [vmem:[%s210 + $0x90] sm:$0xe]
      %v1289 = vld [vmem:[%s210 + $0x9c] sm:$0xe]
      %v1290 = vld [vmem:[%s210 + $0xa8] sm:$0xe]
      %v1291 = vld [vmem:[%s210 + $0xb4] sm:$0xe]
      %vm1324 = vcmask 1042432
      %vm1325 = vcmask 1046532
      %vm1326 = vmor %vm1324, %vm1325
      %v1327 = vrot.slane %v1276, 5
      %v1328 = vrot.slane %v1327, 4
      %v1329 = vrot.slane %v231, 5
      %v1330 = vsel %vm1326, %v1328, %v1329
      %v1331 = vrot.slane %v1329, 4
      %v1332 = vrot.slane %v278, 5
      %v1333 = vsel %vm1326, %v1331, %v1332
      %v1334 = vrot.slane %v1277, 5
      %v1335 = vrot.slane %v1334, 4
      %v1336 = vrot.slane %v233, 5
      %v1337 = vsel %vm1326, %v1335, %v1336
      %v1338 = vrot.slane %v1336, 4
      %v1339 = vrot.slane %v279, 5
      %v1340 = vsel %vm1326, %v1338, %v1339
      %v1341 = vrot.slane %v1278, 5
      %v1342 = vrot.slane %v1341, 4
      %v1343 = vrot.slane %v235, 5
      %v1344 = vsel %vm1326, %v1342, %v1343
      %v1345 = vrot.slane %v1343, 4
      %v1346 = vrot.slane %v280, 5
      %v1347 = vsel %vm1326, %v1345, %v1346
      %v1348 = vrot.slane %v1279, 5
      %v1349 = vrot.slane %v1348, 4
      %v1350 = vrot.slane %v237, 5
      %v1351 = vsel %vm1326, %v1349, %v1350
      %v1352 = vrot.slane %v1350, 4
      %v1353 = vrot.slane %v281, 5
      %v1354 = vsel %vm1326, %v1352, %v1353
      %v1355 = vrot.slane %v1280, 5
      %v1356 = vrot.slane %v1355, 4
      %v1357 = vrot.slane %v239, 5
      %v1358 = vsel %vm1326, %v1356, %v1357
      %v1359 = vrot.slane %v1357, 4
      %v1360 = vrot.slane %v282, 5
      %v1361 = vsel %vm1326, %v1359, %v1360
      %v1362 = vrot.slane %v1281, 5
      %v1363 = vrot.slane %v1362, 4
      %v1364 = vrot.slane %v241, 5
      %v1365 = vsel %vm1326, %v1363, %v1364
      %v1366 = vrot.slane %v1364, 4
      %v1367 = vrot.slane %v283, 5
      %v1368 = vsel %vm1326, %v1366, %v1367
      %v1369 = vrot.slane %v1282, 5
      %v1370 = vrot.slane %v1369, 4
      %v1371 = vrot.slane %v243, 5
      %v1372 = vsel %vm1326, %v1370, %v1371
      %v1373 = vrot.slane %v1371, 4
      %v1374 = vrot.slane %v284, 5
      %v1375 = vsel %vm1326, %v1373, %v1374
      %v1376 = vrot.slane %v1283, 5
      %v1377 = vrot.slane %v1376, 4
      %v1378 = vrot.slane %v245, 5
      %v1379 = vsel %vm1326, %v1377, %v1378
      %v1380 = vrot.slane %v1378, 4
      %v1381 = vrot.slane %v285, 5
      %v1382 = vsel %vm1326, %v1380, %v1381
      %v1383 = vrot.slane %v1284, 5
      %v1384 = vrot.slane %v1383, 4
      %v1385 = vrot.slane %v247, 5
      %v1386 = vsel %vm1326, %v1384, %v1385
      %v1387 = vrot.slane %v1385, 4
      %v1388 = vrot.slane %v286, 5
      %v1389 = vsel %vm1326, %v1387, %v1388
      %v1390 = vrot.slane %v1285, 5
      %v1391 = vrot.slane %v1390, 4
      %v1392 = vrot.slane %v249, 5
      %v1393 = vsel %vm1326, %v1391, %v1392
      %v1394 = vrot.slane %v1392, 4
      %v1395 = vrot.slane %v287, 5
      %v1396 = vsel %vm1326, %v1394, %v1395
      %v1397 = vrot.slane %v1286, 5
      %v1398 = vrot.slane %v1397, 4
      %v1399 = vrot.slane %v251, 5
      %v1400 = vsel %vm1326, %v1398, %v1399
      %v1401 = vrot.slane %v1399, 4
      %v1402 = vrot.slane %v288, 5
      %v1403 = vsel %vm1326, %v1401, %v1402
      %v1404 = vrot.slane %v1287, 5
      %v1405 = vrot.slane %v1404, 4
      %v1406 = vrot.slane %v253, 5
      %v1407 = vsel %vm1326, %v1405, %v1406
      %v1408 = vrot.slane %v1406, 4
      %v1409 = vrot.slane %v289, 5
      %v1410 = vsel %vm1326, %v1408, %v1409
      %v1411 = vrot.slane %v1288, 5
      %v1412 = vrot.slane %v1411, 4
      %v1413 = vrot.slane %v255, 5
      %v1414 = vsel %vm1326, %v1412, %v1413
      %v1415 = vrot.slane %v1413, 4
      %v1416 = vrot.slane %v290, 5
      %v1417 = vsel %vm1326, %v1415, %v1416
      %v1418 = vrot.slane %v1289, 5
      %v1419 = vrot.slane %v1418, 4
      %v1420 = vrot.slane %v257, 5
      %v1421 = vsel %vm1326, %v1419, %v1420
      %v1422 = vrot.slane %v1420, 4
      %v1423 = vrot.slane %v291, 5
      %v1424 = vsel %vm1326, %v1422, %v1423
      %v1425 = vrot.slane %v1290, 5
      %v1426 = vrot.slane %v1425, 4
      %v1427 = vrot.slane %v259, 5
      %v1428 = vsel %vm1326, %v1426, %v1427
      %v1429 = vrot.slane %v1427, 4
      %v1430 = vrot.slane %v292, 5
      %v1431 = vsel %vm1326, %v1429, %v1430
      %v1432 = vrot.slane %v1291, 5
      %v1433 = vrot.slane %v1432, 4
      %v1434 = vrot.slane %v261, 5
      %v1435 = vsel %vm1326, %v1433, %v1434
      %v1436 = vrot.slane %v1434, 4
      %v1437 = vrot.slane %v293, 5
      %v1438 = vsel %vm1326, %v1436, %v1437
      %s1439 = scalar_lea.vmem %s1, 128
      %v1440 = vld [vmem:[%s1439] sm:$0xf]
      %v1441 = vld [vmem:[%s1439 + $0x4] sm:$0xf]
      %v1442 = vld [vmem:[%s1439 + $0x8] sm:$0xf]
      %v1443 = vld [vmem:[%s1439 + $0xc] sm:$0xf]
      %v1444 = vld [vmem:[%s1439 + $0x10] sm:$0xf]
      %v1445 = vld [vmem:[%s1439 + $0x14] sm:$0xf]
      %v1446 = vld [vmem:[%s1439 + $0x18] sm:$0xf]
      %v1447 = vld [vmem:[%s1439 + $0x1c] sm:$0xf]
      %v1448 = vld [vmem:[%s1439 + $0x20] sm:$0xf]
      %v1449 = vld [vmem:[%s1439 + $0x24] sm:$0xf]
      %v1450 = vld [vmem:[%s1439 + $0x28] sm:$0xf]
      %v1451 = vld [vmem:[%s1439 + $0x2c] sm:$0xf]
      %v1452 = vld [vmem:[%s1439 + $0x30] sm:$0xf]
      %v1453 = vld [vmem:[%s1439 + $0x34] sm:$0xf]
      %v1454 = vld [vmem:[%s1439 + $0x38] sm:$0xf]
      %v1455 = vld [vmem:[%s1439 + $0x3c] sm:$0xf]
      %v1456 = vunpack.c.l.b16 %v1330
      %v1457 = vunpack.c.l.b16 %v1333
      %v1458 = vunpack.c.l.b16 %v1337
      %v1459 = vunpack.c.l.b16 %v1340
      %v1460 = vunpack.c.l.b16 %v1344
      %v1461 = vunpack.c.l.b16 %v1347
      %v1462 = vunpack.c.l.b16 %v1351
      %v1463 = vunpack.c.l.b16 %v1354
      %v1464 = vunpack.c.l.b16 %v1358
      %v1465 = vunpack.c.l.b16 %v1361
      %v1466 = vunpack.c.l.b16 %v1365
      %v1467 = vunpack.c.l.b16 %v1368
      %v1468 = vunpack.c.l.b16 %v1372
      %v1469 = vunpack.c.l.b16 %v1375
      %v1470 = vunpack.c.l.b16 %v1379
      %v1471 = vunpack.c.l.b16 %v1382
      %v1472 = vunpack.c.l.b16 %v1386
      %v1473 = vunpack.c.l.b16 %v1389
      %v1474 = vunpack.c.l.b16 %v1393
      %v1475 = vunpack.c.l.b16 %v1396
      %v1476 = vunpack.c.l.b16 %v1400
      %v1477 = vunpack.c.l.b16 %v1403
      %v1478 = vunpack.c.l.b16 %v1407
      %v1479 = vunpack.c.l.b16 %v1410
      %v1480 = vunpack.c.l.b16 %v1414
      %v1481 = vunpack.c.l.b16 %v1417
      %v1482 = vunpack.c.l.b16 %v1421
      %v1483 = vunpack.c.l.b16 %v1424
      %v1484 = vunpack.c.l.b16 %v1428
      %v1485 = vunpack.c.l.b16 %v1431
      %v1486 = vunpack.c.l.b16 %v1435
      %v1487 = vunpack.c.l.b16 %v1438
      %v1488 = vpack.c.b16 %v1457, %v1456
      %v1489 = vpack.c.b16 %v1459, %v1458
      %v1490 = vpack.c.b16 %v1461, %v1460
      %v1491 = vpack.c.b16 %v1463, %v1462
      %v1492 = vpack.c.b16 %v1465, %v1464
      %v1493 = vpack.c.b16 %v1467, %v1466
      %v1494 = vpack.c.b16 %v1469, %v1468
      %v1495 = vpack.c.b16 %v1471, %v1470
      %v1496 = vpack.c.b16 %v1473, %v1472
      %v1497 = vpack.c.b16 %v1475, %v1474
      %v1498 = vpack.c.b16 %v1477, %v1476
      %v1499 = vpack.c.b16 %v1479, %v1478
      %v1500 = vpack.c.b16 %v1481, %v1480
      %v1501 = vpack.c.b16 %v1483, %v1482
      %v1502 = vpack.c.b16 %v1485, %v1484
      %v1503 = vpack.c.b16 %v1487, %v1486
      %v1536 = vunpack.c.l.b16 %v1440
      %v1537 = vunpack.c.l.b16 %v1441
      %v1538 = vunpack.c.l.b16 %v1442
      %v1539 = vunpack.c.l.b16 %v1443
      %v1540 = vunpack.c.l.b16 %v1444
      %v1541 = vunpack.c.l.b16 %v1445
      %v1542 = vunpack.c.l.b16 %v1446
      %v1543 = vunpack.c.l.b16 %v1447
      %v1544 = vunpack.c.l.b16 %v1448
      %v1545 = vunpack.c.l.b16 %v1449
      %v1546 = vunpack.c.l.b16 %v1450
      %v1547 = vunpack.c.l.b16 %v1451
      %v1548 = vunpack.c.l.b16 %v1452
      %v1549 = vunpack.c.l.b16 %v1453
      %v1550 = vunpack.c.l.b16 %v1454
      %v1551 = vunpack.c.l.b16 %v1455
      %v1552 = vpack.c.b16 %v1537, %v1536
      %v1553 = vpack.c.b16 %v1539, %v1538
      %v1554 = vpack.c.b16 %v1541, %v1540
      %v1555 = vpack.c.b16 %v1543, %v1542
      %v1556 = vpack.c.b16 %v1545, %v1544
      %v1557 = vpack.c.b16 %v1547, %v1546
      %v1558 = vpack.c.b16 %v1549, %v1548
      %v1559 = vpack.c.b16 %v1551, %v1550
      %1568 = vmatprep.subr.bf16.mxu0 0
      %1569 = vmatpush1.bf16.msra.mxu0 %v1552
      %1570 = vmatprep.subr.bf16.mxu0 0
      %1571 = vmatpush1.bf16.msra.mxu0 %v1553
      %1572 = vmatprep.subr.bf16.mxu0 0
      %1573 = vmatpush1.bf16.msra.mxu0 %v1554
      %1574 = vmatprep.subr.bf16.mxu0 0
      %1575 = vmatpush1.bf16.msra.mxu0 %v1555
      %1576 = vmatprep.subr.bf16.mxu0 0
      %1577 = vmatpush1.bf16.msra.mxu0 %v1556
      %1578 = vmatprep.subr.bf16.mxu0 0
      %1579 = vmatpush1.bf16.msra.mxu0 %v1557
      %1580 = vmatprep.subr.bf16.mxu0 0
      %1581 = vmatpush1.bf16.msra.mxu0 %v1558
      %1582 = vmatprep.subr.bf16.mxu0 0
      %1583 = vmatpush1.bf16.msra.mxu0 %v1559
      %1584 = vmatprep.subr.bf16.mxu0 0
      %1585 = vmatpush1.bf16.msra.mxu0 0
      %1586 = vmatprep.subr.bf16.mxu0 0
      %1587 = vmatpush1.bf16.msra.mxu0 0
      %1588 = vmatprep.subr.bf16.mxu0 0
      %1589 = vmatpush1.bf16.msra.mxu0 0
      %1590 = vmatprep.subr.bf16.mxu0 0
      %1591 = vmatpush1.bf16.msra.mxu0 0
      %1592 = vmatprep.subr.bf16.mxu0 0
      %1593 = vmatpush1.bf16.msra.mxu0 0
      %1594 = vmatprep.subr.bf16.mxu0 0
      %1595 = vmatpush1.bf16.msra.mxu0 0
      %1596 = vmatprep.subr.bf16.mxu0 0
      %1597 = vmatpush1.bf16.msra.mxu0 0
      %1598 = vmatprep.subr.bf16.mxu0 0
      %1599 = vmatpush1.bf16.msra.mxu0 0
      %1600 = vmatprep.mubr.bf16.mxu0 0
      %1601 = vmatmul.mubr.bf16.gmra.mrb[0].mxu0 %v1488
      %v1602 = vpop.f32.mrb[0].mxu0
      %v1603 = vadd.f32 0.0, %v1602
      %v1604 = vpop.f32.mrb[0].mxu0
      %v1605 = vpop.f32.mrb[0].mxu0
      %v1606 = vadd.f32 0.0, %v1605
      %v1607 = vpop.f32.mrb[0].mxu0
      %1608 = vmatprep.mubr.bf16.mxu0 0
      %1609 = vmatmul.mubr.bf16.gmra.mrb[0].mxu0 %v1489
      %v1610 = vpop.f32.mrb[0].mxu0
      %v1611 = vadd.f32 0.0, %v1610
      %v1612 = vpop.f32.mrb[0].mxu0
      %v1613 = vpop.f32.mrb[0].mxu0
      %v1614 = vadd.f32 0.0, %v1613
      %v1615 = vpop.f32.mrb[0].mxu0
      %1616 = vmatprep.mubr.bf16.mxu0 0
      %1617 = vmatmul.mubr.bf16.gmra.mrb[0].mxu0 %v1490
      %v1618 = vpop.f32.mrb[0].mxu0
      %v1619 = vadd.f32 0.0, %v1618
      %v1620 = vpop.f32.mrb[0].mxu0
      %v1621 = vpop.f32.mrb[0].mxu0
      %v1622 = vadd.f32 0.0, %v1621
      %v1623 = vpop.f32.mrb[0].mxu0
      %1624 = vmatprep.mubr.bf16.mxu0 0
      %1625 = vmatmul.mubr.bf16.gmra.mrb[0].mxu0 %v1491
      %v1626 = vpop.f32.mrb[0].mxu0
      %v1627 = vadd.f32 0.0, %v1626
      %v1628 = vpop.f32.mrb[0].mxu0
      %v1629 = vpop.f32.mrb[0].mxu0
      %v1630 = vadd.f32 0.0, %v1629
      %v1631 = vpop.f32.mrb[0].mxu0
      %1632 = vmatprep.mubr.bf16.mxu0 0
      %1633 = vmatmul.mubr.bf16.gmra.mrb[0].mxu0 %v1492
      %v1634 = vpop.f32.mrb[0].mxu0
      %v1635 = vadd.f32 0.0, %v1634
      %v1636 = vpop.f32.mrb[0].mxu0
      %v1637 = vpop.f32.mrb[0].mxu0
      %v1638 = vadd.f32 0.0, %v1637
      %v1639 = vpop.f32.mrb[0].mxu0
      %1640 = vmatprep.mubr.bf16.mxu0 0
      %1641 = vmatmul.mubr.bf16.gmra.mrb[0].mxu0 %v1493
      %v1642 = vpop.f32.mrb[0].mxu0
      %v1643 = vadd.f32 0.0, %v1642
      %v1644 = vpop.f32.mrb[0].mxu0
      %v1645 = vpop.f32.mrb[0].mxu0
      %v1646 = vadd.f32 0.0, %v1645
      %v1647 = vpop.f32.mrb[0].mxu0
      %1648 = vmatprep.mubr.bf16.mxu0 0
      %1649 = vmatmul.mubr.bf16.gmra.mrb[0].mxu0 %v1494
      %v1650 = vpop.f32.mrb[0].mxu0
      %v1651 = vadd.f32 0.0, %v1650
      %v1652 = vpop.f32.mrb[0].mxu0
      %v1653 = vpop.f32.mrb[0].mxu0
      %v1654 = vadd.f32 0.0, %v1653
      %v1655 = vpop.f32.mrb[0].mxu0
      %1656 = vmatprep.mubr.bf16.mxu0 0
      %1657 = vmatmul.mubr.bf16.gmra.mrb[0].mxu0 %v1495
      %v1658 = vpop.f32.mrb[0].mxu0
      %v1659 = vadd.f32 0.0, %v1658
      %v1660 = vpop.f32.mrb[0].mxu0
      %v1661 = vpop.f32.mrb[0].mxu0
      %v1662 = vadd.f32 0.0, %v1661
      %v1663 = vpop.f32.mrb[0].mxu0
      %1664 = vmatprep.mubr.bf16.mxu0 0
      %1665 = vmatmul.mubr.bf16.gmra.mrb[0].mxu0 %v1496
      %v1666 = vpop.f32.mrb[0].mxu0
      %v1667 = vadd.f32 0.0, %v1666
      %v1668 = vpop.f32.mrb[0].mxu0
      %v1669 = vpop.f32.mrb[0].mxu0
      %v1670 = vadd.f32 0.0, %v1669
      %v1671 = vpop.f32.mrb[0].mxu0
      %1672 = vmatprep.mubr.bf16.mxu0 0
      %1673 = vmatmul.mubr.bf16.gmra.mrb[0].mxu0 %v1497
      %v1674 = vpop.f32.mrb[0].mxu0
      %v1675 = vadd.f32 0.0, %v1674
      %v1676 = vpop.f32.mrb[0].mxu0
      %v1677 = vpop.f32.mrb[0].mxu0
      %v1678 = vadd.f32 0.0, %v1677
      %v1679 = vpop.f32.mrb[0].mxu0
      %1680 = vmatprep.mubr.bf16.mxu0 0
      %1681 = vmatmul.mubr.bf16.gmra.mrb[0].mxu0 %v1498
      %v1682 = vpop.f32.mrb[0].mxu0
      %v1683 = vadd.f32 0.0, %v1682
      %v1684 = vpop.f32.mrb[0].mxu0
      %v1685 = vpop.f32.mrb[0].mxu0
      %v1686 = vadd.f32 0.0, %v1685
      %v1687 = vpop.f32.mrb[0].mxu0
      %1688 = vmatprep.mubr.bf16.mxu0 0
      %1689 = vmatmul.mubr.bf16.gmra.mrb[0].mxu0 %v1499
      %v1690 = vpop.f32.mrb[0].mxu0
      %v1691 = vadd.f32 0.0, %v1690
      %v1692 = vpop.f32.mrb[0].mxu0
      %v1693 = vpop.f32.mrb[0].mxu0
      %v1694 = vadd.f32 0.0, %v1693
      %v1695 = vpop.f32.mrb[0].mxu0
      %1696 = vmatprep.mubr.bf16.mxu0 0
      %1697 = vmatmul.mubr.bf16.gmra.mrb[0].mxu0 %v1500
      %v1698 = vpop.f32.mrb[0].mxu0
      %v1699 = vadd.f32 0.0, %v1698
      %v1700 = vpop.f32.mrb[0].mxu0
      %v1701 = vpop.f32.mrb[0].mxu0
      %v1702 = vadd.f32 0.0, %v1701
      %v1703 = vpop.f32.mrb[0].mxu0
      %1704 = vmatprep.mubr.bf16.mxu0 0
      %1705 = vmatmul.mubr.bf16.gmra.mrb[0].mxu0 %v1501
      %v1706 = vpop.f32.mrb[0].mxu0
      %v1707 = vadd.f32 0.0, %v1706
      %v1708 = vpop.f32.mrb[0].mxu0
      %v1709 = vpop.f32.mrb[0].mxu0
      %v1710 = vadd.f32 0.0, %v1709
      %v1711 = vpop.f32.mrb[0].mxu0
      %1712 = vmatprep.mubr.bf16.mxu0 0
      %1713 = vmatmul.mubr.bf16.gmra.mrb[0].mxu0 %v1502
      %v1714 = vpop.f32.mrb[0].mxu0
      %v1715 = vadd.f32 0.0, %v1714
      %v1716 = vpop.f32.mrb[0].mxu0
      %v1717 = vpop.f32.mrb[0].mxu0
      %v1718 = vadd.f32 0.0, %v1717
      %v1719 = vpop.f32.mrb[0].mxu0
      %1720 = vmatprep.mubr.bf16.mxu0 0
      %1721 = vmatmul.mubr.bf16.gmra.mrb[0].mxu0 %v1503
      %v1722 = vpop.f32.mrb[0].mxu0
      %v1723 = vadd.f32 0.0, %v1722
      %v1724 = vpop.f32.mrb[0].mxu0
      %v1725 = vpop.f32.mrb[0].mxu0
      %v1726 = vadd.f32 0.0, %v1725
      %v1727 = vpop.f32.mrb[0].mxu0
      %1728 = vdwg.mxu0
      %v1729 = vadd.f32 %v1150, %v1603
      %v1730 = vadd.f32 %v1153, %v1606
      %v1731 = vadd.f32 %v1158, %v1611
      %v1732 = vadd.f32 %v1161, %v1614
      %v1733 = vadd.f32 %v1166, %v1619
      %v1734 = vadd.f32 %v1169, %v1622
      %v1735 = vadd.f32 %v1174, %v1627
      %v1736 = vadd.f32 %v1177, %v1630
      %v1737 = vadd.f32 %v1182, %v1635
      %v1738 = vadd.f32 %v1185, %v1638
      %v1739 = vadd.f32 %v1190, %v1643
      %v1740 = vadd.f32 %v1193, %v1646
      %v1741 = vadd.f32 %v1198, %v1651
      %v1742 = vadd.f32 %v1201, %v1654
      %v1743 = vadd.f32 %v1206, %v1659
      %v1744 = vadd.f32 %v1209, %v1662
      %v1745 = vadd.f32 %v1214, %v1667
      %v1746 = vadd.f32 %v1217, %v1670
      %v1747 = vadd.f32 %v1222, %v1675
      %v1748 = vadd.f32 %v1225, %v1678
      %v1749 = vadd.f32 %v1230, %v1683
      %v1750 = vadd.f32 %v1233, %v1686
      %v1751 = vadd.f32 %v1238, %v1691
      %v1752 = vadd.f32 %v1241, %v1694
      %v1753 = vadd.f32 %v1246, %v1699
      %v1754 = vadd.f32 %v1249, %v1702
      %v1755 = vadd.f32 %v1254, %v1707
      %v1756 = vadd.f32 %v1257, %v1710
      %v1757 = vadd.f32 %v1262, %v1715
      %v1758 = vadd.f32 %v1265, %v1718
      %v1759 = vadd.f32 %v1270, %v1723
      %v1760 = vadd.f32 %v1273, %v1726
      %s1761 = scalar_lea.vmem %s210, 12
      %v1762 = vld [vmem:[%s1761] sm:$0xf]
      %v1763 = vld [vmem:[%s1761 + $0x4] sm:$0xf]
      %v1764 = vld [vmem:[%s1761 + $0xc] sm:$0xf]
      %v1765 = vld [vmem:[%s1761 + $0x10] sm:$0xf]
      %v1766 = vld [vmem:[%s1761 + $0x18] sm:$0xf]
      %v1767 = vld [vmem:[%s1761 + $0x1c] sm:$0xf]
      %v1768 = vld [vmem:[%s1761 + $0x24] sm:$0xf]
      %v1769 = vld [vmem:[%s1761 + $0x28] sm:$0xf]
      %v1770 = vld [vmem:[%s1761 + $0x30] sm:$0xf]
      %v1771 = vld [vmem:[%s1761 + $0x34] sm:$0xf]
      %v1772 = vld [vmem:[%s1761 + $0x3c] sm:$0xf]
      %v1773 = vld [vmem:[%s1761 + $0x40] sm:$0xf]
      %v1774 = vld [vmem:[%s1761 + $0x48] sm:$0xf]
      %v1775 = vld [vmem:[%s1761 + $0x4c] sm:$0xf]
      %v1776 = vld [vmem:[%s1761 + $0x54] sm:$0xf]
      %v1777 = vld [vmem:[%s1761 + $0x58] sm:$0xf]
      %v1778 = vld [vmem:[%s1761 + $0x60] sm:$0xf]
      %v1779 = vld [vmem:[%s1761 + $0x64] sm:$0xf]
      %v1780 = vld [vmem:[%s1761 + $0x6c] sm:$0xf]
      %v1781 = vld [vmem:[%s1761 + $0x70] sm:$0xf]
      %v1782 = vld [vmem:[%s1761 + $0x78] sm:$0xf]
      %v1783 = vld [vmem:[%s1761 + $0x7c] sm:$0xf]
      %v1784 = vld [vmem:[%s1761 + $0x84] sm:$0xf]
      %v1785 = vld [vmem:[%s1761 + $0x88] sm:$0xf]
      %v1786 = vld [vmem:[%s1761 + $0x90] sm:$0xf]
      %v1787 = vld [vmem:[%s1761 + $0x94] sm:$0xf]
      %v1788 = vld [vmem:[%s1761 + $0x9c] sm:$0xf]
      %v1789 = vld [vmem:[%s1761 + $0xa0] sm:$0xf]
      %v1790 = vld [vmem:[%s1761 + $0xa8] sm:$0xf]
      %v1791 = vld [vmem:[%s1761 + $0xac] sm:$0xf]
      %v1792 = vld [vmem:[%s1761 + $0xb4] sm:$0xf]
      %v1793 = vld [vmem:[%s1761 + $0xb8] sm:$0xf]
      %s1794 = scalar_lea.vmem %s1, 192
      %v1795 = vld [vmem:[%s1794] sm:$0xf]
      %v1796 = vld [vmem:[%s1794 + $0x4] sm:$0xf]
      %v1797 = vld [vmem:[%s1794 + $0x8] sm:$0xf]
      %v1798 = vld [vmem:[%s1794 + $0xc] sm:$0xf]
      %v1799 = vld [vmem:[%s1794 + $0x10] sm:$0xf]
      %v1800 = vld [vmem:[%s1794 + $0x14] sm:$0xf]
      %v1801 = vld [vmem:[%s1794 + $0x18] sm:$0xf]
      %v1802 = vld [vmem:[%s1794 + $0x1c] sm:$0xf]
      %v1803 = vld [vmem:[%s1794 + $0x20] sm:$0xf]
      %v1804 = vld [vmem:[%s1794 + $0x24] sm:$0xf]
      %v1805 = vld [vmem:[%s1794 + $0x28] sm:$0xf]
      %v1806 = vld [vmem:[%s1794 + $0x2c] sm:$0xf]
      %v1807 = vld [vmem:[%s1794 + $0x30] sm:$0xf]
      %v1808 = vld [vmem:[%s1794 + $0x34] sm:$0xf]
      %v1809 = vld [vmem:[%s1794 + $0x38] sm:$0xf]
      %v1810 = vld [vmem:[%s1794 + $0x3c] sm:$0xf]
      %v1843 = vunpack.c.l.b16 %v1762
      %v1844 = vunpack.c.l.b16 %v1763
      %v1845 = vunpack.c.l.b16 %v1764
      %v1846 = vunpack.c.l.b16 %v1765
      %v1847 = vunpack.c.l.b16 %v1766
      %v1848 = vunpack.c.l.b16 %v1767
      %v1849 = vunpack.c.l.b16 %v1768
      %v1850 = vunpack.c.l.b16 %v1769
      %v1851 = vunpack.c.l.b16 %v1770
      %v1852 = vunpack.c.l.b16 %v1771
      %v1853 = vunpack.c.l.b16 %v1772
      %v1854 = vunpack.c.l.b16 %v1773
      %v1855 = vunpack.c.l.b16 %v1774
      %v1856 = vunpack.c.l.b16 %v1775
      %v1857 = vunpack.c.l.b16 %v1776
      %v1858 = vunpack.c.l.b16 %v1777
      %v1859 = vunpack.c.l.b16 %v1778
      %v1860 = vunpack.c.l.b16 %v1779
      %v1861 = vunpack.c.l.b16 %v1780
      %v1862 = vunpack.c.l.b16 %v1781
      %v1863 = vunpack.c.l.b16 %v1782
      %v1864 = vunpack.c.l.b16 %v1783
      %v1865 = vunpack.c.l.b16 %v1784
      %v1866 = vunpack.c.l.b16 %v1785
      %v1867 = vunpack.c.l.b16 %v1786
      %v1868 = vunpack.c.l.b16 %v1787
      %v1869 = vunpack.c.l.b16 %v1788
      %v1870 = vunpack.c.l.b16 %v1789
      %v1871 = vunpack.c.l.b16 %v1790
      %v1872 = vunpack.c.l.b16 %v1791
      %v1873 = vunpack.c.l.b16 %v1792
      %v1874 = vunpack.c.l.b16 %v1793
      %v1875 = vpack.c.b16 %v1844, %v1843
      %v1876 = vpack.c.b16 %v1846, %v1845
      %v1877 = vpack.c.b16 %v1848, %v1847
      %v1878 = vpack.c.b16 %v1850, %v1849
      %v1879 = vpack.c.b16 %v1852, %v1851
      %v1880 = vpack.c.b16 %v1854, %v1853
      %v1881 = vpack.c.b16 %v1856, %v1855
      %v1882 = vpack.c.b16 %v1858, %v1857
      %v1883 = vpack.c.b16 %v1860, %v1859
      %v1884 = vpack.c.b16 %v1862, %v1861
      %v1885 = vpack.c.b16 %v1864, %v1863
      %v1886 = vpack.c.b16 %v1866, %v1865
      %v1887 = vpack.c.b16 %v1868, %v1867
      %v1888 = vpack.c.b16 %v1870, %v1869
      %v1889 = vpack.c.b16 %v1872, %v1871
      %v1890 = vpack.c.b16 %v1874, %v1873
      %v1923 = vunpack.c.l.b16 %v1795
      %v1924 = vunpack.c.l.b16 %v1796
      %v1925 = vunpack.c.l.b16 %v1797
      %v1926 = vunpack.c.l.b16 %v1798
      %v1927 = vunpack.c.l.b16 %v1799
      %v1928 = vunpack.c.l.b16 %v1800
      %v1929 = vunpack.c.l.b16 %v1801
      %v1930 = vunpack.c.l.b16 %v1802
      %v1931 = vunpack.c.l.b16 %v1803
      %v1932 = vunpack.c.l.b16 %v1804
      %v1933 = vunpack.c.l.b16 %v1805
      %v1934 = vunpack.c.l.b16 %v1806
      %v1935 = vunpack.c.l.b16 %v1807
      %v1936 = vunpack.c.l.b16 %v1808
      %v1937 = vunpack.c.l.b16 %v1809
      %v1938 = vunpack.c.l.b16 %v1810
      %v1939 = vpack.c.b16 %v1924, %v1923
      %v1940 = vpack.c.b16 %v1926, %v1925
      %v1941 = vpack.c.b16 %v1928, %v1927
      %v1942 = vpack.c.b16 %v1930, %v1929
      %v1943 = vpack.c.b16 %v1932, %v1931
      %v1944 = vpack.c.b16 %v1934, %v1933
      %v1945 = vpack.c.b16 %v1936, %v1935
      %v1946 = vpack.c.b16 %v1938, %v1937
      %1955 = vmatprep.subr.bf16.mxu0 0
      %1956 = vmatpush1.bf16.msra.mxu0 %v1939
      %1957 = vmatprep.subr.bf16.mxu0 0
      %1958 = vmatpush1.bf16.msra.mxu0 %v1940
      %1959 = vmatprep.subr.bf16.mxu0 0
      %1960 = vmatpush1.bf16.msra.mxu0 %v1941
      %1961 = vmatprep.subr.bf16.mxu0 0
      %1962 = vmatpush1.bf16.msra.mxu0 %v1942
      %1963 = vmatprep.subr.bf16.mxu0 0
      %1964 = vmatpush1.bf16.msra.mxu0 %v1943
      %1965 = vmatprep.subr.bf16.mxu0 0
      %1966 = vmatpush1.bf16.msra.mxu0 %v1944
      %1967 = vmatprep.subr.bf16.mxu0 0
      %1968 = vmatpush1.bf16.msra.mxu0 %v1945
      %1969 = vmatprep.subr.bf16.mxu0 0
      %1970 = vmatpush1.bf16.msra.mxu0 %v1946
      %1971 = vmatprep.subr.bf16.mxu0 0
      %1972 = vmatpush1.bf16.msra.mxu0 0
      %1973 = vmatprep.subr.bf16.mxu0 0
      %1974 = vmatpush1.bf16.msra.mxu0 0
      %1975 = vmatprep.subr.bf16.mxu0 0
      %1976 = vmatpush1.bf16.msra.mxu0 0
      %1977 = vmatprep.subr.bf16.mxu0 0
      %1978 = vmatpush1.bf16.msra.mxu0 0
      %1979 = vmatprep.subr.bf16.mxu0 0
      %1980 = vmatpush1.bf16.msra.mxu0 0
      %1981 = vmatprep.subr.bf16.mxu0 0
      %1982 = vmatpush1.bf16.msra.mxu0 0
      %1983 = vmatprep.subr.bf16.mxu0 0
      %1984 = vmatpush1.bf16.msra.mxu0 0
      %1985 = vmatprep.subr.bf16.mxu0 0
      %1986 = vmatpush1.bf16.msra.mxu0 0
      %1987 = vmatprep.mubr.bf16.mxu0 0
      %1988 = vmatmul.mubr.bf16.gmra.mrb[0].mxu0 %v1875
      %v1989 = vpop.f32.mrb[0].mxu0
      %v1990 = vadd.f32 0.0, %v1989
      %v1991 = vpop.f32.mrb[0].mxu0
      %v1992 = vpop.f32.mrb[0].mxu0
      %v1993 = vadd.f32 0.0, %v1992
      %v1994 = vpop.f32.mrb[0].mxu0
      %1995 = vmatprep.mubr.bf16.mxu0 0
      %1996 = vmatmul.mubr.bf16.gmra.mrb[0].mxu0 %v1876
      %v1997 = vpop.f32.mrb[0].mxu0
      %v1998 = vadd.f32 0.0, %v1997
      %v1999 = vpop.f32.mrb[0].mxu0
      %v2000 = vpop.f32.mrb[0].mxu0
      %v2001 = vadd.f32 0.0, %v2000
      %v2002 = vpop.f32.mrb[0].mxu0
      %2003 = vmatprep.mubr.bf16.mxu0 0
      %2004 = vmatmul.mubr.bf16.gmra.mrb[0].mxu0 %v1877
      %v2005 = vpop.f32.mrb[0].mxu0
      %v2006 = vadd.f32 0.0, %v2005
      %v2007 = vpop.f32.mrb[0].mxu0
      %v2008 = vpop.f32.mrb[0].mxu0
      %v2009 = vadd.f32 0.0, %v2008
      %v2010 = vpop.f32.mrb[0].mxu0
      %2011 = vmatprep.mubr.bf16.mxu0 0
      %2012 = vmatmul.mubr.bf16.gmra.mrb[0].mxu0 %v1878
      %v2013 = vpop.f32.mrb[0].mxu0
      %v2014 = vadd.f32 0.0, %v2013
      %v2015 = vpop.f32.mrb[0].mxu0
      %v2016 = vpop.f32.mrb[0].mxu0
      %v2017 = vadd.f32 0.0, %v2016
      %v2018 = vpop.f32.mrb[0].mxu0
      %2019 = vmatprep.mubr.bf16.mxu0 0
      %2020 = vmatmul.mubr.bf16.gmra.mrb[0].mxu0 %v1879
      %v2021 = vpop.f32.mrb[0].mxu0
      %v2022 = vadd.f32 0.0, %v2021
      %v2023 = vpop.f32.mrb[0].mxu0
      %v2024 = vpop.f32.mrb[0].mxu0
      %v2025 = vadd.f32 0.0, %v2024
      %v2026 = vpop.f32.mrb[0].mxu0
      %2027 = vmatprep.mubr.bf16.mxu0 0
      %2028 = vmatmul.mubr.bf16.gmra.mrb[0].mxu0 %v1880
      %v2029 = vpop.f32.mrb[0].mxu0
      %v2030 = vadd.f32 0.0, %v2029
      %v2031 = vpop.f32.mrb[0].mxu0
      %v2032 = vpop.f32.mrb[0].mxu0
      %v2033 = vadd.f32 0.0, %v2032
      %v2034 = vpop.f32.mrb[0].mxu0
      %2035 = vmatprep.mubr.bf16.mxu0 0
      %2036 = vmatmul.mubr.bf16.gmra.mrb[0].mxu0 %v1881
      %v2037 = vpop.f32.mrb[0].mxu0
      %v2038 = vadd.f32 0.0, %v2037
      %v2039 = vpop.f32.mrb[0].mxu0
      %v2040 = vpop.f32.mrb[0].mxu0
      %v2041 = vadd.f32 0.0, %v2040
      %v2042 = vpop.f32.mrb[0].mxu0
      %2043 = vmatprep.mubr.bf16.mxu0 0
      %2044 = vmatmul.mubr.bf16.gmra.mrb[0].mxu0 %v1882
      %v2045 = vpop.f32.mrb[0].mxu0
      %v2046 = vadd.f32 0.0, %v2045
      %v2047 = vpop.f32.mrb[0].mxu0
      %v2048 = vpop.f32.mrb[0].mxu0
      %v2049 = vadd.f32 0.0, %v2048
      %v2050 = vpop.f32.mrb[0].mxu0
      %2051 = vmatprep.mubr.bf16.mxu0 0
      %2052 = vmatmul.mubr.bf16.gmra.mrb[0].mxu0 %v1883
      %v2053 = vpop.f32.mrb[0].mxu0
      %v2054 = vadd.f32 0.0, %v2053
      %v2055 = vpop.f32.mrb[0].mxu0
      %v2056 = vpop.f32.mrb[0].mxu0
      %v2057 = vadd.f32 0.0, %v2056
      %v2058 = vpop.f32.mrb[0].mxu0
      %2059 = vmatprep.mubr.bf16.mxu0 0
      %2060 = vmatmul.mubr.bf16.gmra.mrb[0].mxu0 %v1884
      %v2061 = vpop.f32.mrb[0].mxu0
      %v2062 = vadd.f32 0.0, %v2061
      %v2063 = vpop.f32.mrb[0].mxu0
      %v2064 = vpop.f32.mrb[0].mxu0
      %v2065 = vadd.f32 0.0, %v2064
      %v2066 = vpop.f32.mrb[0].mxu0
      %2067 = vmatprep.mubr.bf16.mxu0 0
      %2068 = vmatmul.mubr.bf16.gmra.mrb[0].mxu0 %v1885
      %v2069 = vpop.f32.mrb[0].mxu0
      %v2070 = vadd.f32 0.0, %v2069
      %v2071 = vpop.f32.mrb[0].mxu0
      %v2072 = vpop.f32.mrb[0].mxu0
      %v2073 = vadd.f32 0.0, %v2072
      %v2074 = vpop.f32.mrb[0].mxu0
      %2075 = vmatprep.mubr.bf16.mxu0 0
      %2076 = vmatmul.mubr.bf16.gmra.mrb[0].mxu0 %v1886
      %v2077 = vpop.f32.mrb[0].mxu0
      %v2078 = vadd.f32 0.0, %v2077
      %v2079 = vpop.f32.mrb[0].mxu0
      %v2080 = vpop.f32.mrb[0].mxu0
      %v2081 = vadd.f32 0.0, %v2080
      %v2082 = vpop.f32.mrb[0].mxu0
      %2083 = vmatprep.mubr.bf16.mxu0 0
      %2084 = vmatmul.mubr.bf16.gmra.mrb[0].mxu0 %v1887
      %v2085 = vpop.f32.mrb[0].mxu0
      %v2086 = vadd.f32 0.0, %v2085
      %v2087 = vpop.f32.mrb[0].mxu0
      %v2088 = vpop.f32.mrb[0].mxu0
      %v2089 = vadd.f32 0.0, %v2088
      %v2090 = vpop.f32.mrb[0].mxu0
      %2091 = vmatprep.mubr.bf16.mxu0 0
      %2092 = vmatmul.mubr.bf16.gmra.mrb[0].mxu0 %v1888
      %v2093 = vpop.f32.mrb[0].mxu0
      %v2094 = vadd.f32 0.0, %v2093
      %v2095 = vpop.f32.mrb[0].mxu0
      %v2096 = vpop.f32.mrb[0].mxu0
      %v2097 = vadd.f32 0.0, %v2096
      %v2098 = vpop.f32.mrb[0].mxu0
      %2099 = vmatprep.mubr.bf16.mxu0 0
      %2100 = vmatmul.mubr.bf16.gmra.mrb[0].mxu0 %v1889
      %v2101 = vpop.f32.mrb[0].mxu0
      %v2102 = vadd.f32 0.0, %v2101
      %v2103 = vpop.f32.mrb[0].mxu0
      %v2104 = vpop.f32.mrb[0].mxu0
      %v2105 = vadd.f32 0.0, %v2104
      %v2106 = vpop.f32.mrb[0].mxu0
      %2107 = vmatprep.mubr.bf16.mxu0 0
      %2108 = vmatmul.mubr.bf16.gmra.mrb[0].mxu0 %v1890
      %v2109 = vpop.f32.mrb[0].mxu0
      %v2110 = vadd.f32 0.0, %v2109
      %v2111 = vpop.f32.mrb[0].mxu0
      %v2112 = vpop.f32.mrb[0].mxu0
      %v2113 = vadd.f32 0.0, %v2112
      %v2114 = vpop.f32.mrb[0].mxu0
      %2115 = vdwg.mxu0
      %v2116 = vadd.f32 %v1729, %v1990
      %v2117 = vadd.f32 %v1730, %v1993
      %v2118 = vadd.f32 %v1731, %v1998
      %v2119 = vadd.f32 %v1732, %v2001
      %v2120 = vadd.f32 %v1733, %v2006
      %v2121 = vadd.f32 %v1734, %v2009
      %v2122 = vadd.f32 %v1735, %v2014
      %v2123 = vadd.f32 %v1736, %v2017
      %v2124 = vadd.f32 %v1737, %v2022
      %v2125 = vadd.f32 %v1738, %v2025
      %v2126 = vadd.f32 %v1739, %v2030
      %v2127 = vadd.f32 %v1740, %v2033
      %v2128 = vadd.f32 %v1741, %v2038
      %v2129 = vadd.f32 %v1742, %v2041
      %v2130 = vadd.f32 %v1743, %v2046
      %v2131 = vadd.f32 %v1744, %v2049
      %v2132 = vadd.f32 %v1745, %v2054
      %v2133 = vadd.f32 %v1746, %v2057
      %v2134 = vadd.f32 %v1747, %v2062
      %v2135 = vadd.f32 %v1748, %v2065
      %v2136 = vadd.f32 %v1749, %v2070
      %v2137 = vadd.f32 %v1750, %v2073
      %v2138 = vadd.f32 %v1751, %v2078
      %v2139 = vadd.f32 %v1752, %v2081
      %v2140 = vadd.f32 %v1753, %v2086
      %v2141 = vadd.f32 %v1754, %v2089
      %v2142 = vadd.f32 %v1755, %v2094
      %v2143 = vadd.f32 %v1756, %v2097
      %v2144 = vadd.f32 %v1757, %v2102
      %v2145 = vadd.f32 %v1758, %v2105
      %v2146 = vadd.f32 %v1759, %v2110
      %v2147 = vadd.f32 %v1760, %v2113
      %v2148 = vld [vmem:[%s1761] sm:$0xf]
      %v2149 = vld [vmem:[%s1761 + $0x4] sm:$0xf]
      %v2150 = vld [vmem:[%s1761 + $0x8] sm:$0x1]
      %v2151 = vld [vmem:[%s1761 + $0xc] sm:$0xf]
      %v2152 = vld [vmem:[%s1761 + $0x10] sm:$0xf]
      %v2153 = vld [vmem:[%s1761 + $0x14] sm:$0x1]
      %v2154 = vld [vmem:[%s1761 + $0x18] sm:$0xf]
      %v2155 = vld [vmem:[%s1761 + $0x1c] sm:$0xf]
      %v2156 = vld [vmem:[%s1761 + $0x20] sm:$0x1]
      %v2157 = vld [vmem:[%s1761 + $0x24] sm:$0xf]
      %v2158 = vld [vmem:[%s1761 + $0x28] sm:$0xf]
      %v2159 = vld [vmem:[%s1761 + $0x2c] sm:$0x1]
      %v2160 = vld [vmem:[%s1761 + $0x30] sm:$0xf]
      %v2161 = vld [vmem:[%s1761 + $0x34] sm:$0xf]
      %v2162 = vld [vmem:[%s1761 + $0x38] sm:$0x1]
      %v2163 = vld [vmem:[%s1761 + $0x3c] sm:$0xf]
      %v2164 = vld [vmem:[%s1761 + $0x40] sm:$0xf]
      %v2165 = vld [vmem:[%s1761 + $0x44] sm:$0x1]
      %v2166 = vld [vmem:[%s1761 + $0x48] sm:$0xf]
      %v2167 = vld [vmem:[%s1761 + $0x4c] sm:$0xf]
      %v2168 = vld [vmem:[%s1761 + $0x50] sm:$0x1]
      %v2169 = vld [vmem:[%s1761 + $0x54] sm:$0xf]
      %v2170 = vld [vmem:[%s1761 + $0x58] sm:$0xf]
      %v2171 = vld [vmem:[%s1761 + $0x5c] sm:$0x1]
      %v2172 = vld [vmem:[%s1761 + $0x60] sm:$0xf]
      %v2173 = vld [vmem:[%s1761 + $0x64] sm:$0xf]
      %v2174 = vld [vmem:[%s1761 + $0x68] sm:$0x1]
      %v2175 = vld [vmem:[%s1761 + $0x6c] sm:$0xf]
      %v2176 = vld [vmem:[%s1761 + $0x70] sm:$0xf]
      %v2177 = vld [vmem:[%s1761 + $0x74] sm:$0x1]
      %v2178 = vld [vmem:[%s1761 + $0x78] sm:$0xf]
      %v2179 = vld [vmem:[%s1761 + $0x7c] sm:$0xf]
      %v2180 = vld [vmem:[%s1761 + $0x80] sm:$0x1]
      %v2181 = vld [vmem:[%s1761 + $0x84] sm:$0xf]
      %v2182 = vld [vmem:[%s1761 + $0x88] sm:$0xf]
      %v2183 = vld [vmem:[%s1761 + $0x8c] sm:$0x1]
      %v2184 = vld [vmem:[%s1761 + $0x90] sm:$0xf]
      %v2185 = vld [vmem:[%s1761 + $0x94] sm:$0xf]
      %v2186 = vld [vmem:[%s1761 + $0x98] sm:$0x1]
      %v2187 = vld [vmem:[%s1761 + $0x9c] sm:$0xf]
      %v2188 = vld [vmem:[%s1761 + $0xa0] sm:$0xf]
      %v2189 = vld [vmem:[%s1761 + $0xa4] sm:$0x1]
      %v2190 = vld [vmem:[%s1761 + $0xa8] sm:$0xf]
      %v2191 = vld [vmem:[%s1761 + $0xac] sm:$0xf]
      %v2192 = vld [vmem:[%s1761 + $0xb0] sm:$0x1]
      %v2193 = vld [vmem:[%s1761 + $0xb4] sm:$0xf]
      %v2194 = vld [vmem:[%s1761 + $0xb8] sm:$0xf]
      %v2195 = vld [vmem:[%s1761 + $0xbc] sm:$0x1]
      %v2197 = vshrl.u32 %v2148, 16
      %v2199 = vrot.slane %v2197, 4
      %v2200 = vshll.u32 %v2148, 16
      %v2202 = vrot.slane %v2200, 5
      %v2203 = vor.u32 %v2199, %v2202
      %v2204 = vrot.slane %v2203, 4
      %v2206 = vshll.u32 %v2149, 16
      %v2208 = vrot.slane %v2206, 5
      %v2209 = vsel %vm296, %v2204, %v2208
      %v2210 = vshrl.u32 %v2149, 16
      %v2212 = vrot.slane %v2210, 4
      %v2213 = vor.u32 %v2212, %v2208
      %v2214 = vrot.slane %v2213, 4
      %v2216 = vshll.u32 %v2150, 16
      %v2218 = vrot.slane %v2216, 5
      %v2219 = vsel %vm296, %v2214, %v2218
      %v2221 = vshrl.u32 %v2151, 16
      %v2223 = vrot.slane %v2221, 4
      %v2224 = vshll.u32 %v2151, 16
      %v2226 = vrot.slane %v2224, 5
      %v2227 = vor.u32 %v2223, %v2226
      %v2228 = vrot.slane %v2227, 4
      %v2230 = vshll.u32 %v2152, 16
      %v2232 = vrot.slane %v2230, 5
      %v2233 = vsel %vm296, %v2228, %v2232
      %v2234 = vshrl.u32 %v2152, 16
      %v2236 = vrot.slane %v2234, 4
      %v2237 = vor.u32 %v2236, %v2232
      %v2238 = vrot.slane %v2237, 4
      %v2240 = vshll.u32 %v2153, 16
      %v2242 = vrot.slane %v2240, 5
      %v2243 = vsel %vm296, %v2238, %v2242
      %v2245 = vshrl.u32 %v2154, 16
      %v2247 = vrot.slane %v2245, 4
      %v2248 = vshll.u32 %v2154, 16
      %v2250 = vrot.slane %v2248, 5
      %v2251 = vor.u32 %v2247, %v2250
      %v2252 = vrot.slane %v2251, 4
      %v2254 = vshll.u32 %v2155, 16
      %v2256 = vrot.slane %v2254, 5
      %v2257 = vsel %vm296, %v2252, %v2256
      %v2258 = vshrl.u32 %v2155, 16
      %v2260 = vrot.slane %v2258, 4
      %v2261 = vor.u32 %v2260, %v2256
      %v2262 = vrot.slane %v2261, 4
      %v2264 = vshll.u32 %v2156, 16
      %v2266 = vrot.slane %v2264, 5
      %v2267 = vsel %vm296, %v2262, %v2266
      %v2269 = vshrl.u32 %v2157, 16
      %v2271 = vrot.slane %v2269, 4
      %v2272 = vshll.u32 %v2157, 16
      %v2274 = vrot.slane %v2272, 5
      %v2275 = vor.u32 %v2271, %v2274
      %v2276 = vrot.slane %v2275, 4
      %v2278 = vshll.u32 %v2158, 16
      %v2280 = vrot.slane %v2278, 5
      %v2281 = vsel %vm296, %v2276, %v2280
      %v2282 = vshrl.u32 %v2158, 16
      %v2284 = vrot.slane %v2282, 4
      %v2285 = vor.u32 %v2284, %v2280
      %v2286 = vrot.slane %v2285, 4
      %v2288 = vshll.u32 %v2159, 16
      %v2290 = vrot.slane %v2288, 5
      %v2291 = vsel %vm296, %v2286, %v2290
      %v2293 = vshrl.u32 %v2160, 16
      %v2295 = vrot.slane %v2293, 4
      %v2296 = vshll.u32 %v2160, 16
      %v2298 = vrot.slane %v2296, 5
      %v2299 = vor.u32 %v2295, %v2298
      %v2300 = vrot.slane %v2299, 4
      %v2302 = vshll.u32 %v2161, 16
      %v2304 = vrot.slane %v2302, 5
      %v2305 = vsel %vm296, %v2300, %v2304
      %v2306 = vshrl.u32 %v2161, 16
      %v2308 = vrot.slane %v2306, 4
      %v2309 = vor.u32 %v2308, %v2304
      %v2310 = vrot.slane %v2309, 4
      %v2312 = vshll.u32 %v2162, 16
      %v2314 = vrot.slane %v2312, 5
      %v2315 = vsel %vm296, %v2310, %v2314
      %v2317 = vshrl.u32 %v2163, 16
      %v2319 = vrot.slane %v2317, 4
      %v2320 = vshll.u32 %v2163, 16
      %v2322 = vrot.slane %v2320, 5
      %v2323 = vor.u32 %v2319, %v2322
      %v2324 = vrot.slane %v2323, 4
      %v2326 = vshll.u32 %v2164, 16
      %v2328 = vrot.slane %v2326, 5
      %v2329 = vsel %vm296, %v2324, %v2328
      %v2330 = vshrl.u32 %v2164, 16
      %v2332 = vrot.slane %v2330, 4
      %v2333 = vor.u32 %v2332, %v2328
      %v2334 = vrot.slane %v2333, 4
      %v2336 = vshll.u32 %v2165, 16
      %v2338 = vrot.slane %v2336, 5
      %v2339 = vsel %vm296, %v2334, %v2338
      %v2341 = vshrl.u32 %v2166, 16
      %v2343 = vrot.slane %v2341, 4
      %v2344 = vshll.u32 %v2166, 16
      %v2346 = vrot.slane %v2344, 5
      %v2347 = vor.u32 %v2343, %v2346
      %v2348 = vrot.slane %v2347, 4
      %v2350 = vshll.u32 %v2167, 16
      %v2352 = vrot.slane %v2350, 5
      %v2353 = vsel %vm296, %v2348, %v2352
      %v2354 = vshrl.u32 %v2167, 16
      %v2356 = vrot.slane %v2354, 4
      %v2357 = vor.u32 %v2356, %v2352
      %v2358 = vrot.slane %v2357, 4
      %v2360 = vshll.u32 %v2168, 16
      %v2362 = vrot.slane %v2360, 5
      %v2363 = vsel %vm296, %v2358, %v2362
      %v2365 = vshrl.u32 %v2169, 16
      %v2367 = vrot.slane %v2365, 4
      %v2368 = vshll.u32 %v2169, 16
      %v2370 = vrot.slane %v2368, 5
      %v2371 = vor.u32 %v2367, %v2370
      %v2372 = vrot.slane %v2371, 4
      %v2374 = vshll.u32 %v2170, 16
      %v2376 = vrot.slane %v2374, 5
      %v2377 = vsel %vm296, %v2372, %v2376
      %v2378 = vshrl.u32 %v2170, 16
      %v2380 = vrot.slane %v2378, 4
      %v2381 = vor.u32 %v2380, %v2376
      %v2382 = vrot.slane %v2381, 4
      %v2384 = vshll.u32 %v2171, 16
      %v2386 = vrot.slane %v2384, 5
      %v2387 = vsel %vm296, %v2382, %v2386
      %v2389 = vshrl.u32 %v2172, 16
      %v2391 = vrot.slane %v2389, 4
      %v2392 = vshll.u32 %v2172, 16
      %v2394 = vrot.slane %v2392, 5
      %v2395 = vor.u32 %v2391, %v2394
      %v2396 = vrot.slane %v2395, 4
      %v2398 = vshll.u32 %v2173, 16
      %v2400 = vrot.slane %v2398, 5
      %v2401 = vsel %vm296, %v2396, %v2400
      %v2402 = vshrl.u32 %v2173, 16
      %v2404 = vrot.slane %v2402, 4
      %v2405 = vor.u32 %v2404, %v2400
      %v2406 = vrot.slane %v2405, 4
      %v2408 = vshll.u32 %v2174, 16
      %v2410 = vrot.slane %v2408, 5
      %v2411 = vsel %vm296, %v2406, %v2410
      %v2413 = vshrl.u32 %v2175, 16
      %v2415 = vrot.slane %v2413, 4
      %v2416 = vshll.u32 %v2175, 16
      %v2418 = vrot.slane %v2416, 5
      %v2419 = vor.u32 %v2415, %v2418
      %v2420 = vrot.slane %v2419, 4
      %v2422 = vshll.u32 %v2176, 16
      %v2424 = vrot.slane %v2422, 5
      %v2425 = vsel %vm296, %v2420, %v2424
      %v2426 = vshrl.u32 %v2176, 16
      %v2428 = vrot.slane %v2426, 4
      %v2429 = vor.u32 %v2428, %v2424
      %v2430 = vrot.slane %v2429, 4
      %v2432 = vshll.u32 %v2177, 16
      %v2434 = vrot.slane %v2432, 5
      %v2435 = vsel %vm296, %v2430, %v2434
      %v2437 = vshrl.u32 %v2178, 16
      %v2439 = vrot.slane %v2437, 4
      %v2440 = vshll.u32 %v2178, 16
      %v2442 = vrot.slane %v2440, 5
      %v2443 = vor.u32 %v2439, %v2442
      %v2444 = vrot.slane %v2443, 4
      %v2446 = vshll.u32 %v2179, 16
      %v2448 = vrot.slane %v2446, 5
      %v2449 = vsel %vm296, %v2444, %v2448
      %v2450 = vshrl.u32 %v2179, 16
      %v2452 = vrot.slane %v2450, 4
      %v2453 = vor.u32 %v2452, %v2448
      %v2454 = vrot.slane %v2453, 4
      %v2456 = vshll.u32 %v2180, 16
      %v2458 = vrot.slane %v2456, 5
      %v2459 = vsel %vm296, %v2454, %v2458
      %v2461 = vshrl.u32 %v2181, 16
      %v2463 = vrot.slane %v2461, 4
      %v2464 = vshll.u32 %v2181, 16
      %v2466 = vrot.slane %v2464, 5
      %v2467 = vor.u32 %v2463, %v2466
      %v2468 = vrot.slane %v2467, 4
      %v2470 = vshll.u32 %v2182, 16
      %v2472 = vrot.slane %v2470, 5
      %v2473 = vsel %vm296, %v2468, %v2472
      %v2474 = vshrl.u32 %v2182, 16
      %v2476 = vrot.slane %v2474, 4
      %v2477 = vor.u32 %v2476, %v2472
      %v2478 = vrot.slane %v2477, 4
      %v2480 = vshll.u32 %v2183, 16
      %v2482 = vrot.slane %v2480, 5
      %v2483 = vsel %vm296, %v2478, %v2482
      %v2485 = vshrl.u32 %v2184, 16
      %v2487 = vrot.slane %v2485, 4
      %v2488 = vshll.u32 %v2184, 16
      %v2490 = vrot.slane %v2488, 5
      %v2491 = vor.u32 %v2487, %v2490
      %v2492 = vrot.slane %v2491, 4
      %v2494 = vshll.u32 %v2185, 16
      %v2496 = vrot.slane %v2494, 5
      %v2497 = vsel %vm296, %v2492, %v2496
      %v2498 = vshrl.u32 %v2185, 16
      %v2500 = vrot.slane %v2498, 4
      %v2501 = vor.u32 %v2500, %v2496
      %v2502 = vrot.slane %v2501, 4
      %v2504 = vshll.u32 %v2186, 16
      %v2506 = vrot.slane %v2504, 5
      %v2507 = vsel %vm296, %v2502, %v2506
      %v2509 = vshrl.u32 %v2187, 16
      %v2511 = vrot.slane %v2509, 4
      %v2512 = vshll.u32 %v2187, 16
      %v2514 = vrot.slane %v2512, 5
      %v2515 = vor.u32 %v2511, %v2514
      %v2516 = vrot.slane %v2515, 4
      %v2518 = vshll.u32 %v2188, 16
      %v2520 = vrot.slane %v2518, 5
      %v2521 = vsel %vm296, %v2516, %v2520
      %v2522 = vshrl.u32 %v2188, 16
      %v2524 = vrot.slane %v2522, 4
      %v2525 = vor.u32 %v2524, %v2520
      %v2526 = vrot.slane %v2525, 4
      %v2528 = vshll.u32 %v2189, 16
      %v2530 = vrot.slane %v2528, 5
      %v2531 = vsel %vm296, %v2526, %v2530
      %v2533 = vshrl.u32 %v2190, 16
      %v2535 = vrot.slane %v2533, 4
      %v2536 = vshll.u32 %v2190, 16
      %v2538 = vrot.slane %v2536, 5
      %v2539 = vor.u32 %v2535, %v2538
      %v2540 = vrot.slane %v2539, 4
      %v2542 = vshll.u32 %v2191, 16
      %v2544 = vrot.slane %v2542, 5
      %v2545 = vsel %vm296, %v2540, %v2544
      %v2546 = vshrl.u32 %v2191, 16
      %v2548 = vrot.slane %v2546, 4
      %v2549 = vor.u32 %v2548, %v2544
      %v2550 = vrot.slane %v2549, 4
      %v2552 = vshll.u32 %v2192, 16
      %v2554 = vrot.slane %v2552, 5
      %v2555 = vsel %vm296, %v2550, %v2554
      %v2557 = vshrl.u32 %v2193, 16
      %v2559 = vrot.slane %v2557, 4
      %v2560 = vshll.u32 %v2193, 16
      %v2562 = vrot.slane %v2560, 5
      %v2563 = vor.u32 %v2559, %v2562
      %v2564 = vrot.slane %v2563, 4
      %v2566 = vshll.u32 %v2194, 16
      %v2568 = vrot.slane %v2566, 5
      %v2569 = vsel %vm296, %v2564, %v2568
      %v2570 = vshrl.u32 %v2194, 16
      %v2572 = vrot.slane %v2570, 4
      %v2573 = vor.u32 %v2572, %v2568
      %v2574 = vrot.slane %v2573, 4
      %v2576 = vshll.u32 %v2195, 16
      %v2578 = vrot.slane %v2576, 5
      %v2579 = vsel %vm296, %v2574, %v2578
      %s2580 = scalar_lea.vmem %s1, 256
      %v2581 = vld [vmem:[%s2580] sm:$0xf]
      %v2582 = vld [vmem:[%s2580 + $0x4] sm:$0xf]
      %v2583 = vld [vmem:[%s2580 + $0x8] sm:$0xf]
      %v2584 = vld [vmem:[%s2580 + $0xc] sm:$0xf]
      %v2585 = vld [vmem:[%s2580 + $0x10] sm:$0xf]
      %v2586 = vld [vmem:[%s2580 + $0x14] sm:$0xf]
      %v2587 = vld [vmem:[%s2580 + $0x18] sm:$0xf]
      %v2588 = vld [vmem:[%s2580 + $0x1c] sm:$0xf]
      %v2589 = vld [vmem:[%s2580 + $0x20] sm:$0xf]
      %v2590 = vld [vmem:[%s2580 + $0x24] sm:$0xf]
      %v2591 = vld [vmem:[%s2580 + $0x28] sm:$0xf]
      %v2592 = vld [vmem:[%s2580 + $0x2c] sm:$0xf]
      %v2593 = vld [vmem:[%s2580 + $0x30] sm:$0xf]
      %v2594 = vld [vmem:[%s2580 + $0x34] sm:$0xf]
      %v2595 = vld [vmem:[%s2580 + $0x38] sm:$0xf]
      %v2596 = vld [vmem:[%s2580 + $0x3c] sm:$0xf]
      %v2597 = vunpack.c.l.b16 %v2209
      %v2598 = vunpack.c.l.b16 %v2219
      %v2599 = vunpack.c.l.b16 %v2233
      %v2600 = vunpack.c.l.b16 %v2243
      %v2601 = vunpack.c.l.b16 %v2257
      %v2602 = vunpack.c.l.b16 %v2267
      %v2603 = vunpack.c.l.b16 %v2281
      %v2604 = vunpack.c.l.b16 %v2291
      %v2605 = vunpack.c.l.b16 %v2305
      %v2606 = vunpack.c.l.b16 %v2315
      %v2607 = vunpack.c.l.b16 %v2329
      %v2608 = vunpack.c.l.b16 %v2339
      %v2609 = vunpack.c.l.b16 %v2353
      %v2610 = vunpack.c.l.b16 %v2363
      %v2611 = vunpack.c.l.b16 %v2377
      %v2612 = vunpack.c.l.b16 %v2387
      %v2613 = vunpack.c.l.b16 %v2401
      %v2614 = vunpack.c.l.b16 %v2411
      %v2615 = vunpack.c.l.b16 %v2425
      %v2616 = vunpack.c.l.b16 %v2435
      %v2617 = vunpack.c.l.b16 %v2449
      %v2618 = vunpack.c.l.b16 %v2459
      %v2619 = vunpack.c.l.b16 %v2473
      %v2620 = vunpack.c.l.b16 %v2483
      %v2621 = vunpack.c.l.b16 %v2497
      %v2622 = vunpack.c.l.b16 %v2507
      %v2623 = vunpack.c.l.b16 %v2521
      %v2624 = vunpack.c.l.b16 %v2531
      %v2625 = vunpack.c.l.b16 %v2545
      %v2626 = vunpack.c.l.b16 %v2555
      %v2627 = vunpack.c.l.b16 %v2569
      %v2628 = vunpack.c.l.b16 %v2579
      %v2629 = vpack.c.b16 %v2598, %v2597
      %v2630 = vpack.c.b16 %v2600, %v2599
      %v2631 = vpack.c.b16 %v2602, %v2601
      %v2632 = vpack.c.b16 %v2604, %v2603
      %v2633 = vpack.c.b16 %v2606, %v2605
      %v2634 = vpack.c.b16 %v2608, %v2607
      %v2635 = vpack.c.b16 %v2610, %v2609
      %v2636 = vpack.c.b16 %v2612, %v2611
      %v2637 = vpack.c.b16 %v2614, %v2613
      %v2638 = vpack.c.b16 %v2616, %v2615
      %v2639 = vpack.c.b16 %v2618, %v2617
      %v2640 = vpack.c.b16 %v2620, %v2619
      %v2641 = vpack.c.b16 %v2622, %v2621
      %v2642 = vpack.c.b16 %v2624, %v2623
      %v2643 = vpack.c.b16 %v2626, %v2625
      %v2644 = vpack.c.b16 %v2628, %v2627
      %v2677 = vunpack.c.l.b16 %v2581
      %v2678 = vunpack.c.l.b16 %v2582
      %v2679 = vunpack.c.l.b16 %v2583
      %v2680 = vunpack.c.l.b16 %v2584
      %v2681 = vunpack.c.l.b16 %v2585
      %v2682 = vunpack.c.l.b16 %v2586
      %v2683 = vunpack.c.l.b16 %v2587
      %v2684 = vunpack.c.l.b16 %v2588
      %v2685 = vunpack.c.l.b16 %v2589
      %v2686 = vunpack.c.l.b16 %v2590
      %v2687 = vunpack.c.l.b16 %v2591
      %v2688 = vunpack.c.l.b16 %v2592
      %v2689 = vunpack.c.l.b16 %v2593
      %v2690 = vunpack.c.l.b16 %v2594
      %v2691 = vunpack.c.l.b16 %v2595
      %v2692 = vunpack.c.l.b16 %v2596
      %v2693 = vpack.c.b16 %v2678, %v2677
      %v2694 = vpack.c.b16 %v2680, %v2679
      %v2695 = vpack.c.b16 %v2682, %v2681
      %v2696 = vpack.c.b16 %v2684, %v2683
      %v2697 = vpack.c.b16 %v2686, %v2685
      %v2698 = vpack.c.b16 %v2688, %v2687
      %v2699 = vpack.c.b16 %v2690, %v2689
      %v2700 = vpack.c.b16 %v2692, %v2691
      %2709 = vmatprep.subr.bf16.mxu0 0
      %2710 = vmatpush1.bf16.msra.mxu0 %v2693
      %2711 = vmatprep.subr.bf16.mxu0 0
      %2712 = vmatpush1.bf16.msra.mxu0 %v2694
      %2713 = vmatprep.subr.bf16.mxu0 0
      %2714 = vmatpush1.bf16.msra.mxu0 %v2695
      %2715 = vmatprep.subr.bf16.mxu0 0
      %2716 = vmatpush1.bf16.msra.mxu0 %v2696
      %2717 = vmatprep.subr.bf16.mxu0 0
      %2718 = vmatpush1.bf16.msra.mxu0 %v2697
      %2719 = vmatprep.subr.bf16.mxu0 0
      %2720 = vmatpush1.bf16.msra.mxu0 %v2698
      %2721 = vmatprep.subr.bf16.mxu0 0
      %2722 = vmatpush1.bf16.msra.mxu0 %v2699
      %2723 = vmatprep.subr.bf16.mxu0 0
      %2724 = vmatpush1.bf16.msra.mxu0 %v2700
      %2725 = vmatprep.subr.bf16.mxu0 0
      %2726 = vmatpush1.bf16.msra.mxu0 0
      %2727 = vmatprep.subr.bf16.mxu0 0
      %2728 = vmatpush1.bf16.msra.mxu0 0
      %2729 = vmatprep.subr.bf16.mxu0 0
      %2730 = vmatpush1.bf16.msra.mxu0 0
      %2731 = vmatprep.subr.bf16.mxu0 0
      %2732 = vmatpush1.bf16.msra.mxu0 0
      %2733 = vmatprep.subr.bf16.mxu0 0
      %2734 = vmatpush1.bf16.msra.mxu0 0
      %2735 = vmatprep.subr.bf16.mxu0 0
      %2736 = vmatpush1.bf16.msra.mxu0 0
      %2737 = vmatprep.subr.bf16.mxu0 0
      %2738 = vmatpush1.bf16.msra.mxu0 0
      %2739 = vmatprep.subr.bf16.mxu0 0
      %2740 = vmatpush1.bf16.msra.mxu0 0
      %2741 = vmatprep.mubr.bf16.mxu0 0
      %2742 = vmatmul.mubr.bf16.gmra.mrb[0].mxu0 %v2629
      %v2743 = vpop.f32.mrb[0].mxu0
      %v2744 = vadd.f32 0.0, %v2743
      %v2745 = vpop.f32.mrb[0].mxu0
      %v2746 = vpop.f32.mrb[0].mxu0
      %v2747 = vadd.f32 0.0, %v2746
      %v2748 = vpop.f32.mrb[0].mxu0
      %2749 = vmatprep.mubr.bf16.mxu0 0
      %2750 = vmatmul.mubr.bf16.gmra.mrb[0].mxu0 %v2630
      %v2751 = vpop.f32.mrb[0].mxu0
      %v2752 = vadd.f32 0.0, %v2751
      %v2753 = vpop.f32.mrb[0].mxu0
      %v2754 = vpop.f32.mrb[0].mxu0
      %v2755 = vadd.f32 0.0, %v2754
      %v2756 = vpop.f32.mrb[0].mxu0
      %2757 = vmatprep.mubr.bf16.mxu0 0
      %2758 = vmatmul.mubr.bf16.gmra.mrb[0].mxu0 %v2631
      %v2759 = vpop.f32.mrb[0].mxu0
      %v2760 = vadd.f32 0.0, %v2759
      %v2761 = vpop.f32.mrb[0].mxu0
      %v2762 = vpop.f32.mrb[0].mxu0
      %v2763 = vadd.f32 0.0, %v2762
      %v2764 = vpop.f32.mrb[0].mxu0
      %2765 = vmatprep.mubr.bf16.mxu0 0
      %2766 = vmatmul.mubr.bf16.gmra.mrb[0].mxu0 %v2632
      %v2767 = vpop.f32.mrb[0].mxu0
      %v2768 = vadd.f32 0.0, %v2767
      %v2769 = vpop.f32.mrb[0].mxu0
      %v2770 = vpop.f32.mrb[0].mxu0
      %v2771 = vadd.f32 0.0, %v2770
      %v2772 = vpop.f32.mrb[0].mxu0
      %2773 = vmatprep.mubr.bf16.mxu0 0
      %2774 = vmatmul.mubr.bf16.gmra.mrb[0].mxu0 %v2633
      %v2775 = vpop.f32.mrb[0].mxu0
      %v2776 = vadd.f32 0.0, %v2775
      %v2777 = vpop.f32.mrb[0].mxu0
      %v2778 = vpop.f32.mrb[0].mxu0
      %v2779 = vadd.f32 0.0, %v2778
      %v2780 = vpop.f32.mrb[0].mxu0
      %2781 = vmatprep.mubr.bf16.mxu0 0
      %2782 = vmatmul.mubr.bf16.gmra.mrb[0].mxu0 %v2634
      %v2783 = vpop.f32.mrb[0].mxu0
      %v2784 = vadd.f32 0.0, %v2783
      %v2785 = vpop.f32.mrb[0].mxu0
      %v2786 = vpop.f32.mrb[0].mxu0
      %v2787 = vadd.f32 0.0, %v2786
      %v2788 = vpop.f32.mrb[0].mxu0
      %2789 = vmatprep.mubr.bf16.mxu0 0
      %2790 = vmatmul.mubr.bf16.gmra.mrb[0].mxu0 %v2635
      %v2791 = vpop.f32.mrb[0].mxu0
      %v2792 = vadd.f32 0.0, %v2791
      %v2793 = vpop.f32.mrb[0].mxu0
      %v2794 = vpop.f32.mrb[0].mxu0
      %v2795 = vadd.f32 0.0, %v2794
      %v2796 = vpop.f32.mrb[0].mxu0
      %2797 = vmatprep.mubr.bf16.mxu0 0
      %2798 = vmatmul.mubr.bf16.gmra.mrb[0].mxu0 %v2636
      %v2799 = vpop.f32.mrb[0].mxu0
      %v2800 = vadd.f32 0.0, %v2799
      %v2801 = vpop.f32.mrb[0].mxu0
      %v2802 = vpop.f32.mrb[0].mxu0
      %v2803 = vadd.f32 0.0, %v2802
      %v2804 = vpop.f32.mrb[0].mxu0
      %2805 = vmatprep.mubr.bf16.mxu0 0
      %2806 = vmatmul.mubr.bf16.gmra.mrb[0].mxu0 %v2637
      %v2807 = vpop.f32.mrb[0].mxu0
      %v2808 = vadd.f32 0.0, %v2807
      %v2809 = vpop.f32.mrb[0].mxu0
      %v2810 = vpop.f32.mrb[0].mxu0
      %v2811 = vadd.f32 0.0, %v2810
      %v2812 = vpop.f32.mrb[0].mxu0
      %2813 = vmatprep.mubr.bf16.mxu0 0
      %2814 = vmatmul.mubr.bf16.gmra.mrb[0].mxu0 %v2638
      %v2815 = vpop.f32.mrb[0].mxu0
      %v2816 = vadd.f32 0.0, %v2815
      %v2817 = vpop.f32.mrb[0].mxu0
      %v2818 = vpop.f32.mrb[0].mxu0
      %v2819 = vadd.f32 0.0, %v2818
      %v2820 = vpop.f32.mrb[0].mxu0
      %2821 = vmatprep.mubr.bf16.mxu0 0
      %2822 = vmatmul.mubr.bf16.gmra.mrb[0].mxu0 %v2639
      %v2823 = vpop.f32.mrb[0].mxu0
      %v2824 = vadd.f32 0.0, %v2823
      %v2825 = vpop.f32.mrb[0].mxu0
      %v2826 = vpop.f32.mrb[0].mxu0
      %v2827 = vadd.f32 0.0, %v2826
      %v2828 = vpop.f32.mrb[0].mxu0
      %2829 = vmatprep.mubr.bf16.mxu0 0
      %2830 = vmatmul.mubr.bf16.gmra.mrb[0].mxu0 %v2640
      %v2831 = vpop.f32.mrb[0].mxu0
      %v2832 = vadd.f32 0.0, %v2831
      %v2833 = vpop.f32.mrb[0].mxu0
      %v2834 = vpop.f32.mrb[0].mxu0
      %v2835 = vadd.f32 0.0, %v2834
      %v2836 = vpop.f32.mrb[0].mxu0
      %2837 = vmatprep.mubr.bf16.mxu0 0
      %2838 = vmatmul.mubr.bf16.gmra.mrb[0].mxu0 %v2641
      %v2839 = vpop.f32.mrb[0].mxu0
      %v2840 = vadd.f32 0.0, %v2839
      %v2841 = vpop.f32.mrb[0].mxu0
      %v2842 = vpop.f32.mrb[0].mxu0
      %v2843 = vadd.f32 0.0, %v2842
      %v2844 = vpop.f32.mrb[0].mxu0
      %2845 = vmatprep.mubr.bf16.mxu0 0
      %2846 = vmatmul.mubr.bf16.gmra.mrb[0].mxu0 %v2642
      %v2847 = vpop.f32.mrb[0].mxu0
      %v2848 = vadd.f32 0.0, %v2847
      %v2849 = vpop.f32.mrb[0].mxu0
      %v2850 = vpop.f32.mrb[0].mxu0
      %v2851 = vadd.f32 0.0, %v2850
      %v2852 = vpop.f32.mrb[0].mxu0
      %2853 = vmatprep.mubr.bf16.mxu0 0
      %2854 = vmatmul.mubr.bf16.gmra.mrb[0].mxu0 %v2643
      %v2855 = vpop.f32.mrb[0].mxu0
      %v2856 = vadd.f32 0.0, %v2855
      %v2857 = vpop.f32.mrb[0].mxu0
      %v2858 = vpop.f32.mrb[0].mxu0
      %v2859 = vadd.f32 0.0, %v2858
      %v2860 = vpop.f32.mrb[0].mxu0
      %2861 = vmatprep.mubr.bf16.mxu0 0
      %2862 = vmatmul.mubr.bf16.gmra.mrb[0].mxu0 %v2644
      %v2863 = vpop.f32.mrb[0].mxu0
      %v2864 = vadd.f32 0.0, %v2863
      %v2865 = vpop.f32.mrb[0].mxu0
      %v2866 = vpop.f32.mrb[0].mxu0
      %v2867 = vadd.f32 0.0, %v2866
      %v2868 = vpop.f32.mrb[0].mxu0
      %2869 = vdwg.mxu0
      %v2870 = vadd.f32 %v2116, %v2744
      %v2871 = vadd.f32 %v2117, %v2747
      %v2872 = vadd.f32 %v2118, %v2752
      %v2873 = vadd.f32 %v2119, %v2755
      %v2874 = vadd.f32 %v2120, %v2760
      %v2875 = vadd.f32 %v2121, %v2763
      %v2876 = vadd.f32 %v2122, %v2768
      %v2877 = vadd.f32 %v2123, %v2771
      %v2878 = vadd.f32 %v2124, %v2776
      %v2879 = vadd.f32 %v2125, %v2779
      %v2880 = vadd.f32 %v2126, %v2784
      %v2881 = vadd.f32 %v2127, %v2787
      %v2882 = vadd.f32 %v2128, %v2792
      %v2883 = vadd.f32 %v2129, %v2795
      %v2884 = vadd.f32 %v2130, %v2800
      %v2885 = vadd.f32 %v2131, %v2803
      %v2886 = vadd.f32 %v2132, %v2808
      %v2887 = vadd.f32 %v2133, %v2811
      %v2888 = vadd.f32 %v2134, %v2816
      %v2889 = vadd.f32 %v2135, %v2819
      %v2890 = vadd.f32 %v2136, %v2824
      %v2891 = vadd.f32 %v2137, %v2827
      %v2892 = vadd.f32 %v2138, %v2832
      %v2893 = vadd.f32 %v2139, %v2835
      %v2894 = vadd.f32 %v2140, %v2840
      %v2895 = vadd.f32 %v2141, %v2843
      %v2896 = vadd.f32 %v2142, %v2848
      %v2897 = vadd.f32 %v2143, %v2851
      %v2898 = vadd.f32 %v2144, %v2856
      %v2899 = vadd.f32 %v2145, %v2859
      %v2900 = vadd.f32 %v2146, %v2864
      %v2901 = vadd.f32 %v2147, %v2867
      %v2902 = vld [vmem:[%s1761] sm:$0xe]
      %v2903 = vld [vmem:[%s1761 + $0xc] sm:$0xe]
      %v2904 = vld [vmem:[%s1761 + $0x18] sm:$0xe]
      %v2905 = vld [vmem:[%s1761 + $0x24] sm:$0xe]
      %v2906 = vld [vmem:[%s1761 + $0x30] sm:$0xe]
      %v2907 = vld [vmem:[%s1761 + $0x3c] sm:$0xe]
      %v2908 = vld [vmem:[%s1761 + $0x48] sm:$0xe]
      %v2909 = vld [vmem:[%s1761 + $0x54] sm:$0xe]
      %v2910 = vld [vmem:[%s1761 + $0x60] sm:$0xe]
      %v2911 = vld [vmem:[%s1761 + $0x6c] sm:$0xe]
      %v2912 = vld [vmem:[%s1761 + $0x78] sm:$0xe]
      %v2913 = vld [vmem:[%s1761 + $0x84] sm:$0xe]
      %v2914 = vld [vmem:[%s1761 + $0x90] sm:$0xe]
      %v2915 = vld [vmem:[%s1761 + $0x9c] sm:$0xe]
      %v2916 = vld [vmem:[%s1761 + $0xa8] sm:$0xe]
      %v2917 = vld [vmem:[%s1761 + $0xb4] sm:$0xe]
      %v2966 = vrot.slane %v2902, 5
      %v2967 = vrot.slane %v2966, 4
      %v2968 = vrot.slane %v2149, 5
      %v2969 = vsel %vm1326, %v2967, %v2968
      %v2970 = vrot.slane %v2968, 4
      %v2971 = vrot.slane %v2150, 5
      %v2972 = vsel %vm1326, %v2970, %v2971
      %v2973 = vrot.slane %v2903, 5
      %v2974 = vrot.slane %v2973, 4
      %v2975 = vrot.slane %v2152, 5
      %v2976 = vsel %vm1326, %v2974, %v2975
      %v2977 = vrot.slane %v2975, 4
      %v2978 = vrot.slane %v2153, 5
      %v2979 = vsel %vm1326, %v2977, %v2978
      %v2980 = vrot.slane %v2904, 5
      %v2981 = vrot.slane %v2980, 4
      %v2982 = vrot.slane %v2155, 5
      %v2983 = vsel %vm1326, %v2981, %v2982
      %v2984 = vrot.slane %v2982, 4
      %v2985 = vrot.slane %v2156, 5
      %v2986 = vsel %vm1326, %v2984, %v2985
      %v2987 = vrot.slane %v2905, 5
      %v2988 = vrot.slane %v2987, 4
      %v2989 = vrot.slane %v2158, 5
      %v2990 = vsel %vm1326, %v2988, %v2989
      %v2991 = vrot.slane %v2989, 4
      %v2992 = vrot.slane %v2159, 5
      %v2993 = vsel %vm1326, %v2991, %v2992
      %v2994 = vrot.slane %v2906, 5
      %v2995 = vrot.slane %v2994, 4
      %v2996 = vrot.slane %v2161, 5
      %v2997 = vsel %vm1326, %v2995, %v2996
      %v2998 = vrot.slane %v2996, 4
      %v2999 = vrot.slane %v2162, 5
      %v3000 = vsel %vm1326, %v2998, %v2999
      %v3001 = vrot.slane %v2907, 5
      %v3002 = vrot.slane %v3001, 4
      %v3003 = vrot.slane %v2164, 5
      %v3004 = vsel %vm1326, %v3002, %v3003
      %v3005 = vrot.slane %v3003, 4
      %v3006 = vrot.slane %v2165, 5
      %v3007 = vsel %vm1326, %v3005, %v3006
      %v3008 = vrot.slane %v2908, 5
      %v3009 = vrot.slane %v3008, 4
      %v3010 = vrot.slane %v2167, 5
      %v3011 = vsel %vm1326, %v3009, %v3010
      %v3012 = vrot.slane %v3010, 4
      %v3013 = vrot.slane %v2168, 5
      %v3014 = vsel %vm1326, %v3012, %v3013
      %v3015 = vrot.slane %v2909, 5
      %v3016 = vrot.slane %v3015, 4
      %v3017 = vrot.slane %v2170, 5
      %v3018 = vsel %vm1326, %v3016, %v3017
      %v3019 = vrot.slane %v3017, 4
      %v3020 = vrot.slane %v2171, 5
      %v3021 = vsel %vm1326, %v3019, %v3020
      %v3022 = vrot.slane %v2910, 5
      %v3023 = vrot.slane %v3022, 4
      %v3024 = vrot.slane %v2173, 5
      %v3025 = vsel %vm1326, %v3023, %v3024
      %v3026 = vrot.slane %v3024, 4
      %v3027 = vrot.slane %v2174, 5
      %v3028 = vsel %vm1326, %v3026, %v3027
      %v3029 = vrot.slane %v2911, 5
      %v3030 = vrot.slane %v3029, 4
      %v3031 = vrot.slane %v2176, 5
      %v3032 = vsel %vm1326, %v3030, %v3031
      %v3033 = vrot.slane %v3031, 4
      %v3034 = vrot.slane %v2177, 5
      %v3035 = vsel %vm1326, %v3033, %v3034
      %v3036 = vrot.slane %v2912, 5
      %v3037 = vrot.slane %v3036, 4
      %v3038 = vrot.slane %v2179, 5
      %v3039 = vsel %vm1326, %v3037, %v3038
      %v3040 = vrot.slane %v3038, 4
      %v3041 = vrot.slane %v2180, 5
      %v3042 = vsel %vm1326, %v3040, %v3041
      %v3043 = vrot.slane %v2913, 5
      %v3044 = vrot.slane %v3043, 4
      %v3045 = vrot.slane %v2182, 5
      %v3046 = vsel %vm1326, %v3044, %v3045
      %v3047 = vrot.slane %v3045, 4
      %v3048 = vrot.slane %v2183, 5
      %v3049 = vsel %vm1326, %v3047, %v3048
      %v3050 = vrot.slane %v2914, 5
      %v3051 = vrot.slane %v3050, 4
      %v3052 = vrot.slane %v2185, 5
      %v3053 = vsel %vm1326, %v3051, %v3052
      %v3054 = vrot.slane %v3052, 4
      %v3055 = vrot.slane %v2186, 5
      %v3056 = vsel %vm1326, %v3054, %v3055
      %v3057 = vrot.slane %v2915, 5
      %v3058 = vrot.slane %v3057, 4
      %v3059 = vrot.slane %v2188, 5
      %v3060 = vsel %vm1326, %v3058, %v3059
      %v3061 = vrot.slane %v3059, 4
      %v3062 = vrot.slane %v2189, 5
      %v3063 = vsel %vm1326, %v3061, %v3062
      %v3064 = vrot.slane %v2916, 5
      %v3065 = vrot.slane %v3064, 4
      %v3066 = vrot.slane %v2191, 5
      %v3067 = vsel %vm1326, %v3065, %v3066
      %v3068 = vrot.slane %v3066, 4
      %v3069 = vrot.slane %v2192, 5
      %v3070 = vsel %vm1326, %v3068, %v3069
      %v3071 = vrot.slane %v2917, 5
      %v3072 = vrot.slane %v3071, 4
      %v3073 = vrot.slane %v2194, 5
      %v3074 = vsel %vm1326, %v3072, %v3073
      %v3075 = vrot.slane %v3073, 4
      %v3076 = vrot.slane %v2195, 5
      %v3077 = vsel %vm1326, %v3075, %v3076
      %s3078 = scalar_lea.vmem %s1, 320
      %v3079 = vld [vmem:[%s3078] sm:$0xf]
      %v3080 = vld [vmem:[%s3078 + $0x4] sm:$0xf]
      %v3081 = vld [vmem:[%s3078 + $0x8] sm:$0xf]
      %v3082 = vld [vmem:[%s3078 + $0xc] sm:$0xf]
      %v3083 = vld [vmem:[%s3078 + $0x10] sm:$0xf]
      %v3084 = vld [vmem:[%s3078 + $0x14] sm:$0xf]
      %v3085 = vld [vmem:[%s3078 + $0x18] sm:$0xf]
      %v3086 = vld [vmem:[%s3078 + $0x1c] sm:$0xf]
      %v3087 = vld [vmem:[%s3078 + $0x20] sm:$0xf]
      %v3088 = vld [vmem:[%s3078 + $0x24] sm:$0xf]
      %v3089 = vld [vmem:[%s3078 + $0x28] sm:$0xf]
      %v3090 = vld [vmem:[%s3078 + $0x2c] sm:$0xf]
      %v3091 = vld [vmem:[%s3078 + $0x30] sm:$0xf]
      %v3092 = vld [vmem:[%s3078 + $0x34] sm:$0xf]
      %v3093 = vld [vmem:[%s3078 + $0x38] sm:$0xf]
      %v3094 = vld [vmem:[%s3078 + $0x3c] sm:$0xf]
      %v3095 = vunpack.c.l.b16 %v2969
      %v3096 = vunpack.c.l.b16 %v2972
      %v3097 = vunpack.c.l.b16 %v2976
      %v3098 = vunpack.c.l.b16 %v2979
      %v3099 = vunpack.c.l.b16 %v2983
      %v3100 = vunpack.c.l.b16 %v2986
      %v3101 = vunpack.c.l.b16 %v2990
      %v3102 = vunpack.c.l.b16 %v2993
      %v3103 = vunpack.c.l.b16 %v2997
      %v3104 = vunpack.c.l.b16 %v3000
      %v3105 = vunpack.c.l.b16 %v3004
      %v3106 = vunpack.c.l.b16 %v3007
      %v3107 = vunpack.c.l.b16 %v3011
      %v3108 = vunpack.c.l.b16 %v3014
      %v3109 = vunpack.c.l.b16 %v3018
      %v3110 = vunpack.c.l.b16 %v3021
      %v3111 = vunpack.c.l.b16 %v3025
      %v3112 = vunpack.c.l.b16 %v3028
      %v3113 = vunpack.c.l.b16 %v3032
      %v3114 = vunpack.c.l.b16 %v3035
      %v3115 = vunpack.c.l.b16 %v3039
      %v3116 = vunpack.c.l.b16 %v3042
      %v3117 = vunpack.c.l.b16 %v3046
      %v3118 = vunpack.c.l.b16 %v3049
      %v3119 = vunpack.c.l.b16 %v3053
      %v3120 = vunpack.c.l.b16 %v3056
      %v3121 = vunpack.c.l.b16 %v3060
      %v3122 = vunpack.c.l.b16 %v3063
      %v3123 = vunpack.c.l.b16 %v3067
      %v3124 = vunpack.c.l.b16 %v3070
      %v3125 = vunpack.c.l.b16 %v3074
      %v3126 = vunpack.c.l.b16 %v3077
      %v3127 = vpack.c.b16 %v3096, %v3095
      %v3128 = vpack.c.b16 %v3098, %v3097
      %v3129 = vpack.c.b16 %v3100, %v3099
      %v3130 = vpack.c.b16 %v3102, %v3101
      %v3131 = vpack.c.b16 %v3104, %v3103
      %v3132 = vpack.c.b16 %v3106, %v3105
      %v3133 = vpack.c.b16 %v3108, %v3107
      %v3134 = vpack.c.b16 %v3110, %v3109
      %v3135 = vpack.c.b16 %v3112, %v3111
      %v3136 = vpack.c.b16 %v3114, %v3113
      %v3137 = vpack.c.b16 %v3116, %v3115
      %v3138 = vpack.c.b16 %v3118, %v3117
      %v3139 = vpack.c.b16 %v3120, %v3119
      %v3140 = vpack.c.b16 %v3122, %v3121
      %v3141 = vpack.c.b16 %v3124, %v3123
      %v3142 = vpack.c.b16 %v3126, %v3125
      %v3175 = vunpack.c.l.b16 %v3079
      %v3176 = vunpack.c.l.b16 %v3080
      %v3177 = vunpack.c.l.b16 %v3081
      %v3178 = vunpack.c.l.b16 %v3082
      %v3179 = vunpack.c.l.b16 %v3083
      %v3180 = vunpack.c.l.b16 %v3084
      %v3181 = vunpack.c.l.b16 %v3085
      %v3182 = vunpack.c.l.b16 %v3086
      %v3183 = vunpack.c.l.b16 %v3087
      %v3184 = vunpack.c.l.b16 %v3088
      %v3185 = vunpack.c.l.b16 %v3089
      %v3186 = vunpack.c.l.b16 %v3090
      %v3187 = vunpack.c.l.b16 %v3091
      %v3188 = vunpack.c.l.b16 %v3092
      %v3189 = vunpack.c.l.b16 %v3093
      %v3190 = vunpack.c.l.b16 %v3094
      %v3191 = vpack.c.b16 %v3176, %v3175
      %v3192 = vpack.c.b16 %v3178, %v3177
      %v3193 = vpack.c.b16 %v3180, %v3179
      %v3194 = vpack.c.b16 %v3182, %v3181
      %v3195 = vpack.c.b16 %v3184, %v3183
      %v3196 = vpack.c.b16 %v3186, %v3185
      %v3197 = vpack.c.b16 %v3188, %v3187
      %v3198 = vpack.c.b16 %v3190, %v3189
      %3207 = vmatprep.subr.bf16.mxu0 0
      %3208 = vmatpush1.bf16.msra.mxu0 %v3191
      %3209 = vmatprep.subr.bf16.mxu0 0
      %3210 = vmatpush1.bf16.msra.mxu0 %v3192
      %3211 = vmatprep.subr.bf16.mxu0 0
      %3212 = vmatpush1.bf16.msra.mxu0 %v3193
      %3213 = vmatprep.subr.bf16.mxu0 0
      %3214 = vmatpush1.bf16.msra.mxu0 %v3194
      %3215 = vmatprep.subr.bf16.mxu0 0
      %3216 = vmatpush1.bf16.msra.mxu0 %v3195
      %3217 = vmatprep.subr.bf16.mxu0 0
      %3218 = vmatpush1.bf16.msra.mxu0 %v3196
      %3219 = vmatprep.subr.bf16.mxu0 0
      %3220 = vmatpush1.bf16.msra.mxu0 %v3197
      %3221 = vmatprep.subr.bf16.mxu0 0
      %3222 = vmatpush1.bf16.msra.mxu0 %v3198
      %3223 = vmatprep.subr.bf16.mxu0 0
      %3224 = vmatpush1.bf16.msra.mxu0 0
      %3225 = vmatprep.subr.bf16.mxu0 0
      %3226 = vmatpush1.bf16.msra.mxu0 0
      %3227 = vmatprep.subr.bf16.mxu0 0
      %3228 = vmatpush1.bf16.msra.mxu0 0
      %3229 = vmatprep.subr.bf16.mxu0 0
      %3230 = vmatpush1.bf16.msra.mxu0 0
      %3231 = vmatprep.subr.bf16.mxu0 0
      %3232 = vmatpush1.bf16.msra.mxu0 0
      %3233 = vmatprep.subr.bf16.mxu0 0
      %3234 = vmatpush1.bf16.msra.mxu0 0
      %3235 = vmatprep.subr.bf16.mxu0 0
      %3236 = vmatpush1.bf16.msra.mxu0 0
      %3237 = vmatprep.subr.bf16.mxu0 0
      %3238 = vmatpush1.bf16.msra.mxu0 0
      %3239 = vmatprep.mubr.bf16.mxu0 0
      %3240 = vmatmul.mubr.bf16.gmra.mrb[0].mxu0 %v3127
      %v3241 = vpop.f32.mrb[0].mxu0
      %v3242 = vadd.f32 0.0, %v3241
      %v3243 = vpop.f32.mrb[0].mxu0
      %v3244 = vpop.f32.mrb[0].mxu0
      %v3245 = vadd.f32 0.0, %v3244
      %v3246 = vpop.f32.mrb[0].mxu0
      %3247 = vmatprep.mubr.bf16.mxu0 0
      %3248 = vmatmul.mubr.bf16.gmra.mrb[0].mxu0 %v3128
      %v3249 = vpop.f32.mrb[0].mxu0
      %v3250 = vadd.f32 0.0, %v3249
      %v3251 = vpop.f32.mrb[0].mxu0
      %v3252 = vpop.f32.mrb[0].mxu0
      %v3253 = vadd.f32 0.0, %v3252
      %v3254 = vpop.f32.mrb[0].mxu0
      %3255 = vmatprep.mubr.bf16.mxu0 0
      %3256 = vmatmul.mubr.bf16.gmra.mrb[0].mxu0 %v3129
      %v3257 = vpop.f32.mrb[0].mxu0
      %v3258 = vadd.f32 0.0, %v3257
      %v3259 = vpop.f32.mrb[0].mxu0
      %v3260 = vpop.f32.mrb[0].mxu0
      %v3261 = vadd.f32 0.0, %v3260
      %v3262 = vpop.f32.mrb[0].mxu0
      %3263 = vmatprep.mubr.bf16.mxu0 0
      %3264 = vmatmul.mubr.bf16.gmra.mrb[0].mxu0 %v3130
      %v3265 = vpop.f32.mrb[0].mxu0
      %v3266 = vadd.f32 0.0, %v3265
      %v3267 = vpop.f32.mrb[0].mxu0
      %v3268 = vpop.f32.mrb[0].mxu0
      %v3269 = vadd.f32 0.0, %v3268
      %v3270 = vpop.f32.mrb[0].mxu0
      %3271 = vmatprep.mubr.bf16.mxu0 0
      %3272 = vmatmul.mubr.bf16.gmra.mrb[0].mxu0 %v3131
      %v3273 = vpop.f32.mrb[0].mxu0
      %v3274 = vadd.f32 0.0, %v3273
      %v3275 = vpop.f32.mrb[0].mxu0
      %v3276 = vpop.f32.mrb[0].mxu0
      %v3277 = vadd.f32 0.0, %v3276
      %v3278 = vpop.f32.mrb[0].mxu0
      %3279 = vmatprep.mubr.bf16.mxu0 0
      %3280 = vmatmul.mubr.bf16.gmra.mrb[0].mxu0 %v3132
      %v3281 = vpop.f32.mrb[0].mxu0
      %v3282 = vadd.f32 0.0, %v3281
      %v3283 = vpop.f32.mrb[0].mxu0
      %v3284 = vpop.f32.mrb[0].mxu0
      %v3285 = vadd.f32 0.0, %v3284
      %v3286 = vpop.f32.mrb[0].mxu0
      %3287 = vmatprep.mubr.bf16.mxu0 0
      %3288 = vmatmul.mubr.bf16.gmra.mrb[0].mxu0 %v3133
      %v3289 = vpop.f32.mrb[0].mxu0
      %v3290 = vadd.f32 0.0, %v3289
      %v3291 = vpop.f32.mrb[0].mxu0
      %v3292 = vpop.f32.mrb[0].mxu0
      %v3293 = vadd.f32 0.0, %v3292
      %v3294 = vpop.f32.mrb[0].mxu0
      %3295 = vmatprep.mubr.bf16.mxu0 0
      %3296 = vmatmul.mubr.bf16.gmra.mrb[0].mxu0 %v3134
      %v3297 = vpop.f32.mrb[0].mxu0
      %v3298 = vadd.f32 0.0, %v3297
      %v3299 = vpop.f32.mrb[0].mxu0
      %v3300 = vpop.f32.mrb[0].mxu0
      %v3301 = vadd.f32 0.0, %v3300
      %v3302 = vpop.f32.mrb[0].mxu0
      %3303 = vmatprep.mubr.bf16.mxu0 0
      %3304 = vmatmul.mubr.bf16.gmra.mrb[0].mxu0 %v3135
      %v3305 = vpop.f32.mrb[0].mxu0
      %v3306 = vadd.f32 0.0, %v3305
      %v3307 = vpop.f32.mrb[0].mxu0
      %v3308 = vpop.f32.mrb[0].mxu0
      %v3309 = vadd.f32 0.0, %v3308
      %v3310 = vpop.f32.mrb[0].mxu0
      %3311 = vmatprep.mubr.bf16.mxu0 0
      %3312 = vmatmul.mubr.bf16.gmra.mrb[0].mxu0 %v3136
      %v3313 = vpop.f32.mrb[0].mxu0
      %v3314 = vadd.f32 0.0, %v3313
      %v3315 = vpop.f32.mrb[0].mxu0
      %v3316 = vpop.f32.mrb[0].mxu0
      %v3317 = vadd.f32 0.0, %v3316
      %v3318 = vpop.f32.mrb[0].mxu0
      %3319 = vmatprep.mubr.bf16.mxu0 0
      %3320 = vmatmul.mubr.bf16.gmra.mrb[0].mxu0 %v3137
      %v3321 = vpop.f32.mrb[0].mxu0
      %v3322 = vadd.f32 0.0, %v3321
      %v3323 = vpop.f32.mrb[0].mxu0
      %v3324 = vpop.f32.mrb[0].mxu0
      %v3325 = vadd.f32 0.0, %v3324
      %v3326 = vpop.f32.mrb[0].mxu0
      %3327 = vmatprep.mubr.bf16.mxu0 0
      %3328 = vmatmul.mubr.bf16.gmra.mrb[0].mxu0 %v3138
      %v3329 = vpop.f32.mrb[0].mxu0
      %v3330 = vadd.f32 0.0, %v3329
      %v3331 = vpop.f32.mrb[0].mxu0
      %v3332 = vpop.f32.mrb[0].mxu0
      %v3333 = vadd.f32 0.0, %v3332
      %v3334 = vpop.f32.mrb[0].mxu0
      %3335 = vmatprep.mubr.bf16.mxu0 0
      %3336 = vmatmul.mubr.bf16.gmra.mrb[0].mxu0 %v3139
      %v3337 = vpop.f32.mrb[0].mxu0
      %v3338 = vadd.f32 0.0, %v3337
      %v3339 = vpop.f32.mrb[0].mxu0
      %v3340 = vpop.f32.mrb[0].mxu0
      %v3341 = vadd.f32 0.0, %v3340
      %v3342 = vpop.f32.mrb[0].mxu0
      %3343 = vmatprep.mubr.bf16.mxu0 0
      %3344 = vmatmul.mubr.bf16.gmra.mrb[0].mxu0 %v3140
      %v3345 = vpop.f32.mrb[0].mxu0
      %v3346 = vadd.f32 0.0, %v3345
      %v3347 = vpop.f32.mrb[0].mxu0
      %v3348 = vpop.f32.mrb[0].mxu0
      %v3349 = vadd.f32 0.0, %v3348
      %v3350 = vpop.f32.mrb[0].mxu0
      %3351 = vmatprep.mubr.bf16.mxu0 0
      %3352 = vmatmul.mubr.bf16.gmra.mrb[0].mxu0 %v3141
      %v3353 = vpop.f32.mrb[0].mxu0
      %v3354 = vadd.f32 0.0, %v3353
      %v3355 = vpop.f32.mrb[0].mxu0
      %v3356 = vpop.f32.mrb[0].mxu0
      %v3357 = vadd.f32 0.0, %v3356
      %v3358 = vpop.f32.mrb[0].mxu0
      %3359 = vmatprep.mubr.bf16.mxu0 0
      %3360 = vmatmul.mubr.bf16.gmra.mrb[0].mxu0 %v3142
      %v3361 = vpop.f32.mrb[0].mxu0
      %v3362 = vadd.f32 0.0, %v3361
      %v3363 = vpop.f32.mrb[0].mxu0
      %v3364 = vpop.f32.mrb[0].mxu0
      %v3365 = vadd.f32 0.0, %v3364
      %v3366 = vpop.f32.mrb[0].mxu0
      %3367 = vdwg.mxu0
      %v3368 = vadd.f32 %v2870, %v3242
      %v3369 = vadd.f32 %v2871, %v3245
      %v3370 = vadd.f32 %v2872, %v3250
      %v3371 = vadd.f32 %v2873, %v3253
      %v3372 = vadd.f32 %v2874, %v3258
      %v3373 = vadd.f32 %v2875, %v3261
      %v3374 = vadd.f32 %v2876, %v3266
      %v3375 = vadd.f32 %v2877, %v3269
      %v3376 = vadd.f32 %v2878, %v3274
      %v3377 = vadd.f32 %v2879, %v3277
      %v3378 = vadd.f32 %v2880, %v3282
      %v3379 = vadd.f32 %v2881, %v3285
      %v3380 = vadd.f32 %v2882, %v3290
      %v3381 = vadd.f32 %v2883, %v3293
      %v3382 = vadd.f32 %v2884, %v3298
      %v3383 = vadd.f32 %v2885, %v3301
      %v3384 = vadd.f32 %v2886, %v3306
      %v3385 = vadd.f32 %v2887, %v3309
      %v3386 = vadd.f32 %v2888, %v3314
      %v3387 = vadd.f32 %v2889, %v3317
      %v3388 = vadd.f32 %v2890, %v3322
      %v3389 = vadd.f32 %v2891, %v3325
      %v3390 = vadd.f32 %v2892, %v3330
      %v3391 = vadd.f32 %v2893, %v3333
      %v3392 = vadd.f32 %v2894, %v3338
      %v3393 = vadd.f32 %v2895, %v3341
      %v3394 = vadd.f32 %v2896, %v3346
      %v3395 = vadd.f32 %v2897, %v3349
      %v3396 = vadd.f32 %v2898, %v3354
      %v3397 = vadd.f32 %v2899, %v3357
      %v3398 = vadd.f32 %v2900, %v3362
      %v3399 = vadd.f32 %v2901, %v3365
      %s3400 = scalar_lea.vmem %s210, 24
      %v3401 = vld [vmem:[%s3400] sm:$0xf]
      %v3402 = vld [vmem:[%s3400 + $0x4] sm:$0xf]
      %v3403 = vld [vmem:[%s3400 + $0xc] sm:$0xf]
      %v3404 = vld [vmem:[%s3400 + $0x10] sm:$0xf]
      %v3405 = vld [vmem:[%s3400 + $0x18] sm:$0xf]
      %v3406 = vld [vmem:[%s3400 + $0x1c] sm:$0xf]
      %v3407 = vld [vmem:[%s3400 + $0x24] sm:$0xf]
      %v3408 = vld [vmem:[%s3400 + $0x28] sm:$0xf]
      %v3409 = vld [vmem:[%s3400 + $0x30] sm:$0xf]
      %v3410 = vld [vmem:[%s3400 + $0x34] sm:$0xf]
      %v3411 = vld [vmem:[%s3400 + $0x3c] sm:$0xf]
      %v3412 = vld [vmem:[%s3400 + $0x40] sm:$0xf]
      %v3413 = vld [vmem:[%s3400 + $0x48] sm:$0xf]
      %v3414 = vld [vmem:[%s3400 + $0x4c] sm:$0xf]
      %v3415 = vld [vmem:[%s3400 + $0x54] sm:$0xf]
      %v3416 = vld [vmem:[%s3400 + $0x58] sm:$0xf]
      %v3417 = vld [vmem:[%s3400 + $0x60] sm:$0xf]
      %v3418 = vld [vmem:[%s3400 + $0x64] sm:$0xf]
      %v3419 = vld [vmem:[%s3400 + $0x6c] sm:$0xf]
      %v3420 = vld [vmem:[%s3400 + $0x70] sm:$0xf]
      %v3421 = vld [vmem:[%s3400 + $0x78] sm:$0xf]
      %v3422 = vld [vmem:[%s3400 + $0x7c] sm:$0xf]
      %v3423 = vld [vmem:[%s3400 + $0x84] sm:$0xf]
      %v3424 = vld [vmem:[%s3400 + $0x88] sm:$0xf]
      %v3425 = vld [vmem:[%s3400 + $0x90] sm:$0xf]
      %v3426 = vld [vmem:[%s3400 + $0x94] sm:$0xf]
      %v3427 = vld [vmem:[%s3400 + $0x9c] sm:$0xf]
      %v3428 = vld [vmem:[%s3400 + $0xa0] sm:$0xf]
      %v3429 = vld [vmem:[%s3400 + $0xa8] sm:$0xf]
      %v3430 = vld [vmem:[%s3400 + $0xac] sm:$0xf]
      %v3431 = vld [vmem:[%s3400 + $0xb4] sm:$0xf]
      %v3432 = vld [vmem:[%s3400 + $0xb8] sm:$0xf]
      %s3433 = scalar_lea.vmem %s1, 384
      %v3434 = vld [vmem:[%s3433] sm:$0xf]
      %v3435 = vld [vmem:[%s3433 + $0x4] sm:$0xf]
      %v3436 = vld [vmem:[%s3433 + $0x8] sm:$0xf]
      %v3437 = vld [vmem:[%s3433 + $0xc] sm:$0xf]
      %v3438 = vld [vmem:[%s3433 + $0x10] sm:$0xf]
      %v3439 = vld [vmem:[%s3433 + $0x14] sm:$0xf]
      %v3440 = vld [vmem:[%s3433 + $0x18] sm:$0xf]
      %v3441 = vld [vmem:[%s3433 + $0x1c] sm:$0xf]
      %v3442 = vld [vmem:[%s3433 + $0x20] sm:$0xf]
      %v3443 = vld [vmem:[%s3433 + $0x24] sm:$0xf]
      %v3444 = vld [vmem:[%s3433 + $0x28] sm:$0xf]
      %v3445 = vld [vmem:[%s3433 + $0x2c] sm:$0xf]
      %v3446 = vld [vmem:[%s3433 + $0x30] sm:$0xf]
      %v3447 = vld [vmem:[%s3433 + $0x34] sm:$0xf]
      %v3448 = vld [vmem:[%s3433 + $0x38] sm:$0xf]
      %v3449 = vld [vmem:[%s3433 + $0x3c] sm:$0xf]
      %v3482 = vunpack.c.l.b16 %v3401
      %v3483 = vunpack.c.l.b16 %v3402
      %v3484 = vunpack.c.l.b16 %v3403
      %v3485 = vunpack.c.l.b16 %v3404
      %v3486 = vunpack.c.l.b16 %v3405
      %v3487 = vunpack.c.l.b16 %v3406
      %v3488 = vunpack.c.l.b16 %v3407
      %v3489 = vunpack.c.l.b16 %v3408
      %v3490 = vunpack.c.l.b16 %v3409
      %v3491 = vunpack.c.l.b16 %v3410
      %v3492 = vunpack.c.l.b16 %v3411
      %v3493 = vunpack.c.l.b16 %v3412
      %v3494 = vunpack.c.l.b16 %v3413
      %v3495 = vunpack.c.l.b16 %v3414
      %v3496 = vunpack.c.l.b16 %v3415
      %v3497 = vunpack.c.l.b16 %v3416
      %v3498 = vunpack.c.l.b16 %v3417
      %v3499 = vunpack.c.l.b16 %v3418
      %v3500 = vunpack.c.l.b16 %v3419
      %v3501 = vunpack.c.l.b16 %v3420
      %v3502 = vunpack.c.l.b16 %v3421
      %v3503 = vunpack.c.l.b16 %v3422
      %v3504 = vunpack.c.l.b16 %v3423
      %v3505 = vunpack.c.l.b16 %v3424
      %v3506 = vunpack.c.l.b16 %v3425
      %v3507 = vunpack.c.l.b16 %v3426
      %v3508 = vunpack.c.l.b16 %v3427
      %v3509 = vunpack.c.l.b16 %v3428
      %v3510 = vunpack.c.l.b16 %v3429
      %v3511 = vunpack.c.l.b16 %v3430
      %v3512 = vunpack.c.l.b16 %v3431
      %v3513 = vunpack.c.l.b16 %v3432
      %v3514 = vpack.c.b16 %v3483, %v3482
      %v3515 = vpack.c.b16 %v3485, %v3484
      %v3516 = vpack.c.b16 %v3487, %v3486
      %v3517 = vpack.c.b16 %v3489, %v3488
      %v3518 = vpack.c.b16 %v3491, %v3490
      %v3519 = vpack.c.b16 %v3493, %v3492
      %v3520 = vpack.c.b16 %v3495, %v3494
      %v3521 = vpack.c.b16 %v3497, %v3496
      %v3522 = vpack.c.b16 %v3499, %v3498
      %v3523 = vpack.c.b16 %v3501, %v3500
      %v3524 = vpack.c.b16 %v3503, %v3502
      %v3525 = vpack.c.b16 %v3505, %v3504
      %v3526 = vpack.c.b16 %v3507, %v3506
      %v3527 = vpack.c.b16 %v3509, %v3508
      %v3528 = vpack.c.b16 %v3511, %v3510
      %v3529 = vpack.c.b16 %v3513, %v3512
      %v3562 = vunpack.c.l.b16 %v3434
      %v3563 = vunpack.c.l.b16 %v3435
      %v3564 = vunpack.c.l.b16 %v3436
      %v3565 = vunpack.c.l.b16 %v3437
      %v3566 = vunpack.c.l.b16 %v3438
      %v3567 = vunpack.c.l.b16 %v3439
      %v3568 = vunpack.c.l.b16 %v3440
      %v3569 = vunpack.c.l.b16 %v3441
      %v3570 = vunpack.c.l.b16 %v3442
      %v3571 = vunpack.c.l.b16 %v3443
      %v3572 = vunpack.c.l.b16 %v3444
      %v3573 = vunpack.c.l.b16 %v3445
      %v3574 = vunpack.c.l.b16 %v3446
      %v3575 = vunpack.c.l.b16 %v3447
      %v3576 = vunpack.c.l.b16 %v3448
      %v3577 = vunpack.c.l.b16 %v3449
      %v3578 = vpack.c.b16 %v3563, %v3562
      %v3579 = vpack.c.b16 %v3565, %v3564
      %v3580 = vpack.c.b16 %v3567, %v3566
      %v3581 = vpack.c.b16 %v3569, %v3568
      %v3582 = vpack.c.b16 %v3571, %v3570
      %v3583 = vpack.c.b16 %v3573, %v3572
      %v3584 = vpack.c.b16 %v3575, %v3574
      %v3585 = vpack.c.b16 %v3577, %v3576
      %3594 = vmatprep.subr.bf16.mxu0 0
      %3595 = vmatpush1.bf16.msra.mxu0 %v3578
      %3596 = vmatprep.subr.bf16.mxu0 0
      %3597 = vmatpush1.bf16.msra.mxu0 %v3579
      %3598 = vmatprep.subr.bf16.mxu0 0
      %3599 = vmatpush1.bf16.msra.mxu0 %v3580
      %3600 = vmatprep.subr.bf16.mxu0 0
      %3601 = vmatpush1.bf16.msra.mxu0 %v3581
      %3602 = vmatprep.subr.bf16.mxu0 0
      %3603 = vmatpush1.bf16.msra.mxu0 %v3582
      %3604 = vmatprep.subr.bf16.mxu0 0
      %3605 = vmatpush1.bf16.msra.mxu0 %v3583
      %3606 = vmatprep.subr.bf16.mxu0 0
      %3607 = vmatpush1.bf16.msra.mxu0 %v3584
      %3608 = vmatprep.subr.bf16.mxu0 0
      %3609 = vmatpush1.bf16.msra.mxu0 %v3585
      %3610 = vmatprep.subr.bf16.mxu0 0
      %3611 = vmatpush1.bf16.msra.mxu0 0
      %3612 = vmatprep.subr.bf16.mxu0 0
      %3613 = vmatpush1.bf16.msra.mxu0 0
      %3614 = vmatprep.subr.bf16.mxu0 0
      %3615 = vmatpush1.bf16.msra.mxu0 0
      %3616 = vmatprep.subr.bf16.mxu0 0
      %3617 = vmatpush1.bf16.msra.mxu0 0
      %3618 = vmatprep.subr.bf16.mxu0 0
      %3619 = vmatpush1.bf16.msra.mxu0 0
      %3620 = vmatprep.subr.bf16.mxu0 0
      %3621 = vmatpush1.bf16.msra.mxu0 0
      %3622 = vmatprep.subr.bf16.mxu0 0
      %3623 = vmatpush1.bf16.msra.mxu0 0
      %3624 = vmatprep.subr.bf16.mxu0 0
      %3625 = vmatpush1.bf16.msra.mxu0 0
      %3626 = vmatprep.mubr.bf16.mxu0 0
      %3627 = vmatmul.mubr.bf16.gmra.mrb[0].mxu0 %v3514
      %v3628 = vpop.f32.mrb[0].mxu0
      %v3629 = vadd.f32 0.0, %v3628
      %v3630 = vpop.f32.mrb[0].mxu0
      %v3631 = vpop.f32.mrb[0].mxu0
      %v3632 = vadd.f32 0.0, %v3631
      %v3633 = vpop.f32.mrb[0].mxu0
      %3634 = vmatprep.mubr.bf16.mxu0 0
      %3635 = vmatmul.mubr.bf16.gmra.mrb[0].mxu0 %v3515
      %v3636 = vpop.f32.mrb[0].mxu0
      %v3637 = vadd.f32 0.0, %v3636
      %v3638 = vpop.f32.mrb[0].mxu0
      %v3639 = vpop.f32.mrb[0].mxu0
      %v3640 = vadd.f32 0.0, %v3639
      %v3641 = vpop.f32.mrb[0].mxu0
      %3642 = vmatprep.mubr.bf16.mxu0 0
      %3643 = vmatmul.mubr.bf16.gmra.mrb[0].mxu0 %v3516
      %v3644 = vpop.f32.mrb[0].mxu0
      %v3645 = vadd.f32 0.0, %v3644
      %v3646 = vpop.f32.mrb[0].mxu0
      %v3647 = vpop.f32.mrb[0].mxu0
      %v3648 = vadd.f32 0.0, %v3647
      %v3649 = vpop.f32.mrb[0].mxu0
      %3650 = vmatprep.mubr.bf16.mxu0 0
      %3651 = vmatmul.mubr.bf16.gmra.mrb[0].mxu0 %v3517
      %v3652 = vpop.f32.mrb[0].mxu0
      %v3653 = vadd.f32 0.0, %v3652
      %v3654 = vpop.f32.mrb[0].mxu0
      %v3655 = vpop.f32.mrb[0].mxu0
      %v3656 = vadd.f32 0.0, %v3655
      %v3657 = vpop.f32.mrb[0].mxu0
      %3658 = vmatprep.mubr.bf16.mxu0 0
      %3659 = vmatmul.mubr.bf16.gmra.mrb[0].mxu0 %v3518
      %v3660 = vpop.f32.mrb[0].mxu0
      %v3661 = vadd.f32 0.0, %v3660
      %v3662 = vpop.f32.mrb[0].mxu0
      %v3663 = vpop.f32.mrb[0].mxu0
      %v3664 = vadd.f32 0.0, %v3663
      %v3665 = vpop.f32.mrb[0].mxu0
      %3666 = vmatprep.mubr.bf16.mxu0 0
      %3667 = vmatmul.mubr.bf16.gmra.mrb[0].mxu0 %v3519
      %v3668 = vpop.f32.mrb[0].mxu0
      %v3669 = vadd.f32 0.0, %v3668
      %v3670 = vpop.f32.mrb[0].mxu0
      %v3671 = vpop.f32.mrb[0].mxu0
      %v3672 = vadd.f32 0.0, %v3671
      %v3673 = vpop.f32.mrb[0].mxu0
      %3674 = vmatprep.mubr.bf16.mxu0 0
      %3675 = vmatmul.mubr.bf16.gmra.mrb[0].mxu0 %v3520
      %v3676 = vpop.f32.mrb[0].mxu0
      %v3677 = vadd.f32 0.0, %v3676
      %v3678 = vpop.f32.mrb[0].mxu0
      %v3679 = vpop.f32.mrb[0].mxu0
      %v3680 = vadd.f32 0.0, %v3679
      %v3681 = vpop.f32.mrb[0].mxu0
      %3682 = vmatprep.mubr.bf16.mxu0 0
      %3683 = vmatmul.mubr.bf16.gmra.mrb[0].mxu0 %v3521
      %v3684 = vpop.f32.mrb[0].mxu0
      %v3685 = vadd.f32 0.0, %v3684
      %v3686 = vpop.f32.mrb[0].mxu0
      %v3687 = vpop.f32.mrb[0].mxu0
      %v3688 = vadd.f32 0.0, %v3687
      %v3689 = vpop.f32.mrb[0].mxu0
      %3690 = vmatprep.mubr.bf16.mxu0 0
      %3691 = vmatmul.mubr.bf16.gmra.mrb[0].mxu0 %v3522
      %v3692 = vpop.f32.mrb[0].mxu0
      %v3693 = vadd.f32 0.0, %v3692
      %v3694 = vpop.f32.mrb[0].mxu0
      %v3695 = vpop.f32.mrb[0].mxu0
      %v3696 = vadd.f32 0.0, %v3695
      %v3697 = vpop.f32.mrb[0].mxu0
      %3698 = vmatprep.mubr.bf16.mxu0 0
      %3699 = vmatmul.mubr.bf16.gmra.mrb[0].mxu0 %v3523
      %v3700 = vpop.f32.mrb[0].mxu0
      %v3701 = vadd.f32 0.0, %v3700
      %v3702 = vpop.f32.mrb[0].mxu0
      %v3703 = vpop.f32.mrb[0].mxu0
      %v3704 = vadd.f32 0.0, %v3703
      %v3705 = vpop.f32.mrb[0].mxu0
      %3706 = vmatprep.mubr.bf16.mxu0 0
      %3707 = vmatmul.mubr.bf16.gmra.mrb[0].mxu0 %v3524
      %v3708 = vpop.f32.mrb[0].mxu0
      %v3709 = vadd.f32 0.0, %v3708
      %v3710 = vpop.f32.mrb[0].mxu0
      %v3711 = vpop.f32.mrb[0].mxu0
      %v3712 = vadd.f32 0.0, %v3711
      %v3713 = vpop.f32.mrb[0].mxu0
      %3714 = vmatprep.mubr.bf16.mxu0 0
      %3715 = vmatmul.mubr.bf16.gmra.mrb[0].mxu0 %v3525
      %v3716 = vpop.f32.mrb[0].mxu0
      %v3717 = vadd.f32 0.0, %v3716
      %v3718 = vpop.f32.mrb[0].mxu0
      %v3719 = vpop.f32.mrb[0].mxu0
      %v3720 = vadd.f32 0.0, %v3719
      %v3721 = vpop.f32.mrb[0].mxu0
      %3722 = vmatprep.mubr.bf16.mxu0 0
      %3723 = vmatmul.mubr.bf16.gmra.mrb[0].mxu0 %v3526
      %v3724 = vpop.f32.mrb[0].mxu0
      %v3725 = vadd.f32 0.0, %v3724
      %v3726 = vpop.f32.mrb[0].mxu0
      %v3727 = vpop.f32.mrb[0].mxu0
      %v3728 = vadd.f32 0.0, %v3727
      %v3729 = vpop.f32.mrb[0].mxu0
      %3730 = vmatprep.mubr.bf16.mxu0 0
      %3731 = vmatmul.mubr.bf16.gmra.mrb[0].mxu0 %v3527
      %v3732 = vpop.f32.mrb[0].mxu0
      %v3733 = vadd.f32 0.0, %v3732
      %v3734 = vpop.f32.mrb[0].mxu0
      %v3735 = vpop.f32.mrb[0].mxu0
      %v3736 = vadd.f32 0.0, %v3735
      %v3737 = vpop.f32.mrb[0].mxu0
      %3738 = vmatprep.mubr.bf16.mxu0 0
      %3739 = vmatmul.mubr.bf16.gmra.mrb[0].mxu0 %v3528
      %v3740 = vpop.f32.mrb[0].mxu0
      %v3741 = vadd.f32 0.0, %v3740
      %v3742 = vpop.f32.mrb[0].mxu0
      %v3743 = vpop.f32.mrb[0].mxu0
      %v3744 = vadd.f32 0.0, %v3743
      %v3745 = vpop.f32.mrb[0].mxu0
      %3746 = vmatprep.mubr.bf16.mxu0 0
      %3747 = vmatmul.mubr.bf16.gmra.mrb[0].mxu0 %v3529
      %v3748 = vpop.f32.mrb[0].mxu0
      %v3749 = vadd.f32 0.0, %v3748
      %v3750 = vpop.f32.mrb[0].mxu0
      %v3751 = vpop.f32.mrb[0].mxu0
      %v3752 = vadd.f32 0.0, %v3751
      %v3753 = vpop.f32.mrb[0].mxu0
      %3754 = vdwg.mxu0
      %v3755 = vadd.f32 %v3368, %v3629
      %v3756 = vadd.f32 %v3369, %v3632
      %v3757 = vadd.f32 %v3370, %v3637
      %v3758 = vadd.f32 %v3371, %v3640
      %v3759 = vadd.f32 %v3372, %v3645
      %v3760 = vadd.f32 %v3373, %v3648
      %v3761 = vadd.f32 %v3374, %v3653
      %v3762 = vadd.f32 %v3375, %v3656
      %v3763 = vadd.f32 %v3376, %v3661
      %v3764 = vadd.f32 %v3377, %v3664
      %v3765 = vadd.f32 %v3378, %v3669
      %v3766 = vadd.f32 %v3379, %v3672
      %v3767 = vadd.f32 %v3380, %v3677
      %v3768 = vadd.f32 %v3381, %v3680
      %v3769 = vadd.f32 %v3382, %v3685
      %v3770 = vadd.f32 %v3383, %v3688
      %v3771 = vadd.f32 %v3384, %v3693
      %v3772 = vadd.f32 %v3385, %v3696
      %v3773 = vadd.f32 %v3386, %v3701
      %v3774 = vadd.f32 %v3387, %v3704
      %v3775 = vadd.f32 %v3388, %v3709
      %v3776 = vadd.f32 %v3389, %v3712
      %v3777 = vadd.f32 %v3390, %v3717
      %v3778 = vadd.f32 %v3391, %v3720
      %v3779 = vadd.f32 %v3392, %v3725
      %v3780 = vadd.f32 %v3393, %v3728
      %v3781 = vadd.f32 %v3394, %v3733
      %v3782 = vadd.f32 %v3395, %v3736
      %v3783 = vadd.f32 %v3396, %v3741
      %v3784 = vadd.f32 %v3397, %v3744
      %v3785 = vadd.f32 %v3398, %v3749
      %v3786 = vadd.f32 %v3399, %v3752
      %v3787 = vld [vmem:[%s3400] sm:$0xf]
      %v3788 = vld [vmem:[%s3400 + $0x4] sm:$0xf]
      %v3789 = vld [vmem:[%s3400 + $0x8] sm:$0x1]
      %v3790 = vld [vmem:[%s3400 + $0xc] sm:$0xf]
      %v3791 = vld [vmem:[%s3400 + $0x10] sm:$0xf]
      %v3792 = vld [vmem:[%s3400 + $0x14] sm:$0x1]
      %v3793 = vld [vmem:[%s3400 + $0x18] sm:$0xf]
      %v3794 = vld [vmem:[%s3400 + $0x1c] sm:$0xf]
      %v3795 = vld [vmem:[%s3400 + $0x20] sm:$0x1]
      %v3796 = vld [vmem:[%s3400 + $0x24] sm:$0xf]
      %v3797 = vld [vmem:[%s3400 + $0x28] sm:$0xf]
      %v3798 = vld [vmem:[%s3400 + $0x2c] sm:$0x1]
      %v3799 = vld [vmem:[%s3400 + $0x30] sm:$0xf]
      %v3800 = vld [vmem:[%s3400 + $0x34] sm:$0xf]
      %v3801 = vld [vmem:[%s3400 + $0x38] sm:$0x1]
      %v3802 = vld [vmem:[%s3400 + $0x3c] sm:$0xf]
      %v3803 = vld [vmem:[%s3400 + $0x40] sm:$0xf]
      %v3804 = vld [vmem:[%s3400 + $0x44] sm:$0x1]
      %v3805 = vld [vmem:[%s3400 + $0x48] sm:$0xf]
      %v3806 = vld [vmem:[%s3400 + $0x4c] sm:$0xf]
      %v3807 = vld [vmem:[%s3400 + $0x50] sm:$0x1]
      %v3808 = vld [vmem:[%s3400 + $0x54] sm:$0xf]
      %v3809 = vld [vmem:[%s3400 + $0x58] sm:$0xf]
      %v3810 = vld [vmem:[%s3400 + $0x5c] sm:$0x1]
      %v3811 = vld [vmem:[%s3400 + $0x60] sm:$0xf]
      %v3812 = vld [vmem:[%s3400 + $0x64] sm:$0xf]
      %v3813 = vld [vmem:[%s3400 + $0x68] sm:$0x1]
      %v3814 = vld [vmem:[%s3400 + $0x6c] sm:$0xf]
      %v3815 = vld [vmem:[%s3400 + $0x70] sm:$0xf]
      %v3816 = vld [vmem:[%s3400 + $0x74] sm:$0x1]
      %v3817 = vld [vmem:[%s3400 + $0x78] sm:$0xf]
      %v3818 = vld [vmem:[%s3400 + $0x7c] sm:$0xf]
      %v3819 = vld [vmem:[%s3400 + $0x80] sm:$0x1]
      %v3820 = vld [vmem:[%s3400 + $0x84] sm:$0xf]
      %v3821 = vld [vmem:[%s3400 + $0x88] sm:$0xf]
      %v3822 = vld [vmem:[%s3400 + $0x8c] sm:$0x1]
      %v3823 = vld [vmem:[%s3400 + $0x90] sm:$0xf]
      %v3824 = vld [vmem:[%s3400 + $0x94] sm:$0xf]
      %v3825 = vld [vmem:[%s3400 + $0x98] sm:$0x1]
      %v3826 = vld [vmem:[%s3400 + $0x9c] sm:$0xf]
      %v3827 = vld [vmem:[%s3400 + $0xa0] sm:$0xf]
      %v3828 = vld [vmem:[%s3400 + $0xa4] sm:$0x1]
      %v3829 = vld [vmem:[%s3400 + $0xa8] sm:$0xf]
      %v3830 = vld [vmem:[%s3400 + $0xac] sm:$0xf]
      %v3831 = vld [vmem:[%s3400 + $0xb0] sm:$0x1]
      %v3832 = vld [vmem:[%s3400 + $0xb4] sm:$0xf]
      %v3833 = vld [vmem:[%s3400 + $0xb8] sm:$0xf]
      %v3834 = vld [vmem:[%s3400 + $0xbc] sm:$0x1]
      %v3836 = vshrl.u32 %v3787, 16
      %v3838 = vrot.slane %v3836, 4
      %v3839 = vshll.u32 %v3787, 16
      %v3841 = vrot.slane %v3839, 5
      %v3842 = vor.u32 %v3838, %v3841
      %v3843 = vrot.slane %v3842, 4
      %v3845 = vshll.u32 %v3788, 16
      %v3847 = vrot.slane %v3845, 5
      %v3848 = vsel %vm296, %v3843, %v3847
      %v3849 = vshrl.u32 %v3788, 16
      %v3851 = vrot.slane %v3849, 4
      %v3852 = vor.u32 %v3851, %v3847
      %v3853 = vrot.slane %v3852, 4
      %v3855 = vshll.u32 %v3789, 16
      %v3857 = vrot.slane %v3855, 5
      %v3858 = vsel %vm296, %v3853, %v3857
      %v3860 = vshrl.u32 %v3790, 16
      %v3862 = vrot.slane %v3860, 4
      %v3863 = vshll.u32 %v3790, 16
      %v3865 = vrot.slane %v3863, 5
      %v3866 = vor.u32 %v3862, %v3865
      %v3867 = vrot.slane %v3866, 4
      %v3869 = vshll.u32 %v3791, 16
      %v3871 = vrot.slane %v3869, 5
      %v3872 = vsel %vm296, %v3867, %v3871
      %v3873 = vshrl.u32 %v3791, 16
      %v3875 = vrot.slane %v3873, 4
      %v3876 = vor.u32 %v3875, %v3871
      %v3877 = vrot.slane %v3876, 4
      %v3879 = vshll.u32 %v3792, 16
      %v3881 = vrot.slane %v3879, 5
      %v3882 = vsel %vm296, %v3877, %v3881
      %v3884 = vshrl.u32 %v3793, 16
      %v3886 = vrot.slane %v3884, 4
      %v3887 = vshll.u32 %v3793, 16
      %v3889 = vrot.slane %v3887, 5
      %v3890 = vor.u32 %v3886, %v3889
      %v3891 = vrot.slane %v3890, 4
      %v3893 = vshll.u32 %v3794, 16
      %v3895 = vrot.slane %v3893, 5
      %v3896 = vsel %vm296, %v3891, %v3895
      %v3897 = vshrl.u32 %v3794, 16
      %v3899 = vrot.slane %v3897, 4
      %v3900 = vor.u32 %v3899, %v3895
      %v3901 = vrot.slane %v3900, 4
      %v3903 = vshll.u32 %v3795, 16
      %v3905 = vrot.slane %v3903, 5
      %v3906 = vsel %vm296, %v3901, %v3905
      %v3908 = vshrl.u32 %v3796, 16
      %v3910 = vrot.slane %v3908, 4
      %v3911 = vshll.u32 %v3796, 16
      %v3913 = vrot.slane %v3911, 5
      %v3914 = vor.u32 %v3910, %v3913
      %v3915 = vrot.slane %v3914, 4
      %v3917 = vshll.u32 %v3797, 16
      %v3919 = vrot.slane %v3917, 5
      %v3920 = vsel %vm296, %v3915, %v3919
      %v3921 = vshrl.u32 %v3797, 16
      %v3923 = vrot.slane %v3921, 4
      %v3924 = vor.u32 %v3923, %v3919
      %v3925 = vrot.slane %v3924, 4
      %v3927 = vshll.u32 %v3798, 16
      %v3929 = vrot.slane %v3927, 5
      %v3930 = vsel %vm296, %v3925, %v3929
      %v3932 = vshrl.u32 %v3799, 16
      %v3934 = vrot.slane %v3932, 4
      %v3935 = vshll.u32 %v3799, 16
      %v3937 = vrot.slane %v3935, 5
      %v3938 = vor.u32 %v3934, %v3937
      %v3939 = vrot.slane %v3938, 4
      %v3941 = vshll.u32 %v3800, 16
      %v3943 = vrot.slane %v3941, 5
      %v3944 = vsel %vm296, %v3939, %v3943
      %v3945 = vshrl.u32 %v3800, 16
      %v3947 = vrot.slane %v3945, 4
      %v3948 = vor.u32 %v3947, %v3943
      %v3949 = vrot.slane %v3948, 4
      %v3951 = vshll.u32 %v3801, 16
      %v3953 = vrot.slane %v3951, 5
      %v3954 = vsel %vm296, %v3949, %v3953
      %v3956 = vshrl.u32 %v3802, 16
      %v3958 = vrot.slane %v3956, 4
      %v3959 = vshll.u32 %v3802, 16
      %v3961 = vrot.slane %v3959, 5
      %v3962 = vor.u32 %v3958, %v3961
      %v3963 = vrot.slane %v3962, 4
      %v3965 = vshll.u32 %v3803, 16
      %v3967 = vrot.slane %v3965, 5
      %v3968 = vsel %vm296, %v3963, %v3967
      %v3969 = vshrl.u32 %v3803, 16
      %v3971 = vrot.slane %v3969, 4
      %v3972 = vor.u32 %v3971, %v3967
      %v3973 = vrot.slane %v3972, 4
      %v3975 = vshll.u32 %v3804, 16
      %v3977 = vrot.slane %v3975, 5
      %v3978 = vsel %vm296, %v3973, %v3977
      %v3980 = vshrl.u32 %v3805, 16
      %v3982 = vrot.slane %v3980, 4
      %v3983 = vshll.u32 %v3805, 16
      %v3985 = vrot.slane %v3983, 5
      %v3986 = vor.u32 %v3982, %v3985
      %v3987 = vrot.slane %v3986, 4
      %v3989 = vshll.u32 %v3806, 16
      %v3991 = vrot.slane %v3989, 5
      %v3992 = vsel %vm296, %v3987, %v3991
      %v3993 = vshrl.u32 %v3806, 16
      %v3995 = vrot.slane %v3993, 4
      %v3996 = vor.u32 %v3995, %v3991
      %v3997 = vrot.slane %v3996, 4
      %v3999 = vshll.u32 %v3807, 16
      %v4001 = vrot.slane %v3999, 5
      %v4002 = vsel %vm296, %v3997, %v4001
      %v4004 = vshrl.u32 %v3808, 16
      %v4006 = vrot.slane %v4004, 4
      %v4007 = vshll.u32 %v3808, 16
      %v4009 = vrot.slane %v4007, 5
      %v4010 = vor.u32 %v4006, %v4009
      %v4011 = vrot.slane %v4010, 4
      %v4013 = vshll.u32 %v3809, 16
      %v4015 = vrot.slane %v4013, 5
      %v4016 = vsel %vm296, %v4011, %v4015
      %v4017 = vshrl.u32 %v3809, 16
      %v4019 = vrot.slane %v4017, 4
      %v4020 = vor.u32 %v4019, %v4015
      %v4021 = vrot.slane %v4020, 4
      %v4023 = vshll.u32 %v3810, 16
      %v4025 = vrot.slane %v4023, 5
      %v4026 = vsel %vm296, %v4021, %v4025
      %v4028 = vshrl.u32 %v3811, 16
      %v4030 = vrot.slane %v4028, 4
      %v4031 = vshll.u32 %v3811, 16
      %v4033 = vrot.slane %v4031, 5
      %v4034 = vor.u32 %v4030, %v4033
      %v4035 = vrot.slane %v4034, 4
      %v4037 = vshll.u32 %v3812, 16
      %v4039 = vrot.slane %v4037, 5
      %v4040 = vsel %vm296, %v4035, %v4039
      %v4041 = vshrl.u32 %v3812, 16
      %v4043 = vrot.slane %v4041, 4
      %v4044 = vor.u32 %v4043, %v4039
      %v4045 = vrot.slane %v4044, 4
      %v4047 = vshll.u32 %v3813, 16
      %v4049 = vrot.slane %v4047, 5
      %v4050 = vsel %vm296, %v4045, %v4049
      %v4052 = vshrl.u32 %v3814, 16
      %v4054 = vrot.slane %v4052, 4
      %v4055 = vshll.u32 %v3814, 16
      %v4057 = vrot.slane %v4055, 5
      %v4058 = vor.u32 %v4054, %v4057
      %v4059 = vrot.slane %v4058, 4
      %v4061 = vshll.u32 %v3815, 16
      %v4063 = vrot.slane %v4061, 5
      %v4064 = vsel %vm296, %v4059, %v4063
      %v4065 = vshrl.u32 %v3815, 16
      %v4067 = vrot.slane %v4065, 4
      %v4068 = vor.u32 %v4067, %v4063
      %v4069 = vrot.slane %v4068, 4
      %v4071 = vshll.u32 %v3816, 16
      %v4073 = vrot.slane %v4071, 5
      %v4074 = vsel %vm296, %v4069, %v4073
      %v4076 = vshrl.u32 %v3817, 16
      %v4078 = vrot.slane %v4076, 4
      %v4079 = vshll.u32 %v3817, 16
      %v4081 = vrot.slane %v4079, 5
      %v4082 = vor.u32 %v4078, %v4081
      %v4083 = vrot.slane %v4082, 4
      %v4085 = vshll.u32 %v3818, 16
      %v4087 = vrot.slane %v4085, 5
      %v4088 = vsel %vm296, %v4083, %v4087
      %v4089 = vshrl.u32 %v3818, 16
      %v4091 = vrot.slane %v4089, 4
      %v4092 = vor.u32 %v4091, %v4087
      %v4093 = vrot.slane %v4092, 4
      %v4095 = vshll.u32 %v3819, 16
      %v4097 = vrot.slane %v4095, 5
      %v4098 = vsel %vm296, %v4093, %v4097
      %v4100 = vshrl.u32 %v3820, 16
      %v4102 = vrot.slane %v4100, 4
      %v4103 = vshll.u32 %v3820, 16
      %v4105 = vrot.slane %v4103, 5
      %v4106 = vor.u32 %v4102, %v4105
      %v4107 = vrot.slane %v4106, 4
      %v4109 = vshll.u32 %v3821, 16
      %v4111 = vrot.slane %v4109, 5
      %v4112 = vsel %vm296, %v4107, %v4111
      %v4113 = vshrl.u32 %v3821, 16
      %v4115 = vrot.slane %v4113, 4
      %v4116 = vor.u32 %v4115, %v4111
      %v4117 = vrot.slane %v4116, 4
      %v4119 = vshll.u32 %v3822, 16
      %v4121 = vrot.slane %v4119, 5
      %v4122 = vsel %vm296, %v4117, %v4121
      %v4124 = vshrl.u32 %v3823, 16
      %v4126 = vrot.slane %v4124, 4
      %v4127 = vshll.u32 %v3823, 16
      %v4129 = vrot.slane %v4127, 5
      %v4130 = vor.u32 %v4126, %v4129
      %v4131 = vrot.slane %v4130, 4
      %v4133 = vshll.u32 %v3824, 16
      %v4135 = vrot.slane %v4133, 5
      %v4136 = vsel %vm296, %v4131, %v4135
      %v4137 = vshrl.u32 %v3824, 16
      %v4139 = vrot.slane %v4137, 4
      %v4140 = vor.u32 %v4139, %v4135
      %v4141 = vrot.slane %v4140, 4
      %v4143 = vshll.u32 %v3825, 16
      %v4145 = vrot.slane %v4143, 5
      %v4146 = vsel %vm296, %v4141, %v4145
      %v4148 = vshrl.u32 %v3826, 16
      %v4150 = vrot.slane %v4148, 4
      %v4151 = vshll.u32 %v3826, 16
      %v4153 = vrot.slane %v4151, 5
      %v4154 = vor.u32 %v4150, %v4153
      %v4155 = vrot.slane %v4154, 4
      %v4157 = vshll.u32 %v3827, 16
      %v4159 = vrot.slane %v4157, 5
      %v4160 = vsel %vm296, %v4155, %v4159
      %v4161 = vshrl.u32 %v3827, 16
      %v4163 = vrot.slane %v4161, 4
      %v4164 = vor.u32 %v4163, %v4159
      %v4165 = vrot.slane %v4164, 4
      %v4167 = vshll.u32 %v3828, 16
      %v4169 = vrot.slane %v4167, 5
      %v4170 = vsel %vm296, %v4165, %v4169
      %v4172 = vshrl.u32 %v3829, 16
      %v4174 = vrot.slane %v4172, 4
      %v4175 = vshll.u32 %v3829, 16
      %v4177 = vrot.slane %v4175, 5
      %v4178 = vor.u32 %v4174, %v4177
      %v4179 = vrot.slane %v4178, 4
      %v4181 = vshll.u32 %v3830, 16
      %v4183 = vrot.slane %v4181, 5
      %v4184 = vsel %vm296, %v4179, %v4183
      %v4185 = vshrl.u32 %v3830, 16
      %v4187 = vrot.slane %v4185, 4
      %v4188 = vor.u32 %v4187, %v4183
      %v4189 = vrot.slane %v4188, 4
      %v4191 = vshll.u32 %v3831, 16
      %v4193 = vrot.slane %v4191, 5
      %v4194 = vsel %vm296, %v4189, %v4193
      %v4196 = vshrl.u32 %v3832, 16
      %v4198 = vrot.slane %v4196, 4
      %v4199 = vshll.u32 %v3832, 16
      %v4201 = vrot.slane %v4199, 5
      %v4202 = vor.u32 %v4198, %v4201
      %v4203 = vrot.slane %v4202, 4
      %v4205 = vshll.u32 %v3833, 16
      %v4207 = vrot.slane %v4205, 5
      %v4208 = vsel %vm296, %v4203, %v4207
      %v4209 = vshrl.u32 %v3833, 16
      %v4211 = vrot.slane %v4209, 4
      %v4212 = vor.u32 %v4211, %v4207
      %v4213 = vrot.slane %v4212, 4
      %v4215 = vshll.u32 %v3834, 16
      %v4217 = vrot.slane %v4215, 5
      %v4218 = vsel %vm296, %v4213, %v4217
      %s4219 = scalar_lea.vmem %s1, 448
      %v4220 = vld [vmem:[%s4219] sm:$0xf]
      %v4221 = vld [vmem:[%s4219 + $0x4] sm:$0xf]
      %v4222 = vld [vmem:[%s4219 + $0x8] sm:$0xf]
      %v4223 = vld [vmem:[%s4219 + $0xc] sm:$0xf]
      %v4224 = vld [vmem:[%s4219 + $0x10] sm:$0xf]
      %v4225 = vld [vmem:[%s4219 + $0x14] sm:$0xf]
      %v4226 = vld [vmem:[%s4219 + $0x18] sm:$0xf]
      %v4227 = vld [vmem:[%s4219 + $0x1c] sm:$0xf]
      %v4228 = vld [vmem:[%s4219 + $0x20] sm:$0xf]
      %v4229 = vld [vmem:[%s4219 + $0x24] sm:$0xf]
      %v4230 = vld [vmem:[%s4219 + $0x28] sm:$0xf]
      %v4231 = vld [vmem:[%s4219 + $0x2c] sm:$0xf]
      %v4232 = vld [vmem:[%s4219 + $0x30] sm:$0xf]
      %v4233 = vld [vmem:[%s4219 + $0x34] sm:$0xf]
      %v4234 = vld [vmem:[%s4219 + $0x38] sm:$0xf]
      %v4235 = vld [vmem:[%s4219 + $0x3c] sm:$0xf]
      %v4236 = vunpack.c.l.b16 %v3848
      %v4237 = vunpack.c.l.b16 %v3858
      %v4238 = vunpack.c.l.b16 %v3872
      %v4239 = vunpack.c.l.b16 %v3882
      %v4240 = vunpack.c.l.b16 %v3896
      %v4241 = vunpack.c.l.b16 %v3906
      %v4242 = vunpack.c.l.b16 %v3920
      %v4243 = vunpack.c.l.b16 %v3930
      %v4244 = vunpack.c.l.b16 %v3944
      %v4245 = vunpack.c.l.b16 %v3954
      %v4246 = vunpack.c.l.b16 %v3968
      %v4247 = vunpack.c.l.b16 %v3978
      %v4248 = vunpack.c.l.b16 %v3992
      %v4249 = vunpack.c.l.b16 %v4002
      %v4250 = vunpack.c.l.b16 %v4016
      %v4251 = vunpack.c.l.b16 %v4026
      %v4252 = vunpack.c.l.b16 %v4040
      %v4253 = vunpack.c.l.b16 %v4050
      %v4254 = vunpack.c.l.b16 %v4064
      %v4255 = vunpack.c.l.b16 %v4074
      %v4256 = vunpack.c.l.b16 %v4088
      %v4257 = vunpack.c.l.b16 %v4098
      %v4258 = vunpack.c.l.b16 %v4112
      %v4259 = vunpack.c.l.b16 %v4122
      %v4260 = vunpack.c.l.b16 %v4136
      %v4261 = vunpack.c.l.b16 %v4146
      %v4262 = vunpack.c.l.b16 %v4160
      %v4263 = vunpack.c.l.b16 %v4170
      %v4264 = vunpack.c.l.b16 %v4184
      %v4265 = vunpack.c.l.b16 %v4194
      %v4266 = vunpack.c.l.b16 %v4208
      %v4267 = vunpack.c.l.b16 %v4218
      %v4268 = vpack.c.b16 %v4237, %v4236
      %v4269 = vpack.c.b16 %v4239, %v4238
      %v4270 = vpack.c.b16 %v4241, %v4240
      %v4271 = vpack.c.b16 %v4243, %v4242
      %v4272 = vpack.c.b16 %v4245, %v4244
      %v4273 = vpack.c.b16 %v4247, %v4246
      %v4274 = vpack.c.b16 %v4249, %v4248
      %v4275 = vpack.c.b16 %v4251, %v4250
      %v4276 = vpack.c.b16 %v4253, %v4252
      %v4277 = vpack.c.b16 %v4255, %v4254
      %v4278 = vpack.c.b16 %v4257, %v4256
      %v4279 = vpack.c.b16 %v4259, %v4258
      %v4280 = vpack.c.b16 %v4261, %v4260
      %v4281 = vpack.c.b16 %v4263, %v4262
      %v4282 = vpack.c.b16 %v4265, %v4264
      %v4283 = vpack.c.b16 %v4267, %v4266
      %v4316 = vunpack.c.l.b16 %v4220
      %v4317 = vunpack.c.l.b16 %v4221
      %v4318 = vunpack.c.l.b16 %v4222
      %v4319 = vunpack.c.l.b16 %v4223
      %v4320 = vunpack.c.l.b16 %v4224
      %v4321 = vunpack.c.l.b16 %v4225
      %v4322 = vunpack.c.l.b16 %v4226
      %v4323 = vunpack.c.l.b16 %v4227
      %v4324 = vunpack.c.l.b16 %v4228
      %v4325 = vunpack.c.l.b16 %v4229
      %v4326 = vunpack.c.l.b16 %v4230
      %v4327 = vunpack.c.l.b16 %v4231
      %v4328 = vunpack.c.l.b16 %v4232
      %v4329 = vunpack.c.l.b16 %v4233
      %v4330 = vunpack.c.l.b16 %v4234
      %v4331 = vunpack.c.l.b16 %v4235
      %v4332 = vpack.c.b16 %v4317, %v4316
      %v4333 = vpack.c.b16 %v4319, %v4318
      %v4334 = vpack.c.b16 %v4321, %v4320
      %v4335 = vpack.c.b16 %v4323, %v4322
      %v4336 = vpack.c.b16 %v4325, %v4324
      %v4337 = vpack.c.b16 %v4327, %v4326
      %v4338 = vpack.c.b16 %v4329, %v4328
      %v4339 = vpack.c.b16 %v4331, %v4330
      %4348 = vmatprep.subr.bf16.mxu0 0
      %4349 = vmatpush1.bf16.msra.mxu0 %v4332
      %4350 = vmatprep.subr.bf16.mxu0 0
      %4351 = vmatpush1.bf16.msra.mxu0 %v4333
      %4352 = vmatprep.subr.bf16.mxu0 0
      %4353 = vmatpush1.bf16.msra.mxu0 %v4334
      %4354 = vmatprep.subr.bf16.mxu0 0
      %4355 = vmatpush1.bf16.msra.mxu0 %v4335
      %4356 = vmatprep.subr.bf16.mxu0 0
      %4357 = vmatpush1.bf16.msra.mxu0 %v4336
      %4358 = vmatprep.subr.bf16.mxu0 0
      %4359 = vmatpush1.bf16.msra.mxu0 %v4337
      %4360 = vmatprep.subr.bf16.mxu0 0
      %4361 = vmatpush1.bf16.msra.mxu0 %v4338
      %4362 = vmatprep.subr.bf16.mxu0 0
      %4363 = vmatpush1.bf16.msra.mxu0 %v4339
      %4364 = vmatprep.subr.bf16.mxu0 0
      %4365 = vmatpush1.bf16.msra.mxu0 0
      %4366 = vmatprep.subr.bf16.mxu0 0
      %4367 = vmatpush1.bf16.msra.mxu0 0
      %4368 = vmatprep.subr.bf16.mxu0 0
      %4369 = vmatpush1.bf16.msra.mxu0 0
      %4370 = vmatprep.subr.bf16.mxu0 0
      %4371 = vmatpush1.bf16.msra.mxu0 0
      %4372 = vmatprep.subr.bf16.mxu0 0
      %4373 = vmatpush1.bf16.msra.mxu0 0
      %4374 = vmatprep.subr.bf16.mxu0 0
      %4375 = vmatpush1.bf16.msra.mxu0 0
      %4376 = vmatprep.subr.bf16.mxu0 0
      %4377 = vmatpush1.bf16.msra.mxu0 0
      %4378 = vmatprep.subr.bf16.mxu0 0
      %4379 = vmatpush1.bf16.msra.mxu0 0
      %4380 = vmatprep.mubr.bf16.mxu0 0
      %4381 = vmatmul.mubr.bf16.gmra.mrb[0].mxu0 %v4268
      %v4382 = vpop.f32.mrb[0].mxu0
      %v4383 = vadd.f32 0.0, %v4382
      %v4384 = vpop.f32.mrb[0].mxu0
      %v4385 = vpop.f32.mrb[0].mxu0
      %v4386 = vadd.f32 0.0, %v4385
      %v4387 = vpop.f32.mrb[0].mxu0
      %4388 = vmatprep.mubr.bf16.mxu0 0
      %4389 = vmatmul.mubr.bf16.gmra.mrb[0].mxu0 %v4269
      %v4390 = vpop.f32.mrb[0].mxu0
      %v4391 = vadd.f32 0.0, %v4390
      %v4392 = vpop.f32.mrb[0].mxu0
      %v4393 = vpop.f32.mrb[0].mxu0
      %v4394 = vadd.f32 0.0, %v4393
      %v4395 = vpop.f32.mrb[0].mxu0
      %4396 = vmatprep.mubr.bf16.mxu0 0
      %4397 = vmatmul.mubr.bf16.gmra.mrb[0].mxu0 %v4270
      %v4398 = vpop.f32.mrb[0].mxu0
      %v4399 = vadd.f32 0.0, %v4398
      %v4400 = vpop.f32.mrb[0].mxu0
      %v4401 = vpop.f32.mrb[0].mxu0
      %v4402 = vadd.f32 0.0, %v4401
      %v4403 = vpop.f32.mrb[0].mxu0
      %4404 = vmatprep.mubr.bf16.mxu0 0
      %4405 = vmatmul.mubr.bf16.gmra.mrb[0].mxu0 %v4271
      %v4406 = vpop.f32.mrb[0].mxu0
      %v4407 = vadd.f32 0.0, %v4406
      %v4408 = vpop.f32.mrb[0].mxu0
      %v4409 = vpop.f32.mrb[0].mxu0
      %v4410 = vadd.f32 0.0, %v4409
      %v4411 = vpop.f32.mrb[0].mxu0
      %4412 = vmatprep.mubr.bf16.mxu0 0
      %4413 = vmatmul.mubr.bf16.gmra.mrb[0].mxu0 %v4272
      %v4414 = vpop.f32.mrb[0].mxu0
      %v4415 = vadd.f32 0.0, %v4414
      %v4416 = vpop.f32.mrb[0].mxu0
      %v4417 = vpop.f32.mrb[0].mxu0
      %v4418 = vadd.f32 0.0, %v4417
      %v4419 = vpop.f32.mrb[0].mxu0
      %4420 = vmatprep.mubr.bf16.mxu0 0
      %4421 = vmatmul.mubr.bf16.gmra.mrb[0].mxu0 %v4273
      %v4422 = vpop.f32.mrb[0].mxu0
      %v4423 = vadd.f32 0.0, %v4422
      %v4424 = vpop.f32.mrb[0].mxu0
      %v4425 = vpop.f32.mrb[0].mxu0
      %v4426 = vadd.f32 0.0, %v4425
      %v4427 = vpop.f32.mrb[0].mxu0
      %4428 = vmatprep.mubr.bf16.mxu0 0
      %4429 = vmatmul.mubr.bf16.gmra.mrb[0].mxu0 %v4274
      %v4430 = vpop.f32.mrb[0].mxu0
      %v4431 = vadd.f32 0.0, %v4430
      %v4432 = vpop.f32.mrb[0].mxu0
      %v4433 = vpop.f32.mrb[0].mxu0
      %v4434 = vadd.f32 0.0, %v4433
      %v4435 = vpop.f32.mrb[0].mxu0
      %4436 = vmatprep.mubr.bf16.mxu0 0
      %4437 = vmatmul.mubr.bf16.gmra.mrb[0].mxu0 %v4275
      %v4438 = vpop.f32.mrb[0].mxu0
      %v4439 = vadd.f32 0.0, %v4438
      %v4440 = vpop.f32.mrb[0].mxu0
      %v4441 = vpop.f32.mrb[0].mxu0
      %v4442 = vadd.f32 0.0, %v4441
      %v4443 = vpop.f32.mrb[0].mxu0
      %4444 = vmatprep.mubr.bf16.mxu0 0
      %4445 = vmatmul.mubr.bf16.gmra.mrb[0].mxu0 %v4276
      %v4446 = vpop.f32.mrb[0].mxu0
      %v4447 = vadd.f32 0.0, %v4446
      %v4448 = vpop.f32.mrb[0].mxu0
      %v4449 = vpop.f32.mrb[0].mxu0
      %v4450 = vadd.f32 0.0, %v4449
      %v4451 = vpop.f32.mrb[0].mxu0
      %4452 = vmatprep.mubr.bf16.mxu0 0
      %4453 = vmatmul.mubr.bf16.gmra.mrb[0].mxu0 %v4277
      %v4454 = vpop.f32.mrb[0].mxu0
      %v4455 = vadd.f32 0.0, %v4454
      %v4456 = vpop.f32.mrb[0].mxu0
      %v4457 = vpop.f32.mrb[0].mxu0
      %v4458 = vadd.f32 0.0, %v4457
      %v4459 = vpop.f32.mrb[0].mxu0
      %4460 = vmatprep.mubr.bf16.mxu0 0
      %4461 = vmatmul.mubr.bf16.gmra.mrb[0].mxu0 %v4278
      %v4462 = vpop.f32.mrb[0].mxu0
      %v4463 = vadd.f32 0.0, %v4462
      %v4464 = vpop.f32.mrb[0].mxu0
      %v4465 = vpop.f32.mrb[0].mxu0
      %v4466 = vadd.f32 0.0, %v4465
      %v4467 = vpop.f32.mrb[0].mxu0
      %4468 = vmatprep.mubr.bf16.mxu0 0
      %4469 = vmatmul.mubr.bf16.gmra.mrb[0].mxu0 %v4279
      %v4470 = vpop.f32.mrb[0].mxu0
      %v4471 = vadd.f32 0.0, %v4470
      %v4472 = vpop.f32.mrb[0].mxu0
      %v4473 = vpop.f32.mrb[0].mxu0
      %v4474 = vadd.f32 0.0, %v4473
      %v4475 = vpop.f32.mrb[0].mxu0
      %4476 = vmatprep.mubr.bf16.mxu0 0
      %4477 = vmatmul.mubr.bf16.gmra.mrb[0].mxu0 %v4280
      %v4478 = vpop.f32.mrb[0].mxu0
      %v4479 = vadd.f32 0.0, %v4478
      %v4480 = vpop.f32.mrb[0].mxu0
      %v4481 = vpop.f32.mrb[0].mxu0
      %v4482 = vadd.f32 0.0, %v4481
      %v4483 = vpop.f32.mrb[0].mxu0
      %4484 = vmatprep.mubr.bf16.mxu0 0
      %4485 = vmatmul.mubr.bf16.gmra.mrb[0].mxu0 %v4281
      %v4486 = vpop.f32.mrb[0].mxu0
      %v4487 = vadd.f32 0.0, %v4486
      %v4488 = vpop.f32.mrb[0].mxu0
      %v4489 = vpop.f32.mrb[0].mxu0
      %v4490 = vadd.f32 0.0, %v4489
      %v4491 = vpop.f32.mrb[0].mxu0
      %4492 = vmatprep.mubr.bf16.mxu0 0
      %4493 = vmatmul.mubr.bf16.gmra.mrb[0].mxu0 %v4282
      %v4494 = vpop.f32.mrb[0].mxu0
      %v4495 = vadd.f32 0.0, %v4494
      %v4496 = vpop.f32.mrb[0].mxu0
      %v4497 = vpop.f32.mrb[0].mxu0
      %v4498 = vadd.f32 0.0, %v4497
      %v4499 = vpop.f32.mrb[0].mxu0
      %4500 = vmatprep.mubr.bf16.mxu0 0
      %4501 = vmatmul.mubr.bf16.gmra.mrb[0].mxu0 %v4283
      %v4502 = vpop.f32.mrb[0].mxu0
      %v4503 = vadd.f32 0.0, %v4502
      %v4504 = vpop.f32.mrb[0].mxu0
      %v4505 = vpop.f32.mrb[0].mxu0
      %v4506 = vadd.f32 0.0, %v4505
      %v4507 = vpop.f32.mrb[0].mxu0
      %4508 = vdwg.mxu0
      %v4509 = vadd.f32 %v3755, %v4383
      %v4510 = vadd.f32 %v3756, %v4386
      %v4511 = vadd.f32 %v3757, %v4391
      %v4512 = vadd.f32 %v3758, %v4394
      %v4513 = vadd.f32 %v3759, %v4399
      %v4514 = vadd.f32 %v3760, %v4402
      %v4515 = vadd.f32 %v3761, %v4407
      %v4516 = vadd.f32 %v3762, %v4410
      %v4517 = vadd.f32 %v3763, %v4415
      %v4518 = vadd.f32 %v3764, %v4418
      %v4519 = vadd.f32 %v3765, %v4423
      %v4520 = vadd.f32 %v3766, %v4426
      %v4521 = vadd.f32 %v3767, %v4431
      %v4522 = vadd.f32 %v3768, %v4434
      %v4523 = vadd.f32 %v3769, %v4439
      %v4524 = vadd.f32 %v3770, %v4442
      %v4525 = vadd.f32 %v3771, %v4447
      %v4526 = vadd.f32 %v3772, %v4450
      %v4527 = vadd.f32 %v3773, %v4455
      %v4528 = vadd.f32 %v3774, %v4458
      %v4529 = vadd.f32 %v3775, %v4463
      %v4530 = vadd.f32 %v3776, %v4466
      %v4531 = vadd.f32 %v3777, %v4471
      %v4532 = vadd.f32 %v3778, %v4474
      %v4533 = vadd.f32 %v3779, %v4479
      %v4534 = vadd.f32 %v3780, %v4482
      %v4535 = vadd.f32 %v3781, %v4487
      %v4536 = vadd.f32 %v3782, %v4490
      %v4537 = vadd.f32 %v3783, %v4495
      %v4538 = vadd.f32 %v3784, %v4498
      %v4539 = vadd.f32 %v3785, %v4503
      %v4540 = vadd.f32 %v3786, %v4506
      %v4541 = vld [vmem:[%s3400] sm:$0xe]
      %v4542 = vld [vmem:[%s3400 + $0xc] sm:$0xe]
      %v4543 = vld [vmem:[%s3400 + $0x18] sm:$0xe]
      %v4544 = vld [vmem:[%s3400 + $0x24] sm:$0xe]
      %v4545 = vld [vmem:[%s3400 + $0x30] sm:$0xe]
      %v4546 = vld [vmem:[%s3400 + $0x3c] sm:$0xe]
      %v4547 = vld [vmem:[%s3400 + $0x48] sm:$0xe]
      %v4548 = vld [vmem:[%s3400 + $0x54] sm:$0xe]
      %v4549 = vld [vmem:[%s3400 + $0x60] sm:$0xe]
      %v4550 = vld [vmem:[%s3400 + $0x6c] sm:$0xe]
      %v4551 = vld [vmem:[%s3400 + $0x78] sm:$0xe]
      %v4552 = vld [vmem:[%s3400 + $0x84] sm:$0xe]
      %v4553 = vld [vmem:[%s3400 + $0x90] sm:$0xe]
      %v4554 = vld [vmem:[%s3400 + $0x9c] sm:$0xe]
      %v4555 = vld [vmem:[%s3400 + $0xa8] sm:$0xe]
      %v4556 = vld [vmem:[%s3400 + $0xb4] sm:$0xe]
      %v4605 = vrot.slane %v4541, 5
      %v4606 = vrot.slane %v4605, 4
      %v4607 = vrot.slane %v3788, 5
      %v4608 = vsel %vm1326, %v4606, %v4607
      %v4609 = vrot.slane %v4607, 4
      %v4610 = vrot.slane %v3789, 5
      %v4611 = vsel %vm1326, %v4609, %v4610
      %v4612 = vrot.slane %v4542, 5
      %v4613 = vrot.slane %v4612, 4
      %v4614 = vrot.slane %v3791, 5
      %v4615 = vsel %vm1326, %v4613, %v4614
      %v4616 = vrot.slane %v4614, 4
      %v4617 = vrot.slane %v3792, 5
      %v4618 = vsel %vm1326, %v4616, %v4617
      %v4619 = vrot.slane %v4543, 5
      %v4620 = vrot.slane %v4619, 4
      %v4621 = vrot.slane %v3794, 5
      %v4622 = vsel %vm1326, %v4620, %v4621
      %v4623 = vrot.slane %v4621, 4
      %v4624 = vrot.slane %v3795, 5
      %v4625 = vsel %vm1326, %v4623, %v4624
      %v4626 = vrot.slane %v4544, 5
      %v4627 = vrot.slane %v4626, 4
      %v4628 = vrot.slane %v3797, 5
      %v4629 = vsel %vm1326, %v4627, %v4628
      %v4630 = vrot.slane %v4628, 4
      %v4631 = vrot.slane %v3798, 5
      %v4632 = vsel %vm1326, %v4630, %v4631
      %v4633 = vrot.slane %v4545, 5
      %v4634 = vrot.slane %v4633, 4
      %v4635 = vrot.slane %v3800, 5
      %v4636 = vsel %vm1326, %v4634, %v4635
      %v4637 = vrot.slane %v4635, 4
      %v4638 = vrot.slane %v3801, 5
      %v4639 = vsel %vm1326, %v4637, %v4638
      %v4640 = vrot.slane %v4546, 5
      %v4641 = vrot.slane %v4640, 4
      %v4642 = vrot.slane %v3803, 5
      %v4643 = vsel %vm1326, %v4641, %v4642
      %v4644 = vrot.slane %v4642, 4
      %v4645 = vrot.slane %v3804, 5
      %v4646 = vsel %vm1326, %v4644, %v4645
      %v4647 = vrot.slane %v4547, 5
      %v4648 = vrot.slane %v4647, 4
      %v4649 = vrot.slane %v3806, 5
      %v4650 = vsel %vm1326, %v4648, %v4649
      %v4651 = vrot.slane %v4649, 4
      %v4652 = vrot.slane %v3807, 5
      %v4653 = vsel %vm1326, %v4651, %v4652
      %v4654 = vrot.slane %v4548, 5
      %v4655 = vrot.slane %v4654, 4
      %v4656 = vrot.slane %v3809, 5
      %v4657 = vsel %vm1326, %v4655, %v4656
      %v4658 = vrot.slane %v4656, 4
      %v4659 = vrot.slane %v3810, 5
      %v4660 = vsel %vm1326, %v4658, %v4659
      %v4661 = vrot.slane %v4549, 5
      %v4662 = vrot.slane %v4661, 4
      %v4663 = vrot.slane %v3812, 5
      %v4664 = vsel %vm1326, %v4662, %v4663
      %v4665 = vrot.slane %v4663, 4
      %v4666 = vrot.slane %v3813, 5
      %v4667 = vsel %vm1326, %v4665, %v4666
      %v4668 = vrot.slane %v4550, 5
      %v4669 = vrot.slane %v4668, 4
      %v4670 = vrot.slane %v3815, 5
      %v4671 = vsel %vm1326, %v4669, %v4670
      %v4672 = vrot.slane %v4670, 4
      %v4673 = vrot.slane %v3816, 5
      %v4674 = vsel %vm1326, %v4672, %v4673
      %v4675 = vrot.slane %v4551, 5
      %v4676 = vrot.slane %v4675, 4
      %v4677 = vrot.slane %v3818, 5
      %v4678 = vsel %vm1326, %v4676, %v4677
      %v4679 = vrot.slane %v4677, 4
      %v4680 = vrot.slane %v3819, 5
      %v4681 = vsel %vm1326, %v4679, %v4680
      %v4682 = vrot.slane %v4552, 5
      %v4683 = vrot.slane %v4682, 4
      %v4684 = vrot.slane %v3821, 5
      %v4685 = vsel %vm1326, %v4683, %v4684
      %v4686 = vrot.slane %v4684, 4
      %v4687 = vrot.slane %v3822, 5
      %v4688 = vsel %vm1326, %v4686, %v4687
      %v4689 = vrot.slane %v4553, 5
      %v4690 = vrot.slane %v4689, 4
      %v4691 = vrot.slane %v3824, 5
      %v4692 = vsel %vm1326, %v4690, %v4691
      %v4693 = vrot.slane %v4691, 4
      %v4694 = vrot.slane %v3825, 5
      %v4695 = vsel %vm1326, %v4693, %v4694
      %v4696 = vrot.slane %v4554, 5
      %v4697 = vrot.slane %v4696, 4
      %v4698 = vrot.slane %v3827, 5
      %v4699 = vsel %vm1326, %v4697, %v4698
      %v4700 = vrot.slane %v4698, 4
      %v4701 = vrot.slane %v3828, 5
      %v4702 = vsel %vm1326, %v4700, %v4701
      %v4703 = vrot.slane %v4555, 5
      %v4704 = vrot.slane %v4703, 4
      %v4705 = vrot.slane %v3830, 5
      %v4706 = vsel %vm1326, %v4704, %v4705
      %v4707 = vrot.slane %v4705, 4
      %v4708 = vrot.slane %v3831, 5
      %v4709 = vsel %vm1326, %v4707, %v4708
      %v4710 = vrot.slane %v4556, 5
      %v4711 = vrot.slane %v4710, 4
      %v4712 = vrot.slane %v3833, 5
      %v4713 = vsel %vm1326, %v4711, %v4712
      %v4714 = vrot.slane %v4712, 4
      %v4715 = vrot.slane %v3834, 5
      %v4716 = vsel %vm1326, %v4714, %v4715
      %s4717 = scalar_lea.vmem %s1, 512
      %v4718 = vld [vmem:[%s4717] sm:$0xf]
      %v4719 = vld [vmem:[%s4717 + $0x4] sm:$0xf]
      %v4720 = vld [vmem:[%s4717 + $0x8] sm:$0xf]
      %v4721 = vld [vmem:[%s4717 + $0xc] sm:$0xf]
      %v4722 = vld [vmem:[%s4717 + $0x10] sm:$0xf]
      %v4723 = vld [vmem:[%s4717 + $0x14] sm:$0xf]
      %v4724 = vld [vmem:[%s4717 + $0x18] sm:$0xf]
      %v4725 = vld [vmem:[%s4717 + $0x1c] sm:$0xf]
      %v4726 = vld [vmem:[%s4717 + $0x20] sm:$0xf]
      %v4727 = vld [vmem:[%s4717 + $0x24] sm:$0xf]
      %v4728 = vld [vmem:[%s4717 + $0x28] sm:$0xf]
      %v4729 = vld [vmem:[%s4717 + $0x2c] sm:$0xf]
      %v4730 = vld [vmem:[%s4717 + $0x30] sm:$0xf]
      %v4731 = vld [vmem:[%s4717 + $0x34] sm:$0xf]
      %v4732 = vld [vmem:[%s4717 + $0x38] sm:$0xf]
      %v4733 = vld [vmem:[%s4717 + $0x3c] sm:$0xf]
      %v4734 = vunpack.c.l.b16 %v4608
      %v4735 = vunpack.c.l.b16 %v4611
      %v4736 = vunpack.c.l.b16 %v4615
      %v4737 = vunpack.c.l.b16 %v4618
      %v4738 = vunpack.c.l.b16 %v4622
      %v4739 = vunpack.c.l.b16 %v4625
      %v4740 = vunpack.c.l.b16 %v4629
      %v4741 = vunpack.c.l.b16 %v4632
      %v4742 = vunpack.c.l.b16 %v4636
      %v4743 = vunpack.c.l.b16 %v4639
      %v4744 = vunpack.c.l.b16 %v4643
      %v4745 = vunpack.c.l.b16 %v4646
      %v4746 = vunpack.c.l.b16 %v4650
      %v4747 = vunpack.c.l.b16 %v4653
      %v4748 = vunpack.c.l.b16 %v4657
      %v4749 = vunpack.c.l.b16 %v4660
      %v4750 = vunpack.c.l.b16 %v4664
      %v4751 = vunpack.c.l.b16 %v4667
      %v4752 = vunpack.c.l.b16 %v4671
      %v4753 = vunpack.c.l.b16 %v4674
      %v4754 = vunpack.c.l.b16 %v4678
      %v4755 = vunpack.c.l.b16 %v4681
      %v4756 = vunpack.c.l.b16 %v4685
      %v4757 = vunpack.c.l.b16 %v4688
      %v4758 = vunpack.c.l.b16 %v4692
      %v4759 = vunpack.c.l.b16 %v4695
      %v4760 = vunpack.c.l.b16 %v4699
      %v4761 = vunpack.c.l.b16 %v4702
      %v4762 = vunpack.c.l.b16 %v4706
      %v4763 = vunpack.c.l.b16 %v4709
      %v4764 = vunpack.c.l.b16 %v4713
      %v4765 = vunpack.c.l.b16 %v4716
      %v4766 = vpack.c.b16 %v4735, %v4734
      %v4767 = vpack.c.b16 %v4737, %v4736
      %v4768 = vpack.c.b16 %v4739, %v4738
      %v4769 = vpack.c.b16 %v4741, %v4740
      %v4770 = vpack.c.b16 %v4743, %v4742
      %v4771 = vpack.c.b16 %v4745, %v4744
      %v4772 = vpack.c.b16 %v4747, %v4746
      %v4773 = vpack.c.b16 %v4749, %v4748
      %v4774 = vpack.c.b16 %v4751, %v4750
      %v4775 = vpack.c.b16 %v4753, %v4752
      %v4776 = vpack.c.b16 %v4755, %v4754
      %v4777 = vpack.c.b16 %v4757, %v4756
      %v4778 = vpack.c.b16 %v4759, %v4758
      %v4779 = vpack.c.b16 %v4761, %v4760
      %v4780 = vpack.c.b16 %v4763, %v4762
      %v4781 = vpack.c.b16 %v4765, %v4764
      %v4814 = vunpack.c.l.b16 %v4718
      %v4815 = vunpack.c.l.b16 %v4719
      %v4816 = vunpack.c.l.b16 %v4720
      %v4817 = vunpack.c.l.b16 %v4721
      %v4818 = vunpack.c.l.b16 %v4722
      %v4819 = vunpack.c.l.b16 %v4723
      %v4820 = vunpack.c.l.b16 %v4724
      %v4821 = vunpack.c.l.b16 %v4725
      %v4822 = vunpack.c.l.b16 %v4726
      %v4823 = vunpack.c.l.b16 %v4727
      %v4824 = vunpack.c.l.b16 %v4728
      %v4825 = vunpack.c.l.b16 %v4729
      %v4826 = vunpack.c.l.b16 %v4730
      %v4827 = vunpack.c.l.b16 %v4731
      %v4828 = vunpack.c.l.b16 %v4732
      %v4829 = vunpack.c.l.b16 %v4733
      %v4830 = vpack.c.b16 %v4815, %v4814
      %v4831 = vpack.c.b16 %v4817, %v4816
      %v4832 = vpack.c.b16 %v4819, %v4818
      %v4833 = vpack.c.b16 %v4821, %v4820
      %v4834 = vpack.c.b16 %v4823, %v4822
      %v4835 = vpack.c.b16 %v4825, %v4824
      %v4836 = vpack.c.b16 %v4827, %v4826
      %v4837 = vpack.c.b16 %v4829, %v4828
      %4846 = vmatprep.subr.bf16.mxu0 0
      %4847 = vmatpush1.bf16.msra.mxu0 %v4830
      %4848 = vmatprep.subr.bf16.mxu0 0
      %4849 = vmatpush1.bf16.msra.mxu0 %v4831
      %4850 = vmatprep.subr.bf16.mxu0 0
      %4851 = vmatpush1.bf16.msra.mxu0 %v4832
      %4852 = vmatprep.subr.bf16.mxu0 0
      %4853 = vmatpush1.bf16.msra.mxu0 %v4833
      %4854 = vmatprep.subr.bf16.mxu0 0
      %4855 = vmatpush1.bf16.msra.mxu0 %v4834
      %4856 = vmatprep.subr.bf16.mxu0 0
      %4857 = vmatpush1.bf16.msra.mxu0 %v4835
      %4858 = vmatprep.subr.bf16.mxu0 0
      %4859 = vmatpush1.bf16.msra.mxu0 %v4836
      %4860 = vmatprep.subr.bf16.mxu0 0
      %4861 = vmatpush1.bf16.msra.mxu0 %v4837
      %4862 = vmatprep.subr.bf16.mxu0 0
      %4863 = vmatpush1.bf16.msra.mxu0 0
      %4864 = vmatprep.subr.bf16.mxu0 0
      %4865 = vmatpush1.bf16.msra.mxu0 0
      %4866 = vmatprep.subr.bf16.mxu0 0
      %4867 = vmatpush1.bf16.msra.mxu0 0
      %4868 = vmatprep.subr.bf16.mxu0 0
      %4869 = vmatpush1.bf16.msra.mxu0 0
      %4870 = vmatprep.subr.bf16.mxu0 0
      %4871 = vmatpush1.bf16.msra.mxu0 0
      %4872 = vmatprep.subr.bf16.mxu0 0
      %4873 = vmatpush1.bf16.msra.mxu0 0
      %4874 = vmatprep.subr.bf16.mxu0 0
      %4875 = vmatpush1.bf16.msra.mxu0 0
      %4876 = vmatprep.subr.bf16.mxu0 0
      %4877 = vmatpush1.bf16.msra.mxu0 0
      %4878 = vmatprep.mubr.bf16.mxu0 0
      %4879 = vmatmul.mubr.bf16.gmra.mrb[0].mxu0 %v4766
      %v4880 = vpop.f32.mrb[0].mxu0
      %v4881 = vadd.f32 0.0, %v4880
      %v4882 = vpop.f32.mrb[0].mxu0
      %v4883 = vpop.f32.mrb[0].mxu0
      %v4884 = vadd.f32 0.0, %v4883
      %v4885 = vpop.f32.mrb[0].mxu0
      %4886 = vmatprep.mubr.bf16.mxu0 0
      %4887 = vmatmul.mubr.bf16.gmra.mrb[0].mxu0 %v4767
      %v4888 = vpop.f32.mrb[0].mxu0
      %v4889 = vadd.f32 0.0, %v4888
      %v4890 = vpop.f32.mrb[0].mxu0
      %v4891 = vpop.f32.mrb[0].mxu0
      %v4892 = vadd.f32 0.0, %v4891
      %v4893 = vpop.f32.mrb[0].mxu0
      %4894 = vmatprep.mubr.bf16.mxu0 0
      %4895 = vmatmul.mubr.bf16.gmra.mrb[0].mxu0 %v4768
      %v4896 = vpop.f32.mrb[0].mxu0
      %v4897 = vadd.f32 0.0, %v4896
      %v4898 = vpop.f32.mrb[0].mxu0
      %v4899 = vpop.f32.mrb[0].mxu0
      %v4900 = vadd.f32 0.0, %v4899
      %v4901 = vpop.f32.mrb[0].mxu0
      %4902 = vmatprep.mubr.bf16.mxu0 0
      %4903 = vmatmul.mubr.bf16.gmra.mrb[0].mxu0 %v4769
      %v4904 = vpop.f32.mrb[0].mxu0
      %v4905 = vadd.f32 0.0, %v4904
      %v4906 = vpop.f32.mrb[0].mxu0
      %v4907 = vpop.f32.mrb[0].mxu0
      %v4908 = vadd.f32 0.0, %v4907
      %v4909 = vpop.f32.mrb[0].mxu0
      %4910 = vmatprep.mubr.bf16.mxu0 0
      %4911 = vmatmul.mubr.bf16.gmra.mrb[0].mxu0 %v4770
      %v4912 = vpop.f32.mrb[0].mxu0
      %v4913 = vadd.f32 0.0, %v4912
      %v4914 = vpop.f32.mrb[0].mxu0
      %v4915 = vpop.f32.mrb[0].mxu0
      %v4916 = vadd.f32 0.0, %v4915
      %v4917 = vpop.f32.mrb[0].mxu0
      %4918 = vmatprep.mubr.bf16.mxu0 0
      %4919 = vmatmul.mubr.bf16.gmra.mrb[0].mxu0 %v4771
      %v4920 = vpop.f32.mrb[0].mxu0
      %v4921 = vadd.f32 0.0, %v4920
      %v4922 = vpop.f32.mrb[0].mxu0
      %v4923 = vpop.f32.mrb[0].mxu0
      %v4924 = vadd.f32 0.0, %v4923
      %v4925 = vpop.f32.mrb[0].mxu0
      %4926 = vmatprep.mubr.bf16.mxu0 0
      %4927 = vmatmul.mubr.bf16.gmra.mrb[0].mxu0 %v4772
      %v4928 = vpop.f32.mrb[0].mxu0
      %v4929 = vadd.f32 0.0, %v4928
      %v4930 = vpop.f32.mrb[0].mxu0
      %v4931 = vpop.f32.mrb[0].mxu0
      %v4932 = vadd.f32 0.0, %v4931
      %v4933 = vpop.f32.mrb[0].mxu0
      %4934 = vmatprep.mubr.bf16.mxu0 0
      %4935 = vmatmul.mubr.bf16.gmra.mrb[0].mxu0 %v4773
      %v4936 = vpop.f32.mrb[0].mxu0
      %v4937 = vadd.f32 0.0, %v4936
      %v4938 = vpop.f32.mrb[0].mxu0
      %v4939 = vpop.f32.mrb[0].mxu0
      %v4940 = vadd.f32 0.0, %v4939
      %v4941 = vpop.f32.mrb[0].mxu0
      %4942 = vmatprep.mubr.bf16.mxu0 0
      %4943 = vmatmul.mubr.bf16.gmra.mrb[0].mxu0 %v4774
      %v4944 = vpop.f32.mrb[0].mxu0
      %v4945 = vadd.f32 0.0, %v4944
      %v4946 = vpop.f32.mrb[0].mxu0
      %v4947 = vpop.f32.mrb[0].mxu0
      %v4948 = vadd.f32 0.0, %v4947
      %v4949 = vpop.f32.mrb[0].mxu0
      %4950 = vmatprep.mubr.bf16.mxu0 0
      %4951 = vmatmul.mubr.bf16.gmra.mrb[0].mxu0 %v4775
      %v4952 = vpop.f32.mrb[0].mxu0
      %v4953 = vadd.f32 0.0, %v4952
      %v4954 = vpop.f32.mrb[0].mxu0
      %v4955 = vpop.f32.mrb[0].mxu0
      %v4956 = vadd.f32 0.0, %v4955
      %v4957 = vpop.f32.mrb[0].mxu0
      %4958 = vmatprep.mubr.bf16.mxu0 0
      %4959 = vmatmul.mubr.bf16.gmra.mrb[0].mxu0 %v4776
      %v4960 = vpop.f32.mrb[0].mxu0
      %v4961 = vadd.f32 0.0, %v4960
      %v4962 = vpop.f32.mrb[0].mxu0
      %v4963 = vpop.f32.mrb[0].mxu0
      %v4964 = vadd.f32 0.0, %v4963
      %v4965 = vpop.f32.mrb[0].mxu0
      %4966 = vmatprep.mubr.bf16.mxu0 0
      %4967 = vmatmul.mubr.bf16.gmra.mrb[0].mxu0 %v4777
      %v4968 = vpop.f32.mrb[0].mxu0
      %v4969 = vadd.f32 0.0, %v4968
      %v4970 = vpop.f32.mrb[0].mxu0
      %v4971 = vpop.f32.mrb[0].mxu0
      %v4972 = vadd.f32 0.0, %v4971
      %v4973 = vpop.f32.mrb[0].mxu0
      %4974 = vmatprep.mubr.bf16.mxu0 0
      %4975 = vmatmul.mubr.bf16.gmra.mrb[0].mxu0 %v4778
      %v4976 = vpop.f32.mrb[0].mxu0
      %v4977 = vadd.f32 0.0, %v4976
      %v4978 = vpop.f32.mrb[0].mxu0
      %v4979 = vpop.f32.mrb[0].mxu0
      %v4980 = vadd.f32 0.0, %v4979
      %v4981 = vpop.f32.mrb[0].mxu0
      %4982 = vmatprep.mubr.bf16.mxu0 0
      %4983 = vmatmul.mubr.bf16.gmra.mrb[0].mxu0 %v4779
      %v4984 = vpop.f32.mrb[0].mxu0
      %v4985 = vadd.f32 0.0, %v4984
      %v4986 = vpop.f32.mrb[0].mxu0
      %v4987 = vpop.f32.mrb[0].mxu0
      %v4988 = vadd.f32 0.0, %v4987
      %v4989 = vpop.f32.mrb[0].mxu0
      %4990 = vmatprep.mubr.bf16.mxu0 0
      %4991 = vmatmul.mubr.bf16.gmra.mrb[0].mxu0 %v4780
      %v4992 = vpop.f32.mrb[0].mxu0
      %v4993 = vadd.f32 0.0, %v4992
      %v4994 = vpop.f32.mrb[0].mxu0
      %v4995 = vpop.f32.mrb[0].mxu0
      %v4996 = vadd.f32 0.0, %v4995
      %v4997 = vpop.f32.mrb[0].mxu0
      %4998 = vmatprep.mubr.bf16.mxu0 0
      %4999 = vmatmul.mubr.bf16.gmra.mrb[0].mxu0 %v4781
      %v5000 = vpop.f32.mrb[0].mxu0
      %v5001 = vadd.f32 0.0, %v5000
      %v5002 = vpop.f32.mrb[0].mxu0
      %v5003 = vpop.f32.mrb[0].mxu0
      %v5004 = vadd.f32 0.0, %v5003
      %v5005 = vpop.f32.mrb[0].mxu0
      %5006 = vdwg.mxu0
      %v5007 = vadd.f32 %v4509, %v4881
      %v5008 = vadd.f32 %v4510, %v4884
      %v5009 = vadd.f32 %v4511, %v4889
      %v5010 = vadd.f32 %v4512, %v4892
      %v5011 = vadd.f32 %v4513, %v4897
      %v5012 = vadd.f32 %v4514, %v4900
      %v5013 = vadd.f32 %v4515, %v4905
      %v5014 = vadd.f32 %v4516, %v4908
      %v5015 = vadd.f32 %v4517, %v4913
      %v5016 = vadd.f32 %v4518, %v4916
      %v5017 = vadd.f32 %v4519, %v4921
      %v5018 = vadd.f32 %v4520, %v4924
      %v5019 = vadd.f32 %v4521, %v4929
      %v5020 = vadd.f32 %v4522, %v4932
      %v5021 = vadd.f32 %v4523, %v4937
      %v5022 = vadd.f32 %v4524, %v4940
      %v5023 = vadd.f32 %v4525, %v4945
      %v5024 = vadd.f32 %v4526, %v4948
      %v5025 = vadd.f32 %v4527, %v4953
      %v5026 = vadd.f32 %v4528, %v4956
      %v5027 = vadd.f32 %v4529, %v4961
      %v5028 = vadd.f32 %v4530, %v4964
      %v5029 = vadd.f32 %v4531, %v4969
      %v5030 = vadd.f32 %v4532, %v4972
      %v5031 = vadd.f32 %v4533, %v4977
      %v5032 = vadd.f32 %v4534, %v4980
      %v5033 = vadd.f32 %v4535, %v4985
      %v5034 = vadd.f32 %v4536, %v4988
      %v5035 = vadd.f32 %v4537, %v4993
      %v5036 = vadd.f32 %v4538, %v4996
      %v5037 = vadd.f32 %v4539, %v5001
      %v5038 = vadd.f32 %v4540, %v5004
      %5039 = vst [vmem:[%s220] sm:$0xff] %v5007
      %5040 = vst [vmem:[%s220 + $0x8] sm:$0xff] %v5008
      %5041 = vst [vmem:[%s220 + $0x10] sm:$0xff] %v5009
      %5042 = vst [vmem:[%s220 + $0x18] sm:$0xff] %v5010
      %5043 = vst [vmem:[%s220 + $0x20] sm:$0xff] %v5011
      %5044 = vst [vmem:[%s220 + $0x28] sm:$0xff] %v5012
      %5045 = vst [vmem:[%s220 + $0x30] sm:$0xff] %v5013
      %5046 = vst [vmem:[%s220 + $0x38] sm:$0xff] %v5014
      %5047 = vst [vmem:[%s220 + $0x40] sm:$0xff] %v5015
      %5048 = vst [vmem:[%s220 + $0x48] sm:$0xff] %v5016
      %5049 = vst [vmem:[%s220 + $0x50] sm:$0xff] %v5017
      %5050 = vst [vmem:[%s220 + $0x58] sm:$0xff] %v5018
      %5051 = vst [vmem:[%s220 + $0x60] sm:$0xff] %v5019
      %5052 = vst [vmem:[%s220 + $0x68] sm:$0xff] %v5020
      %5053 = vst [vmem:[%s220 + $0x70] sm:$0xff] %v5021
      %5054 = vst [vmem:[%s220 + $0x78] sm:$0xff] %v5022
      %5055 = vst [vmem:[%s220 + $0x80] sm:$0xff] %v5023
      %5056 = vst [vmem:[%s220 + $0x88] sm:$0xff] %v5024
      %5057 = vst [vmem:[%s220 + $0x90] sm:$0xff] %v5025
      %5058 = vst [vmem:[%s220 + $0x98] sm:$0xff] %v5026
      %5059 = vst [vmem:[%s220 + $0xa0] sm:$0xff] %v5027
      %5060 = vst [vmem:[%s220 + $0xa8] sm:$0xff] %v5028
      %5061 = vst [vmem:[%s220 + $0xb0] sm:$0xff] %v5029
      %5062 = vst [vmem:[%s220 + $0xb8] sm:$0xff] %v5030
      %5063 = vst [vmem:[%s220 + $0xc0] sm:$0xff] %v5031
      %5064 = vst [vmem:[%s220 + $0xc8] sm:$0xff] %v5032
      %5065 = vst [vmem:[%s220 + $0xd0] sm:$0xff] %v5033
      %5066 = vst [vmem:[%s220 + $0xd8] sm:$0xff] %v5034
      %5067 = vst [vmem:[%s220 + $0xe0] sm:$0xff] %v5035
      %5068 = vst [vmem:[%s220 + $0xe8] sm:$0xff] %v5036
      %5069 = vst [vmem:[%s220 + $0xf0] sm:$0xff] %v5037
      %5070 = vst [vmem:[%s220 + $0xf8] sm:$0xff] %v5038
      %v5071 = vadd.f32 %v5007, %v5008
      %v5072 = vadd.f32 %v5071, %v5009
      %v5073 = vadd.f32 %v5072, %v5010
      %v5074 = vadd.f32 %v5073, %v5011
      %v5075 = vadd.f32 %v5074, %v5012
      %v5076 = vadd.f32 %v5075, %v5013
      %v5077 = vadd.f32 %v5076, %v5014
      %v5078 = vadd.f32 %v5077, %v5015
      %v5079 = vadd.f32 %v5078, %v5016
      %v5080 = vadd.f32 %v5079, %v5017
      %v5081 = vadd.f32 %v5080, %v5018
      %v5082 = vadd.f32 %v5081, %v5019
      %v5083 = vadd.f32 %v5082, %v5020
      %v5084 = vadd.f32 %v5083, %v5021
      %v5085 = vadd.f32 %v5084, %v5022
      %v5086 = vadd.f32 %v5085, %v5023
      %v5087 = vadd.f32 %v5086, %v5024
      %v5088 = vadd.f32 %v5087, %v5025
      %v5089 = vadd.f32 %v5088, %v5026
      %v5090 = vadd.f32 %v5089, %v5027
      %v5091 = vadd.f32 %v5090, %v5028
      %v5092 = vadd.f32 %v5091, %v5029
      %v5093 = vadd.f32 %v5092, %v5030
      %v5094 = vadd.f32 %v5093, %v5031
      %v5095 = vadd.f32 %v5094, %v5032
      %v5096 = vadd.f32 %v5095, %v5033
      %v5097 = vadd.f32 %v5096, %v5034
      %v5098 = vadd.f32 %v5097, %v5035
      %v5099 = vadd.f32 %v5098, %v5036
      %v5100 = vadd.f32 %v5099, %v5037
      %v5101 = vadd.f32 %v5100, %v5038
      %v5102 = vrot.slane %v5101, 4
      %v5103 = vadd.f32 %v5101, %v5102
      %v5104 = vrot.slane %v5103, 2
      %v5105 = vadd.f32 %v5103, %v5104
      %v5106 = vrot.slane %v5105, 1
      %v5107 = vadd.f32 %v5105, %v5106
      %v5108 = vmul.f32 %v5007, %v5007
      %v5109 = vmul.f32 %v5008, %v5008
      %v5110 = vmul.f32 %v5009, %v5009
      %v5111 = vmul.f32 %v5010, %v5010
      %v5112 = vmul.f32 %v5011, %v5011
      %v5113 = vmul.f32 %v5012, %v5012
      %v5114 = vmul.f32 %v5013, %v5013
      %v5115 = vmul.f32 %v5014, %v5014
      %v5116 = vmul.f32 %v5015, %v5015
      %v5117 = vmul.f32 %v5016, %v5016
      %v5118 = vmul.f32 %v5017, %v5017
      %v5119 = vmul.f32 %v5018, %v5018
      %v5120 = vmul.f32 %v5019, %v5019
      %v5121 = vmul.f32 %v5020, %v5020
      %v5122 = vmul.f32 %v5021, %v5021
      %v5123 = vmul.f32 %v5022, %v5022
      %v5124 = vmul.f32 %v5023, %v5023
      %v5125 = vmul.f32 %v5024, %v5024
      %v5126 = vmul.f32 %v5025, %v5025
      %v5127 = vmul.f32 %v5026, %v5026
      %v5128 = vmul.f32 %v5027, %v5027
      %v5129 = vmul.f32 %v5028, %v5028
      %v5130 = vmul.f32 %v5029, %v5029
      %v5131 = vmul.f32 %v5030, %v5030
      %v5132 = vmul.f32 %v5031, %v5031
      %v5133 = vmul.f32 %v5032, %v5032
      %v5134 = vmul.f32 %v5033, %v5033
      %v5135 = vmul.f32 %v5034, %v5034
      %v5136 = vmul.f32 %v5035, %v5035
      %v5137 = vmul.f32 %v5036, %v5036
      %v5138 = vmul.f32 %v5037, %v5037
      %v5139 = vmul.f32 %v5038, %v5038
      %v5140 = vadd.f32 %v5108, %v5109
      %v5141 = vadd.f32 %v5140, %v5110
      %v5142 = vadd.f32 %v5141, %v5111
      %v5143 = vadd.f32 %v5142, %v5112
      %v5144 = vadd.f32 %v5143, %v5113
      %v5145 = vadd.f32 %v5144, %v5114
      %v5146 = vadd.f32 %v5145, %v5115
      %v5147 = vadd.f32 %v5146, %v5116
      %v5148 = vadd.f32 %v5147, %v5117
      %v5149 = vadd.f32 %v5148, %v5118
      %v5150 = vadd.f32 %v5149, %v5119
      %v5151 = vadd.f32 %v5150, %v5120
      %v5152 = vadd.f32 %v5151, %v5121
      %v5153 = vadd.f32 %v5152, %v5122
      %v5154 = vadd.f32 %v5153, %v5123
      %v5155 = vadd.f32 %v5154, %v5124
      %v5156 = vadd.f32 %v5155, %v5125
      %v5157 = vadd.f32 %v5156, %v5126
      %v5158 = vadd.f32 %v5157, %v5127
      %v5159 = vadd.f32 %v5158, %v5128
      %v5160 = vadd.f32 %v5159, %v5129
      %v5161 = vadd.f32 %v5160, %v5130
      %v5162 = vadd.f32 %v5161, %v5131
      %v5163 = vadd.f32 %v5162, %v5132
      %v5164 = vadd.f32 %v5163, %v5133
      %v5165 = vadd.f32 %v5164, %v5134
      %v5166 = vadd.f32 %v5165, %v5135
      %v5167 = vadd.f32 %v5166, %v5136
      %v5168 = vadd.f32 %v5167, %v5137
      %v5169 = vadd.f32 %v5168, %v5138
      %v5170 = vadd.f32 %v5169, %v5139
      %v5171 = vrot.slane %v5170, 4
      %v5172 = vadd.f32 %v5170, %v5171
      %v5173 = vrot.slane %v5172, 2
      %v5174 = vadd.f32 %v5172, %v5173
      %v5175 = vrot.slane %v5174, 1
      %v5176 = vadd.f32 %v5174, %v5175
      %vm5177 = vcmask 1040384
      %v5178 = vsel %vm5177, %v5107, %v5176
      %5179 = vst [vmem:[%s228] sm:$0x3] %v5178
      %s5180 = smul.u32 16, %s20
      %p5181 = scmp.lt.s32.totalorder %s19, 1
      %s5182 = scalar_select %p5181, %s19, 1
      %p5183 = scmp.lt.s32.totalorder %s5180, 15
      %s5184 = scalar_select %p5183, %s5180, 15
      %s5185 = smul.addr %s5184, 2
      %s5186 = smul.addr %s5182, 32
      %s5187 = sadd.s32 %s5185, %s5186
      %s5188 = smul.addr %s5187, 8
      %s5189 = scalar_lea.vmem %s2, %s5188
      %p5190 = scmp.lt.s32.totalorder %s19, 1
      %s5191 = scalar_select %p5190, %s19, 1
      %p5192 = scmp.lt.s32.totalorder %s20, 0
      %s5193 = scalar_select %p5192, %s20, 0
      %s5194 = sadd.s32 %s5193, %s5191
      %s5195 = smul.addr %s5194, 2
      %s5196 = scalar_lea.vmem %s3, %s5195
      // Predicated region
      $region29: #{double_conv_pallas.4} parent=27 // pred_check
        %p5197 = pneg %p96
      $region30: #{double_conv_pallas.4} parent=27 // pred_check_branch
        %5199 = sbr.rel (%p5197) target = $region32
      $region31: #{double_conv_pallas.4} parent=27 // pred_region
        %s5200 = smul.u32 16, %s20
      $region32: #{double_conv_pallas.4} parent=27 // pred_fallthru
        _
      // Predicated region
      $region33: #{double_conv_pallas.4} parent=27 // pred_check
        %p5201 = pneg %p124
      $region34: #{double_conv_pallas.4} parent=27 // pred_check_branch
        %5203 = sbr.rel (%p5201) target = $region36
      $region35: #{double_conv_pallas.4} parent=27 // pred_region
        _
      $region36: #{double_conv_pallas.4} parent=27 // pred_fallthru
        _
    $region28: #{double_conv_pallas.4} parent=5 // pred_fallthru
      _
    %p5204 = scmp.le.s32.totalorder 2, %s10
    // Predicated region
    $region37: #{double_conv_pallas.4} parent=5 // pred_check
      %p5205 = pneg %p5204
    $region38: #{double_conv_pallas.4} parent=5 // pred_check_branch
      %5207 = sbr.rel (%p5205) target = $region40
    $region39: #{double_conv_pallas.4} parent=5 // pred_region
      %s5208 = ssub.s32 %s10, 2
      // Predicated region
      $region41: #{double_conv_pallas.4} parent=39 // pred_check
        %p5209 = pneg %p102
      $region42: #{double_conv_pallas.4} parent=39 // pred_check_branch
        %5211 = sbr.rel (%p5209) target = $region44
      $region43: #{double_conv_pallas.4} parent=39 // pred_region
        %s5212 = smul.u32 16, %s22
        %p5213 = scmp.lt.s32.totalorder %s21, 1
        %s5214 = scalar_select %p5213, %s21, 1
        %p5215 = scmp.lt.s32.totalorder %s5212, 15
        %s5216 = scalar_select %p5215, %s5212, 15
        %s5217 = smul.addr %s5216, 2
        %s5218 = smul.addr %s5214, 32
        %s5219 = sadd.s32 %s5217, %s5218
        %s5220 = smul.addr %s5219, 8
        %s5221 = scalar_lea.vmem %s2, %s5220
      $region44: #{double_conv_pallas.4} parent=39 // pred_fallthru
        _
      // Predicated region
      $region45: #{double_conv_pallas.4} parent=39 // pred_check
        %p5222 = pneg %p130
      $region46: #{double_conv_pallas.4} parent=39 // pred_check_branch
        %5224 = sbr.rel (%p5222) target = $region48
      $region47: #{double_conv_pallas.4} parent=39 // pred_region
        %p5225 = scmp.lt.s32.totalorder %s21, 1
        %s5226 = scalar_select %p5225, %s21, 1
        %p5227 = scmp.lt.s32.totalorder %s22, 0
        %s5228 = scalar_select %p5227, %s22, 0
        %s5229 = sadd.s32 %s5228, %s5226
        %s5230 = smul.addr %s5229, 2
        %s5231 = scalar_lea.vmem %s3, %s5230
      $region48: #{double_conv_pallas.4} parent=39 // pred_fallthru
        _
    $region40: #{double_conv_pallas.4} parent=5 // pred_fallthru
      _
  $region6: #{double_conv_pallas.4} parent=0 // loop_footer
    %s14 = sadd.s32 1, %s10
  $region7: #{double_conv_pallas.4} parent=0 // loop_footer_branch
    %9 = sbr.rel target = $region3
  $region8: #{double_conv_pallas.4} parent=0 // loop_exit
    _

</llo_original>
